<compile_context>
chip_gen: v6e
topology: v6e:2x2x1
jax: 0.10.0
libtpu: 0.0.40
codegen_flags: <defaults>
</compile_context>

<pallas_src>
import functools

import numpy as np
import jax
import jax.numpy as jnp
from jax.experimental import pallas as pl
from jax.experimental.pallas import tpu as pltpu


# ------------------------- conv 3x3 (pad=1) + ReLU -------------------------

def _conv3x3_relu_kernel(xp_ref, w_ref, b_ref, o_ref, *, H, W, Cout):
    # xp_ref: (1, H+2, W+2) padded single-channel image for one batch element
    # w_ref : SMEM (9, Cout) filter taps, row k = (di, dj) = divmod(k, 3)
    # b_ref : SMEM (Cout,)
    # o_ref : (1, Cout, H, W)   (NCHW, like the PyTorch conv output)
    xp = xp_ref[0]
    taps = [xp[di:di + H, dj:dj + W] for di in range(3) for dj in range(3)]
    for c in range(Cout):
        acc = taps[0] * w_ref[0, c]
        for k in range(1, 9):
            acc = acc + taps[k] * w_ref[k, c]
        o_ref[0, c] = jnp.maximum(acc + b_ref[c], 0.0)


def conv3x3_relu(x, w, b):
    """x: (B, 1, H, W), w: (9, Cout), b: (Cout,) -> (B, Cout, H, W)."""
    B, Cin, H, W = x.shape
    assert Cin == 1  # TODO(synk): generalize the tap loop for Cin > 1 CNNs.
    Cout = w.shape[1]
    xp = jnp.pad(x[:, 0], ((0, 0), (1, 1), (1, 1)))      # (B, H+2, W+2)
    return pl.pallas_call(
        functools.partial(_conv3x3_relu_kernel, H=H, W=W, Cout=Cout),
        grid=(B,),
        out_shape=jax.ShapeDtypeStruct((B, Cout, H, W), jnp.float32),
        in_specs=[
            pl.BlockSpec((1, H + 2, W + 2), lambda b_: (b_, 0, 0)),
            pl.BlockSpec(memory_space=pltpu.MemorySpace.SMEM),
            pl.BlockSpec(memory_space=pltpu.MemorySpace.SMEM),
        ],
        out_specs=pl.BlockSpec((1, Cout, H, W), lambda b_: (b_, 0, 0, 0)),
        compiler_params=pltpu.CompilerParams(
            dimension_semantics=("parallel",)),
    )(xp, w, b)


# --------------------- generic fused linear (+ bias, act) ------------------

def _linear_kernel(x_ref, w_ref, b_ref, o_ref, *, act):
    y = jnp.dot(x_ref[...], w_ref[...], preferred_element_type=jnp.float32)
    y = y + b_ref[...]
    if act == "relu":
        y = jnp.maximum(y, 0.0)
    elif act == "tanh":
        y = jnp.tanh(y)
    o_ref[...] = y


def linear(x, w, b, act="none", tile_m=512):
    M, K = x.shape
    N = w.shape[1]
    tm = tile_m if (M > tile_m and M % tile_m == 0) else M
    return pl.pallas_call(
        functools.partial(_linear_kernel, act=act),
        grid=(M // tm,),
        out_shape=jax.ShapeDtypeStruct((M, N), jnp.float32),
        in_specs=[
            pl.BlockSpec((tm, K), lambda i: (i, 0)),
            pl.BlockSpec((K, N), lambda i: (0, 0)),
            pl.BlockSpec((1, N), lambda i: (0, 0)),
        ],
        out_specs=pl.BlockSpec((tm, N), lambda i: (i, 0)),
        compiler_params=pltpu.CompilerParams(
            dimension_semantics=("parallel",)),
    )(x, w, b.reshape(1, N))


# ----------------------------- LSTM gate helper -----------------------------

def _lstm_step(gates, c_prev, hidden):
    i = jax.nn.sigmoid(gates[:, 0 * hidden:1 * hidden])
    f = jax.nn.sigmoid(gates[:, 1 * hidden:2 * hidden])
    g = jnp.tanh(gates[:, 2 * hidden:3 * hidden])
    o = jax.nn.sigmoid(gates[:, 3 * hidden:4 * hidden])
    c_new = f * c_prev + i * g
    h_new = o * jnp.tanh(c_new)
    return h_new, c_new


# ----------------- fused bidirectional LSTM encoder (one call) --------------

def _bilstm_kernel(xf_ref, xb_ref,
                   wih_f_ref, whh_f_ref, bf_ref,
                   wih_b_ref, whh_b_ref, bb_ref,
                   of_ref, ob_ref,
                   hf_sc, cf_sc, hb_sc, cb_sc, *, hidden):
    t = pl.program_id(0)

    @pl.when(t == 0)
    def _():
        hf_sc[...] = jnp.zeros_like(hf_sc)
        cf_sc[...] = jnp.zeros_like(cf_sc)
        hb_sc[...] = jnp.zeros_like(hb_sc)
        cb_sc[...] = jnp.zeros_like(cb_sc)

    # forward direction consumes time step t
    xf = xf_ref[0]
    gates_f = (jnp.dot(xf, wih_f_ref[...], preferred_element_type=jnp.float32)
               + jnp.dot(hf_sc[...], whh_f_ref[...],
                         preferred_element_type=jnp.float32)
               + bf_ref[...])
    hf, cf = _lstm_step(gates_f, cf_sc[...], hidden)
    hf_sc[...] = hf
    cf_sc[...] = cf
    of_ref[0] = hf

    # backward direction consumes time step T-1-t (via its BlockSpec index_map)
    xb = xb_ref[0]
    gates_b = (jnp.dot(xb, wih_b_ref[...], preferred_element_type=jnp.float32)
               + jnp.dot(hb_sc[...], whh_b_ref[...],
                         preferred_element_type=jnp.float32)
               + bb_ref[...])
    hb, cb = _lstm_step(gates_b, cb_sc[...], hidden)
    hb_sc[...] = hb
    cb_sc[...] = cb
    ob_ref[0] = hb


def bilstm_encode(x_t, wih_f, whh_f, bf, wih_b, whh_b, bb, hidden):
    """x_t: (T, N, C) time-major -> (out_f, out_b), each (T, N, hidden)."""
    T, N, C = x_t.shape
    H4 = 4 * hidden
    out_sds = jax.ShapeDtypeStruct((T, N, hidden), jnp.float32)
    const2 = lambda t: (0, 0)
    return pl.pallas_call(
        functools.partial(_bilstm_kernel, hidden=hidden),
        grid=(T,),
        out_shape=(out_sds, out_sds),
        in_specs=[
            pl.BlockSpec((1, N, C), lambda t: (t, 0, 0)),
            pl.BlockSpec((1, N, C), lambda t: (T - 1 - t, 0, 0)),
            pl.BlockSpec((C, H4), const2),
            pl.BlockSpec((hidden, H4), const2),
            pl.BlockSpec((1, H4), const2),
            pl.BlockSpec((C, H4), const2),
            pl.BlockSpec((hidden, H4), const2),
            pl.BlockSpec((1, H4), const2),
        ],
        out_specs=(
            pl.BlockSpec((1, N, hidden), lambda t: (t, 0, 0)),
            pl.BlockSpec((1, N, hidden), lambda t: (T - 1 - t, 0, 0)),
        ),
        scratch_shapes=[pltpu.VMEM((N, hidden), jnp.float32)] * 4,
        compiler_params=pltpu.CompilerParams(
            dimension_semantics=("arbitrary",)),
    )(x_t, x_t, wih_f, whh_f, bf.reshape(1, H4),
      wih_b, whh_b, bb.reshape(1, H4))


# -------------- fused attention decoder (one call for all steps) ------------

def _decoder_kernel(emb_ref, h0_ref, c0_ref, o0_ref, keys_ref, vals_ref,
                    wih_e_ref, wih_o_ref, whh_ref, b_ref,
                    wc_h_ref, wc_c_ref, wc_b_ref, out_w_ref, out_b_ref,
                    logits_ref,
                    h_sc, c_sc, o_sc, *, hidden):
    t = pl.program_id(0)

    @pl.when(t == 0)
    def _():
        h_sc[...] = h0_ref[...]
        c_sc[...] = c0_ref[...]
        o_sc[...] = o0_ref[...]

    # LSTM cell on [token_embedding ; o_prev]  (concat weight pre-split so no
    # lane concat is needed in-kernel).
    emb = emb_ref[0]                                             # (B, emb)
    gates = (jnp.dot(emb, wih_e_ref[...], preferred_element_type=jnp.float32)
             + jnp.dot(o_sc[...], wih_o_ref[...],
                       preferred_element_type=jnp.float32)
             + jnp.dot(h_sc[...], whh_ref[...],
                       preferred_element_type=jnp.float32)
             + b_ref[...])
    h_new, c_new = _lstm_step(gates, c_sc[...], hidden)
    h_sc[...] = h_new
    c_sc[...] = c_new

    # attention: keys pre-transposed to (B, D, L) so the score matmul contracts
    # over D with no in-kernel transpose; B is tiny so it is unrolled.
    B = h_new.shape[0]
    ctx_rows = []
    for bb in range(B):
        q = h_new[bb:bb + 1, :]                                  # (1, D)
        sc = jnp.dot(q, keys_ref[bb], preferred_element_type=jnp.float32)
        sc = sc - jnp.max(sc, axis=-1, keepdims=True)
        e = jnp.exp(sc)
        a = e * pl.reciprocal(jnp.sum(e, axis=-1, keepdims=True), approx=True)
        ctx_rows.append(jnp.dot(a, vals_ref[bb],
                                preferred_element_type=jnp.float32))  # (1, 2E)
    ctx = jnp.concatenate(ctx_rows, axis=0)                      # (B, 2E)

    # o_t = tanh(W_c [h ; ctx])
    o_new = jnp.tanh(
        jnp.dot(h_new, wc_h_ref[...], preferred_element_type=jnp.float32)
        + jnp.dot(ctx, wc_c_ref[...], preferred_element_type=jnp.float32)
        + wc_b_ref[...])
    o_sc[...] = o_new

    # vocab projection + log_softmax
    y = (jnp.dot(o_new, out_w_ref[...], preferred_element_type=jnp.float32)
         + out_b_ref[...])
    z = y - jnp.max(y, axis=-1, keepdims=True)
    logits_ref[0] = z - jnp.log(jnp.sum(jnp.exp(z), axis=-1, keepdims=True))


def decode(emb_t, h0, c0, o0, keys_t, vals, p, hidden):
    """emb_t: (T-1, B, emb) time-major; returns log-probs (T-1, B, vocab)."""
    Tm1, B, Edim = emb_t.shape
    D = hidden
    L = keys_t.shape[2]
    E2 = vals.shape[2]
    V = p["out_w"].shape[1]
    const2 = lambda t: (0, 0)
    const3 = lambda t: (0, 0, 0)
    return pl.pallas_call(
        functools.partial(_decoder_kernel, hidden=hidden),
        grid=(Tm1,),
        out_shape=jax.ShapeDtypeStruct((Tm1, B, V), jnp.float32),
        in_specs=[
            pl.BlockSpec((1, B, Edim), lambda t: (t, 0, 0)),
            pl.BlockSpec((B, D), const2),
            pl.BlockSpec((B, D), const2),
            pl.BlockSpec((B, D), const2),
            pl.BlockSpec((B, D, L), const3),
            pl.BlockSpec((B, L, E2), const3),
            pl.BlockSpec((Edim, 4 * D), const2),
            pl.BlockSpec((D, 4 * D), const2),
            pl.BlockSpec((D, 4 * D), const2),
            pl.BlockSpec((1, 4 * D), const2),
            pl.BlockSpec((D, D), const2),
            pl.BlockSpec((E2, D), const2),
            pl.BlockSpec((1, D), const2),
            pl.BlockSpec((D, V), const2),
            pl.BlockSpec((1, V), const2),
        ],
        out_specs=pl.BlockSpec((1, B, V), lambda t: (t, 0, 0)),
        scratch_shapes=[pltpu.VMEM((B, D), jnp.float32)] * 3,
        compiler_params=pltpu.CompilerParams(
            dimension_semantics=("arbitrary",)),
    )(emb_t, h0, c0, o0, keys_t, vals,
      p["dec_wih_emb"], p["dec_wih_o"], p["dec_whh"],
      p["dec_b"].reshape(1, 4 * D),
      p["wc_w_h"], p["wc_w_c"], p["wc_b"].reshape(1, D),
      p["out_w"], p["out_b"].reshape(1, V))


# ------------------------------- JAX glue ----------------------------------

def positional_encoding(n_position, emb_dim):
    position_enc = np.array(
        [[pos / np.power(10000, 2 * (j // 2) / emb_dim) for j in range(emb_dim)]
         for pos in range(n_position)])
    position_enc[1:, 0::2] = np.sin(position_enc[1:, 0::2])
    position_enc[1:, 1::2] = np.cos(position_enc[1:, 1::2])
    return jnp.asarray(position_enc, dtype=jnp.float32)


def init_params(key, cin=1, cout=8, enc_hidden=32, dec_hidden=32,
                emb_dim=32, vocab=128):
    keys = jax.random.split(key, 24)

    def rnd(k, shape, scale=0.1):
        return scale * jax.random.normal(k, shape, jnp.float32)

    p = {}
    p["conv_w"] = rnd(keys[0], (cin * 9, cout))
    p["conv_b"] = rnd(keys[1], (cout,))
    p["enc_wih_f"] = rnd(keys[2], (cout, 4 * enc_hidden))
    p["enc_whh_f"] = rnd(keys[3], (enc_hidden, 4 * enc_hidden))
    p["enc_b_f"] = rnd(keys[4], (4 * enc_hidden,))
    p["enc_wih_b"] = rnd(keys[5], (cout, 4 * enc_hidden))
    p["enc_whh_b"] = rnd(keys[6], (enc_hidden, 4 * enc_hidden))
    p["enc_b_b"] = rnd(keys[7], (4 * enc_hidden,))
    p["init_h_w"] = rnd(keys[8], (2 * enc_hidden, dec_hidden))
    p["init_h_b"] = rnd(keys[9], (dec_hidden,))
    p["init_o_w"] = rnd(keys[10], (2 * enc_hidden, dec_hidden))
    p["init_o_b"] = rnd(keys[11], (dec_hidden,))
    p["embedding"] = rnd(keys[12], (vocab, emb_dim))
    p["dec_wih_emb"] = rnd(keys[13], (emb_dim, 4 * dec_hidden))
    p["dec_wih_o"] = rnd(keys[14], (dec_hidden, 4 * dec_hidden))
    p["dec_whh"] = rnd(keys[15], (dec_hidden, 4 * dec_hidden))
    p["dec_b"] = rnd(keys[16], (4 * dec_hidden,))
    p["attn_w"] = rnd(keys[17], (2 * enc_hidden, dec_hidden))
    p["attn_b"] = jnp.zeros((dec_hidden,), jnp.float32)
    p["wc_w_h"] = rnd(keys[18], (dec_hidden, dec_hidden))
    p["wc_w_c"] = rnd(keys[19], (2 * enc_hidden, dec_hidden))
    p["wc_b"] = rnd(keys[20], (dec_hidden,))
    p["out_w"] = rnd(keys[21], (dec_hidden, vocab))
    p["out_b"] = jnp.zeros((vocab,), jnp.float32)
    return p


def forward(params, x, y, teacher_forcing_ratio):
    """x: image (B, 1, H, W), y: token ids (B, T) -> logits (B, T, vocab)."""
    B, Cin, H, W = x.shape
    E = params["enc_whh_f"].shape[0]
    D = params["init_h_w"].shape[1]
    V = params["out_w"].shape[1]
    T = y.shape[1]
    Cout = params["conv_w"].shape[1]

    # --- CNN feature map: 3x3 conv (pad=1) + ReLU, NCHW like PyTorch ---
    feat = conv3x3_relu(x, params["conv_w"], params["conv_b"])    # (B, C, H, W)

    # --- row-wise BiLSTM encoder, time-major input (W', B*H', C) ---
    # (matches PyTorch permute(0,2,3,1).view(B*H', W', C): rows flatten B-major)
    enc_in_t = feat.transpose(3, 0, 2, 1).reshape(W, B * H, Cout)
    out_f, out_b = bilstm_encode(
        enc_in_t,
        params["enc_wih_f"], params["enc_whh_f"], params["enc_b_f"],
        params["enc_wih_b"], params["enc_whh_b"], params["enc_b_b"], E)
    enc = jnp.concatenate([out_f, out_b], axis=-1)                # (W, B*H, 2E)
    enc = (enc.reshape(W, B, H, 2 * E)
              .transpose(1, 2, 0, 3)                              # (B, H, W, 2E)
              .reshape(B, H * W, 2 * E))
    L = H * W

    # --- positional embedding ---
    enc = enc + positional_encoding(L, 2 * E)

    # --- decoder initial states & attention keys (Pallas linears) ---
    enc_mean = jnp.mean(enc, axis=1)                              # (B, 2E)
    h0 = linear(enc_mean, params["init_h_w"], params["init_h_b"], act="tanh")
    o0 = linear(enc_mean, params["init_o_w"], params["init_o_b"], act="tanh")
    c0 = jnp.zeros((B, D), jnp.float32)
    keys = linear(enc.reshape(B * L, 2 * E), params["attn_w"], params["attn_b"])
    keys_t = keys.reshape(B, L, D).transpose(0, 2, 1)             # (B, D, L)

    # --- fused attention decoder with deterministic teacher forcing ---
    # TODO(synk): the sampling branch (teacher_forcing_ratio < rand()) is not
    # implemented; with ratio >= 1.0 the reference always uses ground truth.
    emb_seq = jnp.take(params["embedding"], y[:, :T - 1], axis=0)  # (B, T-1, e)
    emb_t = emb_seq.transpose(1, 0, 2)                             # (T-1, B, e)
    dec_logits = decode(emb_t, h0, c0, o0, keys_t, enc, params, D)
    dec_logits = dec_logits.transpose(1, 0, 2)                     # (B, T-1, V)

    # t=0 row mirrors the reference exactly: logits[:, 0, y[0, 0]] = 1.
    first = jnp.zeros((B, 1, V), jnp.float32).at[:, 0, y[0, 0]].set(1.0)
    return jnp.concatenate([first, dec_logits], axis=1)


if __name__ == "__main__":
    B, H, W = 2, 8, 16
    vocab, T = 128, 8

    root = jax.random.PRNGKey(0)
    kp, kx, ky = jax.random.split(root, 3)

    params = init_params(kp, cin=1, cout=8, enc_hidden=32, dec_hidden=32,
                         emb_dim=32, vocab=vocab)
    x = jax.random.normal(kx, (B, 1, H, W), jnp.float32)
    y = jax.random.randint(ky, (B, T), 0, vocab, dtype=jnp.int32)

    fwd = jax.jit(forward)
    logits = fwd(params, x, y, 1.0)
    jax.block_until_ready(logits)
    assert logits.shape == (B, T, vocab)
    assert bool(jnp.all(jnp.isfinite(logits)))
    print("KERNEL_OK")
</pallas_src>

<mosaic_0001>
module attributes {stable_mosaic.version = 11 : i64} {
  func.func @_bilstm_kernel(%arg0: i32, %arg1: memref<1x16x8xf32, #tpu.memory_space<vmem>>, %arg2: memref<1x16x8xf32, #tpu.memory_space<vmem>>, %arg3: memref<8x128xf32, #tpu.memory_space<vmem>>, %arg4: memref<32x128xf32, #tpu.memory_space<vmem>>, %arg5: memref<1x128xf32, #tpu.memory_space<vmem>>, %arg6: memref<8x128xf32, #tpu.memory_space<vmem>>, %arg7: memref<32x128xf32, #tpu.memory_space<vmem>>, %arg8: memref<1x128xf32, #tpu.memory_space<vmem>>, %arg9: memref<1x16x32xf32, #tpu.memory_space<vmem>>, %arg10: memref<1x16x32xf32, #tpu.memory_space<vmem>>, %arg11: memref<16x32xf32, #tpu.memory_space<vmem>>, %arg12: memref<16x32xf32, #tpu.memory_space<vmem>>, %arg13: memref<16x32xf32, #tpu.memory_space<vmem>>, %arg14: memref<16x32xf32, #tpu.memory_space<vmem>>) attributes {dimension_semantics = [#tpu.dimension_semantics<arbitrary>], iteration_bounds = array<i64: 16>, scalar_prefetch = 0 : i64, scratch_operands = 4 : i64, tpu.core_type = #tpu.core_type<tc>, window_params = [{transform_indices = @transform_0, window_bounds = array<i64: 1, 16, 8>}, {transform_indices = @transform_1, window_bounds = array<i64: 1, 16, 8>}, {pipeline_mode = #tpu.pipeline_mode<synchronous>, transform_indices = @transform_2, window_bounds = array<i64: 8, 128>}, {pipeline_mode = #tpu.pipeline_mode<synchronous>, transform_indices = @transform_3, window_bounds = array<i64: 32, 128>}, {pipeline_mode = #tpu.pipeline_mode<synchronous>, transform_indices = @transform_4, window_bounds = array<i64: 1, 128>}, {pipeline_mode = #tpu.pipeline_mode<synchronous>, transform_indices = @transform_5, window_bounds = array<i64: 8, 128>}, {pipeline_mode = #tpu.pipeline_mode<synchronous>, transform_indices = @transform_6, window_bounds = array<i64: 32, 128>}, {pipeline_mode = #tpu.pipeline_mode<synchronous>, transform_indices = @transform_7, window_bounds = array<i64: 1, 128>}, {transform_indices = @transform_8, window_bounds = array<i64: 1, 16, 32>}, {transform_indices = @transform_9, window_bounds = array<i64: 1, 16, 32>}]} {
    %c0_i32 = arith.constant 0 : i32
    %0 = arith.cmpi eq, %arg0, %c0_i32 : i32
    %1 = arith.extui %0 : i1 to i32
    %c0_i32_0 = arith.constant 0 : i32
    %2 = arith.cmpi ne, %1, %c0_i32_0 : i32
    scf.if %2 {
      %cst_49 = arith.constant 0.000000e+00 : f32
      %87 = vector.broadcast %cst_49 : f32 to vector<16x32xf32>
      %c0_50 = arith.constant 0 : index
      %c0_51 = arith.constant 0 : index
      %88 = vector.load %arg11[%c0_50, %c0_51] : memref<16x32xf32, #tpu.memory_space<vmem>>, vector<16x32xf32>
      tpu.vector_store %arg11[%c0_50, %c0_51], %87 {strides = array<i32>} : memref<16x32xf32, #tpu.memory_space<vmem>>, vector<16x32xf32>,
      %cst_52 = arith.constant 0.000000e+00 : f32
      %89 = vector.broadcast %cst_52 : f32 to vector<16x32xf32>
      %c0_53 = arith.constant 0 : index
      %c0_54 = arith.constant 0 : index
      %90 = vector.load %arg12[%c0_53, %c0_54] : memref<16x32xf32, #tpu.memory_space<vmem>>, vector<16x32xf32>
      tpu.vector_store %arg12[%c0_53, %c0_54], %89 {strides = array<i32>} : memref<16x32xf32, #tpu.memory_space<vmem>>, vector<16x32xf32>,
      %cst_55 = arith.constant 0.000000e+00 : f32
      %91 = vector.broadcast %cst_55 : f32 to vector<16x32xf32>
      %c0_56 = arith.constant 0 : index
      %c0_57 = arith.constant 0 : index
      %92 = vector.load %arg13[%c0_56, %c0_57] : memref<16x32xf32, #tpu.memory_space<vmem>>, vector<16x32xf32>
      tpu.vector_store %arg13[%c0_56, %c0_57], %91 {strides = array<i32>} : memref<16x32xf32, #tpu.memory_space<vmem>>, vector<16x32xf32>,
      %cst_58 = arith.constant 0.000000e+00 : f32
      %93 = vector.broadcast %cst_58 : f32 to vector<16x32xf32>
      %c0_59 = arith.constant 0 : index
      %c0_60 = arith.constant 0 : index
      %94 = vector.load %arg14[%c0_59, %c0_60] : memref<16x32xf32, #tpu.memory_space<vmem>>, vector<16x32xf32>
      tpu.vector_store %arg14[%c0_59, %c0_60], %93 {strides = array<i32>} : memref<16x32xf32, #tpu.memory_space<vmem>>, vector<16x32xf32>,
    } else {
    }
    %c0 = arith.constant 0 : index
    %c0_1 = arith.constant 0 : index
    %c0_2 = arith.constant 0 : index
    %3 = vector.load %arg1[%c0, %c0_1, %c0_2] : memref<1x16x8xf32, #tpu.memory_space<vmem>>, vector<1x16x8xf32>
    %4 = vector.shape_cast %3 : vector<1x16x8xf32> to vector<16x8xf32>
    %c0_3 = arith.constant 0 : index
    %c0_4 = arith.constant 0 : index
    %5 = vector.load %arg3[%c0_3, %c0_4] : memref<8x128xf32, #tpu.memory_space<vmem>>, vector<8x128xf32>
    %cst = arith.constant dense<0.000000e+00> : vector<16x128xf32>
    %6 = tpu.matmul %4, %5, %cst {dimension_numbers = #tpu.dot_dimension_numbers<[1], [0], [0], [1], [0, 0, 1, 1], [], []>} : vector<16x8xf32>, vector<8x128xf32>, vector<16x128xf32> -> vector<16x128xf32>
    %c0_5 = arith.constant 0 : index
    %c0_6 = arith.constant 0 : index
    %7 = vector.load %arg11[%c0_5, %c0_6] : memref<16x32xf32, #tpu.memory_space<vmem>>, vector<16x32xf32>
    %c0_7 = arith.constant 0 : index
    %c0_8 = arith.constant 0 : index
    %8 = vector.load %arg4[%c0_7, %c0_8] : memref<32x128xf32, #tpu.memory_space<vmem>>, vector<32x128xf32>
    %cst_9 = arith.constant dense<0.000000e+00> : vector<16x128xf32>
    %9 = tpu.matmul %7, %8, %cst_9 {dimension_numbers = #tpu.dot_dimension_numbers<[1], [0], [0], [1], [0, 0, 1, 1], [], []>} : vector<16x32xf32>, vector<32x128xf32>, vector<16x128xf32> -> vector<16x128xf32>
    %10 = arith.addf %6, %9 : vector<16x128xf32>
    %c0_10 = arith.constant 0 : index
    %c0_11 = arith.constant 0 : index
    %11 = vector.load %arg5[%c0_10, %c0_11] : memref<1x128xf32, #tpu.memory_space<vmem>>, vector<1x128xf32>
    %12 = vector.broadcast %11 : vector<1x128xf32> to vector<16x128xf32>
    %13 = arith.addf %10, %12 : vector<16x128xf32>
    %c0_12 = arith.constant 0 : index
    %c0_13 = arith.constant 0 : index
    %14 = vector.load %arg12[%c0_12, %c0_13] : memref<16x32xf32, #tpu.memory_space<vmem>>, vector<16x32xf32>
    %15 = vector.extract_strided_slice %13 {offsets = [0, 0], sizes = [16, 32], strides = [1, 1]} : vector<16x128xf32> to vector<16x32xf32>
    %16 = arith.negf %15 : vector<16x32xf32>
    %17 = math.exp %16 : vector<16x32xf32>
    %cst_14 = arith.constant 1.000000e+00 : f32
    %18 = vector.broadcast %cst_14 : f32 to vector<16x32xf32>
    %19 = arith.addf %18, %17 : vector<16x32xf32>
    %20 = arith.divf %18, %19 : vector<16x32xf32>
    %21 = vector.extract_strided_slice %13 {offsets = [0, 32], sizes = [16, 32], strides = [1, 1]} : vector<16x128xf32> to vector<16x32xf32>
    %22 = arith.negf %21 : vector<16x32xf32>
    %23 = math.exp %22 : vector<16x32xf32>
    %cst_15 = arith.constant 1.000000e+00 : f32
    %24 = vector.broadcast %cst_15 : f32 to vector<16x32xf32>
    %25 = arith.addf %24, %23 : vector<16x32xf32>
    %26 = arith.divf %24, %25 : vector<16x32xf32>
    %27 = vector.extract_strided_slice %13 {offsets = [0, 64], sizes = [16, 32], strides = [1, 1]} : vector<16x128xf32> to vector<16x32xf32>
    %28 = math.tanh %27 : vector<16x32xf32>
    %29 = vector.extract_strided_slice %13 {offsets = [0, 96], sizes = [16, 32], strides = [1, 1]} : vector<16x128xf32> to vector<16x32xf32>
    %30 = arith.negf %29 : vector<16x32xf32>
    %31 = math.exp %30 : vector<16x32xf32>
    %cst_16 = arith.constant 1.000000e+00 : f32
    %32 = vector.broadcast %cst_16 : f32 to vector<16x32xf32>
    %33 = arith.addf %32, %31 : vector<16x32xf32>
    %34 = arith.divf %32, %33 : vector<16x32xf32>
    %35 = arith.mulf %26, %14 : vector<16x32xf32>
    %36 = arith.mulf %20, %28 : vector<16x32xf32>
    %37 = arith.addf %35, %36 : vector<16x32xf32>
    %38 = math.tanh %37 : vector<16x32xf32>
    %39 = arith.mulf %34, %38 : vector<16x32xf32>
    %c0_17 = arith.constant 0 : index
    %c0_18 = arith.constant 0 : index
    %40 = vector.load %arg11[%c0_17, %c0_18] : memref<16x32xf32, #tpu.memory_space<vmem>>, vector<16x32xf32>
    tpu.vector_store %arg11[%c0_17, %c0_18], %39 {strides = array<i32>} : memref<16x32xf32, #tpu.memory_space<vmem>>, vector<16x32xf32>,
    %c0_19 = arith.constant 0 : index
    %c0_20 = arith.constant 0 : index
    %41 = vector.load %arg12[%c0_19, %c0_20] : memref<16x32xf32, #tpu.memory_space<vmem>>, vector<16x32xf32>
    tpu.vector_store %arg12[%c0_19, %c0_20], %37 {strides = array<i32>} : memref<16x32xf32, #tpu.memory_space<vmem>>, vector<16x32xf32>,
    %c0_21 = arith.constant 0 : index
    %c0_22 = arith.constant 0 : index
    %c0_23 = arith.constant 0 : index
    %42 = vector.load %arg9[%c0_21, %c0_22, %c0_23] : memref<1x16x32xf32, #tpu.memory_space<vmem>>, vector<1x16x32xf32>
    %43 = vector.shape_cast %42 : vector<1x16x32xf32> to vector<16x32xf32>
    %44 = vector.shape_cast %39 : vector<16x32xf32> to vector<1x16x32xf32>
    tpu.vector_store %arg9[%c0_21, %c0_22, %c0_23], %44 {strides = array<i32>} : memref<1x16x32xf32, #tpu.memory_space<vmem>>, vector<1x16x32xf32>,
    %c0_24 = arith.constant 0 : index
    %c0_25 = arith.constant 0 : index
    %c0_26 = arith.constant 0 : index
    %45 = vector.load %arg2[%c0_24, %c0_25, %c0_26] : memref<1x16x8xf32, #tpu.memory_space<vmem>>, vector<1x16x8xf32>
    %46 = vector.shape_cast %45 : vector<1x16x8xf32> to vector<16x8xf32>
    %c0_27 = arith.constant 0 : index
    %c0_28 = arith.constant 0 : index
    %47 = vector.load %arg6[%c0_27, %c0_28] : memref<8x128xf32, #tpu.memory_space<vmem>>, vector<8x128xf32>
    %cst_29 = arith.constant dense<0.000000e+00> : vector<16x128xf32>
    %48 = tpu.matmul %46, %47, %cst_29 {dimension_numbers = #tpu.dot_dimension_numbers<[1], [0], [0], [1], [0, 0, 1, 1], [], []>} : vector<16x8xf32>, vector<8x128xf32>, vector<16x128xf32> -> vector<16x128xf32>
    %c0_30 = arith.constant 0 : index
    %c0_31 = arith.constant 0 : index
    %49 = vector.load %arg13[%c0_30, %c0_31] : memref<16x32xf32, #tpu.memory_space<vmem>>, vector<16x32xf32>
    %c0_32 = arith.constant 0 : index
    %c0_33 = arith.constant 0 : index
    %50 = vector.load %arg7[%c0_32, %c0_33] : memref<32x128xf32, #tpu.memory_space<vmem>>, vector<32x128xf32>
    %cst_34 = arith.constant dense<0.000000e+00> : vector<16x128xf32>
    %51 = tpu.matmul %49, %50, %cst_34 {dimension_numbers = #tpu.dot_dimension_numbers<[1], [0], [0], [1], [0, 0, 1, 1], [], []>} : vector<16x32xf32>, vector<32x128xf32>, vector<16x128xf32> -> vector<16x128xf32>
    %52 = arith.addf %48, %51 : vector<16x128xf32>
    %c0_35 = arith.constant 0 : index
    %c0_36 = arith.constant 0 : index
    %53 = vector.load %arg8[%c0_35, %c0_36] : memref<1x128xf32, #tpu.memory_space<vmem>>, vector<1x128xf32>
    %54 = vector.broadcast %53 : vector<1x128xf32> to vector<16x128xf32>
    %55 = arith.addf %52, %54 : vector<16x128xf32>
    %c0_37 = arith.constant 0 : index
    %c0_38 = arith.constant 0 : index
    %56 = vector.load %arg14[%c0_37, %c0_38] : memref<16x32xf32, #tpu.memory_space<vmem>>, vector<16x32xf32>
    %57 = vector.extract_strided_slice %55 {offsets = [0, 0], sizes = [16, 32], strides = [1, 1]} : vector<16x128xf32> to vector<16x32xf32>
    %58 = arith.negf %57 : vector<16x32xf32>
    %59 = math.exp %58 : vector<16x32xf32>
    %cst_39 = arith.constant 1.000000e+00 : f32
    %60 = vector.broadcast %cst_39 : f32 to vector<16x32xf32>
    %61 = arith.addf %60, %59 : vector<16x32xf32>
    %62 = arith.divf %60, %61 : vector<16x32xf32>
    %63 = vector.extract_strided_slice %55 {offsets = [0, 32], sizes = [16, 32], strides = [1, 1]} : vector<16x128xf32> to vector<16x32xf32>
    %64 = arith.negf %63 : vector<16x32xf32>
    %65 = math.exp %64 : vector<16x32xf32>
    %cst_40 = arith.constant 1.000000e+00 : f32
    %66 = vector.broadcast %cst_40 : f32 to vector<16x32xf32>
    %67 = arith.addf %66, %65 : vector<16x32xf32>
    %68 = arith.divf %66, %67 : vector<16x32xf32>
    %69 = vector.extract_strided_slice %55 {offsets = [0, 64], sizes = [16, 32], strides = [1, 1]} : vector<16x128xf32> to vector<16x32xf32>
    %70 = math.tanh %69 : vector<16x32xf32>
    %71 = vector.extract_strided_slice %55 {offsets = [0, 96], sizes = [16, 32], strides = [1, 1]} : vector<16x128xf32> to vector<16x32xf32>
    %72 = arith.negf %71 : vector<16x32xf32>
    %73 = math.exp %72 : vector<16x32xf32>
    %cst_41 = arith.constant 1.000000e+00 : f32
    %74 = vector.broadcast %cst_41 : f32 to vector<16x32xf32>
    %75 = arith.addf %74, %73 : vector<16x32xf32>
    %76 = arith.divf %74, %75 : vector<16x32xf32>
    %77 = arith.mulf %68, %56 : vector<16x32xf32>
    %78 = arith.mulf %62, %70 : vector<16x32xf32>
    %79 = arith.addf %77, %78 : vector<16x32xf32>
    %80 = math.tanh %79 : vector<16x32xf32>
    %81 = arith.mulf %76, %80 : vector<16x32xf32>
    %c0_42 = arith.constant 0 : index
    %c0_43 = arith.constant 0 : index
    %82 = vector.load %arg13[%c0_42, %c0_43] : memref<16x32xf32, #tpu.memory_space<vmem>>, vector<16x32xf32>
    tpu.vector_store %arg13[%c0_42, %c0_43], %81 {strides = array<i32>} : memref<16x32xf32, #tpu.memory_space<vmem>>, vector<16x32xf32>,
    %c0_44 = arith.constant 0 : index
    %c0_45 = arith.constant 0 : index
    %83 = vector.load %arg14[%c0_44, %c0_45] : memref<16x32xf32, #tpu.memory_space<vmem>>, vector<16x32xf32>
    tpu.vector_store %arg14[%c0_44, %c0_45], %79 {strides = array<i32>} : memref<16x32xf32, #tpu.memory_space<vmem>>, vector<16x32xf32>,
    %c0_46 = arith.constant 0 : index
    %c0_47 = arith.constant 0 : index
    %c0_48 = arith.constant 0 : index
    %84 = vector.load %arg10[%c0_46, %c0_47, %c0_48] : memref<1x16x32xf32, #tpu.memory_space<vmem>>, vector<1x16x32xf32>
    %85 = vector.shape_cast %84 : vector<1x16x32xf32> to vector<16x32xf32>
    %86 = vector.shape_cast %81 : vector<16x32xf32> to vector<1x16x32xf32>
    tpu.vector_store %arg10[%c0_46, %c0_47, %c0_48], %86 {strides = array<i32>} : memref<1x16x32xf32, #tpu.memory_space<vmem>>, vector<1x16x32xf32>,
    return
  }
  func.func @transform_0(%arg0: i32) -> (i32, i32, i32) {
    %c0_i32 = arith.constant 0 : i32
    %c0_i32_0 = arith.constant 0 : i32
    %c0_i32_1 = arith.constant 0 : i32
    return %arg0, %c0_i32, %c0_i32_0 : i32, i32, i32
  }
  func.func @transform_1(%arg0: i32) -> (i32, i32, i32) {
    %c15_i32 = arith.constant 15 : i32
    %0 = arith.subi %c15_i32, %arg0 : i32
    %c0_i32 = arith.constant 0 : i32
    %c0_i32_0 = arith.constant 0 : i32
    %c0_i32_1 = arith.constant 0 : i32
    return %0, %c0_i32, %c0_i32_0 : i32, i32, i32
  }
  func.func @transform_2(%arg0: i32) -> (i32, i32) {
    %c0_i32 = arith.constant 0 : i32
    %c0_i32_0 = arith.constant 0 : i32
    %c0_i32_1 = arith.constant 0 : i32
    return %c0_i32, %c0_i32_0 : i32, i32
  }
  func.func @transform_3(%arg0: i32) -> (i32, i32) {
    %c0_i32 = arith.constant 0 : i32
    %c0_i32_0 = arith.constant 0 : i32
    %c0_i32_1 = arith.constant 0 : i32
    return %c0_i32, %c0_i32_0 : i32, i32
  }
  func.func @transform_4(%arg0: i32) -> (i32, i32) {
    %c0_i32 = arith.constant 0 : i32
    %c0_i32_0 = arith.constant 0 : i32
    %c0_i32_1 = arith.constant 0 : i32
    return %c0_i32, %c0_i32_0 : i32, i32
  }
  func.func @transform_5(%arg0: i32) -> (i32, i32) {
    %c0_i32 = arith.constant 0 : i32
    %c0_i32_0 = arith.constant 0 : i32
    %c0_i32_1 = arith.constant 0 : i32
    return %c0_i32, %c0_i32_0 : i32, i32
  }
  func.func @transform_6(%arg0: i32) -> (i32, i32) {
    %c0_i32 = arith.constant 0 : i32
    %c0_i32_0 = arith.constant 0 : i32
    %c0_i32_1 = arith.constant 0 : i32
    return %c0_i32, %c0_i32_0 : i32, i32
  }
  func.func @transform_7(%arg0: i32) -> (i32, i32) {
    %c0_i32 = arith.constant 0 : i32
    %c0_i32_0 = arith.constant 0 : i32
    %c0_i32_1 = arith.constant 0 : i32
    return %c0_i32, %c0_i32_0 : i32, i32
  }
  func.func @transform_8(%arg0: i32) -> (i32, i32, i32) {
    %c0_i32 = arith.constant 0 : i32
    %c0_i32_0 = arith.constant 0 : i32
    %c0_i32_1 = arith.constant 0 : i32
    return %arg0, %c0_i32, %c0_i32_0 : i32, i32, i32
  }
  func.func @transform_9(%arg0: i32) -> (i32, i32, i32) {
    %c15_i32 = arith.constant 15 : i32
    %0 = arith.subi %c15_i32, %arg0 : i32
    %c0_i32 = arith.constant 0 : i32
    %c0_i32_0 = arith.constant 0 : i32
    %c0_i32_1 = arith.constant 0 : i32
    return %0, %c0_i32, %c0_i32_0 : i32, i32, i32
  }
}

module attributes {stable_mosaic.version = 11 : i64} {
  func.func @_conv3x3_relu_kernel(%arg0: i32, %arg1: memref<1x10x18xf32, #tpu.memory_space<vmem>>, %arg2: memref<9x8xf32, #tpu.memory_space<smem>>, %arg3: memref<8xf32, #tpu.memory_space<smem>>, %arg4: memref<1x8x8x16xf32, #tpu.memory_space<vmem>>) attributes {dimension_semantics = [#tpu.dimension_semantics<parallel>], iteration_bounds = array<i64: 2>, scalar_prefetch = 0 : i64, scratch_operands = 0 : i64, tpu.core_type = #tpu.core_type<tc>, window_params = [{transform_indices = @transform_0, window_bounds = array<i64: 1, 10, 18>}, {transform_indices = @transform_1, window_bounds = array<i64: 9, 8>}, {transform_indices = @transform_2, window_bounds = array<i64: 8>}, {transform_indices = @transform_3, window_bounds = array<i64: 1, 8, 8, 16>}]} {
    %c0 = arith.constant 0 : index
    %c0_0 = arith.constant 0 : index
    %c0_1 = arith.constant 0 : index
    %0 = vector.load %arg1[%c0, %c0_0, %c0_1] : memref<1x10x18xf32, #tpu.memory_space<vmem>>, vector<1x10x18xf32>
    %1 = vector.shape_cast %0 : vector<1x10x18xf32> to vector<10x18xf32>
    %2 = vector.extract_strided_slice %1 {offsets = [0, 0], sizes = [8, 16], strides = [1, 1]} : vector<10x18xf32> to vector<8x16xf32>
    %3 = vector.extract_strided_slice %1 {offsets = [0, 1], sizes = [8, 16], strides = [1, 1]} : vector<10x18xf32> to vector<8x16xf32>
    %4 = vector.extract_strided_slice %1 {offsets = [0, 2], sizes = [8, 16], strides = [1, 1]} : vector<10x18xf32> to vector<8x16xf32>
    %5 = vector.extract_strided_slice %1 {offsets = [1, 0], sizes = [8, 16], strides = [1, 1]} : vector<10x18xf32> to vector<8x16xf32>
    %6 = vector.extract_strided_slice %1 {offsets = [1, 1], sizes = [8, 16], strides = [1, 1]} : vector<10x18xf32> to vector<8x16xf32>
    %7 = vector.extract_strided_slice %1 {offsets = [1, 2], sizes = [8, 16], strides = [1, 1]} : vector<10x18xf32> to vector<8x16xf32>
    %8 = vector.extract_strided_slice %1 {offsets = [2, 0], sizes = [8, 16], strides = [1, 1]} : vector<10x18xf32> to vector<8x16xf32>
    %9 = vector.extract_strided_slice %1 {offsets = [2, 1], sizes = [8, 16], strides = [1, 1]} : vector<10x18xf32> to vector<8x16xf32>
    %10 = vector.extract_strided_slice %1 {offsets = [2, 2], sizes = [8, 16], strides = [1, 1]} : vector<10x18xf32> to vector<8x16xf32>
    %c0_2 = arith.constant 0 : index
    %c0_3 = arith.constant 0 : index
    %11 = memref.load %arg2[%c0_2, %c0_3] : memref<9x8xf32, #tpu.memory_space<smem>>
    %12 = vector.broadcast %11 : f32 to vector<8x16xf32>
    %13 = arith.mulf %2, %12 : vector<8x16xf32>
    %c1 = arith.constant 1 : index
    %c0_4 = arith.constant 0 : index
    %14 = memref.load %arg2[%c1, %c0_4] : memref<9x8xf32, #tpu.memory_space<smem>>
    %15 = vector.broadcast %14 : f32 to vector<8x16xf32>
    %16 = arith.mulf %3, %15 : vector<8x16xf32>
    %17 = arith.addf %13, %16 : vector<8x16xf32>
    %c2 = arith.constant 2 : index
    %c0_5 = arith.constant 0 : index
    %18 = memref.load %arg2[%c2, %c0_5] : memref<9x8xf32, #tpu.memory_space<smem>>
    %19 = vector.broadcast %18 : f32 to vector<8x16xf32>
    %20 = arith.mulf %4, %19 : vector<8x16xf32>
    %21 = arith.addf %17, %20 : vector<8x16xf32>
    %c3 = arith.constant 3 : index
    %c0_6 = arith.constant 0 : index
    %22 = memref.load %arg2[%c3, %c0_6] : memref<9x8xf32, #tpu.memory_space<smem>>
    %23 = vector.broadcast %22 : f32 to vector<8x16xf32>
    %24 = arith.mulf %5, %23 : vector<8x16xf32>
    %25 = arith.addf %21, %24 : vector<8x16xf32>
    %c4 = arith.constant 4 : index
    %c0_7 = arith.constant 0 : index
    %26 = memref.load %arg2[%c4, %c0_7] : memref<9x8xf32, #tpu.memory_space<smem>>
    %27 = vector.broadcast %26 : f32 to vector<8x16xf32>
    %28 = arith.mulf %6, %27 : vector<8x16xf32>
    %29 = arith.addf %25, %28 : vector<8x16xf32>
    %c5 = arith.constant 5 : index
    %c0_8 = arith.constant 0 : index
    %30 = memref.load %arg2[%c5, %c0_8] : memref<9x8xf32, #tpu.memory_space<smem>>
    %31 = vector.broadcast %30 : f32 to vector<8x16xf32>
    %32 = arith.mulf %7, %31 : vector<8x16xf32>
    %33 = arith.addf %29, %32 : vector<8x16xf32>
    %c6 = arith.constant 6 : index
    %c0_9 = arith.constant 0 : index
    %34 = memref.load %arg2[%c6, %c0_9] : memref<9x8xf32, #tpu.memory_space<smem>>
    %35 = vector.broadcast %34 : f32 to vector<8x16xf32>
    %36 = arith.mulf %8, %35 : vector<8x16xf32>
    %37 = arith.addf %33, %36 : vector<8x16xf32>
    %c7 = arith.constant 7 : index
    %c0_10 = arith.constant 0 : index
    %38 = memref.load %arg2[%c7, %c0_10] : memref<9x8xf32, #tpu.memory_space<smem>>
    %39 = vector.broadcast %38 : f32 to vector<8x16xf32>
    %40 = arith.mulf %9, %39 : vector<8x16xf32>
    %41 = arith.addf %37, %40 : vector<8x16xf32>
    %c8 = arith.constant 8 : index
    %c0_11 = arith.constant 0 : index
    %42 = memref.load %arg2[%c8, %c0_11] : memref<9x8xf32, #tpu.memory_space<smem>>
    %43 = vector.broadcast %42 : f32 to vector<8x16xf32>
    %44 = arith.mulf %10, %43 : vector<8x16xf32>
    %45 = arith.addf %41, %44 : vector<8x16xf32>
    %c0_12 = arith.constant 0 : index
    %46 = memref.load %arg3[%c0_12] : memref<8xf32, #tpu.memory_space<smem>>
    %47 = vector.broadcast %46 : f32 to vector<8x16xf32>
    %48 = arith.addf %45, %47 : vector<8x16xf32>
    %cst = arith.constant 0.000000e+00 : f32
    %49 = vector.broadcast %cst : f32 to vector<8x16xf32>
    %50 = arith.maximumf %48, %49 : vector<8x16xf32>
    %c0_13 = arith.constant 0 : index
    %c0_14 = arith.constant 0 : index
    %c0_15 = arith.constant 0 : index
    %c0_16 = arith.constant 0 : index
    %51 = vector.load %arg4[%c0_13, %c0_14, %c0_15, %c0_16] : memref<1x8x8x16xf32, #tpu.memory_space<vmem>>, vector<1x1x8x16xf32>
    %52 = vector.shape_cast %51 : vector<1x1x8x16xf32> to vector<8x16xf32>
    %53 = vector.shape_cast %50 : vector<8x16xf32> to vector<1x1x8x16xf32>
    tpu.vector_store %arg4[%c0_13, %c0_14, %c0_15, %c0_16], %53 {strides = array<i32>} : memref<1x8x8x16xf32, #tpu.memory_space<vmem>>, vector<1x1x8x16xf32>,
    %c0_17 = arith.constant 0 : index
    %c1_18 = arith.constant 1 : index
    %54 = memref.load %arg2[%c0_17, %c1_18] : memref<9x8xf32, #tpu.memory_space<smem>>
    %55 = vector.broadcast %54 : f32 to vector<8x16xf32>
    %56 = arith.mulf %2, %55 : vector<8x16xf32>
    %c1_19 = arith.constant 1 : index
    %c1_20 = arith.constant 1 : index
    %57 = memref.load %arg2[%c1_19, %c1_20] : memref<9x8xf32, #tpu.memory_space<smem>>
    %58 = vector.broadcast %57 : f32 to vector<8x16xf32>
    %59 = arith.mulf %3, %58 : vector<8x16xf32>
    %60 = arith.addf %56, %59 : vector<8x16xf32>
    %c2_21 = arith.constant 2 : index
    %c1_22 = arith.constant 1 : index
    %61 = memref.load %arg2[%c2_21, %c1_22] : memref<9x8xf32, #tpu.memory_space<smem>>
    %62 = vector.broadcast %61 : f32 to vector<8x16xf32>
    %63 = arith.mulf %4, %62 : vector<8x16xf32>
    %64 = arith.addf %60, %63 : vector<8x16xf32>
    %c3_23 = arith.constant 3 : index
    %c1_24 = arith.constant 1 : index
    %65 = memref.load %arg2[%c3_23, %c1_24] : memref<9x8xf32, #tpu.memory_space<smem>>
    %66 = vector.broadcast %65 : f32 to vector<8x16xf32>
    %67 = arith.mulf %5, %66 : vector<8x16xf32>
    %68 = arith.addf %64, %67 : vector<8x16xf32>
    %c4_25 = arith.constant 4 : index
    %c1_26 = arith.constant 1 : index
    %69 = memref.load %arg2[%c4_25, %c1_26] : memref<9x8xf32, #tpu.memory_space<smem>>
    %70 = vector.broadcast %69 : f32 to vector<8x16xf32>
    %71 = arith.mulf %6, %70 : vector<8x16xf32>
    %72 = arith.addf %68, %71 : vector<8x16xf32>
    %c5_27 = arith.constant 5 : index
    %c1_28 = arith.constant 1 : index
    %73 = memref.load %arg2[%c5_27, %c1_28] : memref<9x8xf32, #tpu.memory_space<smem>>
    %74 = vector.broadcast %73 : f32 to vector<8x16xf32>
    %75 = arith.mulf %7, %74 : vector<8x16xf32>
    %76 = arith.addf %72, %75 : vector<8x16xf32>
    %c6_29 = arith.constant 6 : index
    %c1_30 = arith.constant 1 : index
    %77 = memref.load %arg2[%c6_29, %c1_30] : memref<9x8xf32, #tpu.memory_space<smem>>
    %78 = vector.broadcast %77 : f32 to vector<8x16xf32>
    %79 = arith.mulf %8, %78 : vector<8x16xf32>
    %80 = arith.addf %76, %79 : vector<8x16xf32>
    %c7_31 = arith.constant 7 : index
    %c1_32 = arith.constant 1 : index
    %81 = memref.load %arg2[%c7_31, %c1_32] : memref<9x8xf32, #tpu.memory_space<smem>>
    %82 = vector.broadcast %81 : f32 to vector<8x16xf32>
    %83 = arith.mulf %9, %82 : vector<8x16xf32>
    %84 = arith.addf %80, %83 : vector<8x16xf32>
    %c8_33 = arith.constant 8 : index
    %c1_34 = arith.constant 1 : index
    %85 = memref.load %arg2[%c8_33, %c1_34] : memref<9x8xf32, #tpu.memory_space<smem>>
    %86 = vector.broadcast %85 : f32 to vector<8x16xf32>
    %87 = arith.mulf %10, %86 : vector<8x16xf32>
    %88 = arith.addf %84, %87 : vector<8x16xf32>
    %c1_35 = arith.constant 1 : index
    %89 = memref.load %arg3[%c1_35] : memref<8xf32, #tpu.memory_space<smem>>
    %90 = vector.broadcast %89 : f32 to vector<8x16xf32>
    %91 = arith.addf %88, %90 : vector<8x16xf32>
    %cst_36 = arith.constant 0.000000e+00 : f32
    %92 = vector.broadcast %cst_36 : f32 to vector<8x16xf32>
    %93 = arith.maximumf %91, %92 : vector<8x16xf32>
    %c0_37 = arith.constant 0 : index
    %c1_38 = arith.constant 1 : index
    %c0_39 = arith.constant 0 : index
    %c0_40 = arith.constant 0 : index
    %94 = vector.load %arg4[%c0_37, %c1_38, %c0_39, %c0_40] : memref<1x8x8x16xf32, #tpu.memory_space<vmem>>, vector<1x1x8x16xf32>
    %95 = vector.shape_cast %94 : vector<1x1x8x16xf32> to vector<8x16xf32>
    %96 = vector.shape_cast %93 : vector<8x16xf32> to vector<1x1x8x16xf32>
    tpu.vector_store %arg4[%c0_37, %c1_38, %c0_39, %c0_40], %96 {strides = array<i32>} : memref<1x8x8x16xf32, #tpu.memory_space<vmem>>, vector<1x1x8x16xf32>,
    %c0_41 = arith.constant 0 : index
    %c2_42 = arith.constant 2 : index
    %97 = memref.load %arg2[%c0_41, %c2_42] : memref<9x8xf32, #tpu.memory_space<smem>>
    %98 = vector.broadcast %97 : f32 to vector<8x16xf32>
    %99 = arith.mulf %2, %98 : vector<8x16xf32>
    %c1_43 = arith.constant 1 : index
    %c2_44 = arith.constant 2 : index
    %100 = memref.load %arg2[%c1_43, %c2_44] : memref<9x8xf32, #tpu.memory_space<smem>>
    %101 = vector.broadcast %100 : f32 to vector<8x16xf32>
    %102 = arith.mulf %3, %101 : vector<8x16xf32>
    %103 = arith.addf %99, %102 : vector<8x16xf32>
    %c2_45 = arith.constant 2 : index
    %c2_46 = arith.constant 2 : index
    %104 = memref.load %arg2[%c2_45, %c2_46] : memref<9x8xf32, #tpu.memory_space<smem>>
    %105 = vector.broadcast %104 : f32 to vector<8x16xf32>
    %106 = arith.mulf %4, %105 : vector<8x16xf32>
    %107 = arith.addf %103, %106 : vector<8x16xf32>
    %c3_47 = arith.constant 3 : index
    %c2_48 = arith.constant 2 : index
    %108 = memref.load %arg2[%c3_47, %c2_48] : memref<9x8xf32, #tpu.memory_space<smem>>
    %109 = vector.broadcast %108 : f32 to vector<8x16xf32>
    %110 = arith.mulf %5, %109 : vector<8x16xf32>
    %111 = arith.addf %107, %110 : vector<8x16xf32>
    %c4_49 = arith.constant 4 : index
    %c2_50 = arith.constant 2 : index
    %112 = memref.load %arg2[%c4_49, %c2_50] : memref<9x8xf32, #tpu.memory_space<smem>>
    %113 = vector.broadcast %112 : f32 to vector<8x16xf32>
    %114 = arith.mulf %6, %113 : vector<8x16xf32>
    %115 = arith.addf %111, %114 : vector<8x16xf32>
    %c5_51 = arith.constant 5 : index
    %c2_52 = arith.constant 2 : index
    %116 = memref.load %arg2[%c5_51, %c2_52] : memref<9x8xf32, #tpu.memory_space<smem>>
    %117 = vector.broadcast %116 : f32 to vector<8x16xf32>
    %118 = arith.mulf %7, %117 : vector<8x16xf32>
    %119 = arith.addf %115, %118 : vector<8x16xf32>
    %c6_53 = arith.constant 6 : index
    %c2_54 = arith.constant 2 : index
    %120 = memref.load %arg2[%c6_53, %c2_54] : memref<9x8xf32, #tpu.memory_space<smem>>
    %121 = vector.broadcast %120 : f32 to vector<8x16xf32>
    %122 = arith.mulf %8, %121 : vector<8x16xf32>
    %123 = arith.addf %119, %122 : vector<8x16xf32>
    %c7_55 = arith.constant 7 : index
    %c2_56 = arith.constant 2 : index
    %124 = memref.load %arg2[%c7_55, %c2_56] : memref<9x8xf32, #tpu.memory_space<smem>>
    %125 = vector.broadcast %124 : f32 to vector<8x16xf32>
    %126 = arith.mulf %9, %125 : vector<8x16xf32>
    %127 = arith.addf %123, %126 : vector<8x16xf32>
    %c8_57 = arith.constant 8 : index
    %c2_58 = arith.constant 2 : index
    %128 = memref.load %arg2[%c8_57, %c2_58] : memref<9x8xf32, #tpu.memory_space<smem>>
    %129 = vector.broadcast %128 : f32 to vector<8x16xf32>
    %130 = arith.mulf %10, %129 : vector<8x16xf32>
    %131 = arith.addf %127, %130 : vector<8x16xf32>
    %c2_59 = arith.constant 2 : index
    %132 = memref.load %arg3[%c2_59] : memref<8xf32, #tpu.memory_space<smem>>
    %133 = vector.broadcast %132 : f32 to vector<8x16xf32>
    %134 = arith.addf %131, %133 : vector<8x16xf32>
    %cst_60 = arith.constant 0.000000e+00 : f32
    %135 = vector.broadcast %cst_60 : f32 to vector<8x16xf32>
    %136 = arith.maximumf %134, %135 : vector<8x16xf32>
    %c0_61 = arith.constant 0 : index
    %c2_62 = arith.constant 2 : index
    %c0_63 = arith.constant 0 : index
    %c0_64 = arith.constant 0 : index
    %137 = vector.load %arg4[%c0_61, %c2_62, %c0_63, %c0_64] : memref<1x8x8x16xf32, #tpu.memory_space<vmem>>, vector<1x1x8x16xf32>
    %138 = vector.shape_cast %137 : vector<1x1x8x16xf32> to vector<8x16xf32>
    %139 = vector.shape_cast %136 : vector<8x16xf32> to vector<1x1x8x16xf32>
    tpu.vector_store %arg4[%c0_61, %c2_62, %c0_63, %c0_64], %139 {strides = array<i32>} : memref<1x8x8x16xf32, #tpu.memory_space<vmem>>, vector<1x1x8x16xf32>,
    %c0_65 = arith.constant 0 : index
    %c3_66 = arith.constant 3 : index
    %140 = memref.load %arg2[%c0_65, %c3_66] : memref<9x8xf32, #tpu.memory_space<smem>>
    %141 = vector.broadcast %140 : f32 to vector<8x16xf32>
    %142 = arith.mulf %2, %141 : vector<8x16xf32>
    %c1_67 = arith.constant 1 : index
    %c3_68 = arith.constant 3 : index
    %143 = memref.load %arg2[%c1_67, %c3_68] : memref<9x8xf32, #tpu.memory_space<smem>>
    %144 = vector.broadcast %143 : f32 to vector<8x16xf32>
    %145 = arith.mulf %3, %144 : vector<8x16xf32>
    %146 = arith.addf %142, %145 : vector<8x16xf32>
    %c2_69 = arith.constant 2 : index
    %c3_70 = arith.constant 3 : index
    %147 = memref.load %arg2[%c2_69, %c3_70] : memref<9x8xf32, #tpu.memory_space<smem>>
    %148 = vector.broadcast %147 : f32 to vector<8x16xf32>
    %149 = arith.mulf %4, %148 : vector<8x16xf32>
    %150 = arith.addf %146, %149 : vector<8x16xf32>
    %c3_71 = arith.constant 3 : index
    %c3_72 = arith.constant 3 : index
    %151 = memref.load %arg2[%c3_71, %c3_72] : memref<9x8xf32, #tpu.memory_space<smem>>
    %152 = vector.broadcast %151 : f32 to vector<8x16xf32>
    %153 = arith.mulf %5, %152 : vector<8x16xf32>
    %154 = arith.addf %150, %153 : vector<8x16xf32>
    %c4_73 = arith.constant 4 : index
    %c3_74 = arith.constant 3 : index
    %155 = memref.load %arg2[%c4_73, %c3_74] : memref<9x8xf32, #tpu.memory_space<smem>>
    %156 = vector.broadcast %155 : f32 to vector<8x16xf32>
    %157 = arith.mulf %6, %156 : vector<8x16xf32>
    %158 = arith.addf %154, %157 : vector<8x16xf32>
    %c5_75 = arith.constant 5 : index
    %c3_76 = arith.constant 3 : index
    %159 = memref.load %arg2[%c5_75, %c3_76] : memref<9x8xf32, #tpu.memory_space<smem>>
    %160 = vector.broadcast %159 : f32 to vector<8x16xf32>
    %161 = arith.mulf %7, %160 : vector<8x16xf32>
    %162 = arith.addf %158, %161 : vector<8x16xf32>
    %c6_77 = arith.constant 6 : index
    %c3_78 = arith.constant 3 : index
    %163 = memref.load %arg2[%c6_77, %c3_78] : memref<9x8xf32, #tpu.memory_space<smem>>
    %164 = vector.broadcast %163 : f32 to vector<8x16xf32>
    %165 = arith.mulf %8, %164 : vector<8x16xf32>
    %166 = arith.addf %162, %165 : vector<8x16xf32>
    %c7_79 = arith.constant 7 : index
    %c3_80 = arith.constant 3 : index
    %167 = memref.load %arg2[%c7_79, %c3_80] : memref<9x8xf32, #tpu.memory_space<smem>>
    %168 = vector.broadcast %167 : f32 to vector<8x16xf32>
    %169 = arith.mulf %9, %168 : vector<8x16xf32>
    %170 = arith.addf %166, %169 : vector<8x16xf32>
    %c8_81 = arith.constant 8 : index
    %c3_82 = arith.constant 3 : index
    %171 = memref.load %arg2[%c8_81, %c3_82] : memref<9x8xf32, #tpu.memory_space<smem>>
    %172 = vector.broadcast %171 : f32 to vector<8x16xf32>
    %173 = arith.mulf %10, %172 : vector<8x16xf32>
    %174 = arith.addf %170, %173 : vector<8x16xf32>
    %c3_83 = arith.constant 3 : index
    %175 = memref.load %arg3[%c3_83] : memref<8xf32, #tpu.memory_space<smem>>
    %176 = vector.broadcast %175 : f32 to vector<8x16xf32>
    %177 = arith.addf %174, %176 : vector<8x16xf32>
    %cst_84 = arith.constant 0.000000e+00 : f32
    %178 = vector.broadcast %cst_84 : f32 to vector<8x16xf32>
    %179 = arith.maximumf %177, %178 : vector<8x16xf32>
    %c0_85 = arith.constant 0 : index
    %c3_86 = arith.constant 3 : index
    %c0_87 = arith.constant 0 : index
    %c0_88 = arith.constant 0 : index
    %180 = vector.load %arg4[%c0_85, %c3_86, %c0_87, %c0_88] : memref<1x8x8x16xf32, #tpu.memory_space<vmem>>, vector<1x1x8x16xf32>
    %181 = vector.shape_cast %180 : vector<1x1x8x16xf32> to vector<8x16xf32>
    %182 = vector.shape_cast %179 : vector<8x16xf32> to vector<1x1x8x16xf32>
    tpu.vector_store %arg4[%c0_85, %c3_86, %c0_87, %c0_88], %182 {strides = array<i32>} : memref<1x8x8x16xf32, #tpu.memory_space<vmem>>, vector<1x1x8x16xf32>,
    %c0_89 = arith.constant 0 : index
    %c4_90 = arith.constant 4 : index
    %183 = memref.load %arg2[%c0_89, %c4_90] : memref<9x8xf32, #tpu.memory_space<smem>>
    %184 = vector.broadcast %183 : f32 to vector<8x16xf32>
    %185 = arith.mulf %2, %184 : vector<8x16xf32>
    %c1_91 = arith.constant 1 : index
    %c4_92 = arith.constant 4 : index
    %186 = memref.load %arg2[%c1_91, %c4_92] : memref<9x8xf32, #tpu.memory_space<smem>>
    %187 = vector.broadcast %186 : f32 to vector<8x16xf32>
    %188 = arith.mulf %3, %187 : vector<8x16xf32>
    %189 = arith.addf %185, %188 : vector<8x16xf32>
    %c2_93 = arith.constant 2 : index
    %c4_94 = arith.constant 4 : index
    %190 = memref.load %arg2[%c2_93, %c4_94] : memref<9x8xf32, #tpu.memory_space<smem>>
    %191 = vector.broadcast %190 : f32 to vector<8x16xf32>
    %192 = arith.mulf %4, %191 : vector<8x16xf32>
    %193 = arith.addf %189, %192 : vector<8x16xf32>
    %c3_95 = arith.constant 3 : index
    %c4_96 = arith.constant 4 : index
    %194 = memref.load %arg2[%c3_95, %c4_96] : memref<9x8xf32, #tpu.memory_space<smem>>
    %195 = vector.broadcast %194 : f32 to vector<8x16xf32>
    %196 = arith.mulf %5, %195 : vector<8x16xf32>
    %197 = arith.addf %193, %196 : vector<8x16xf32>
    %c4_97 = arith.constant 4 : index
    %c4_98 = arith.constant 4 : index
    %198 = memref.load %arg2[%c4_97, %c4_98] : memref<9x8xf32, #tpu.memory_space<smem>>
    %199 = vector.broadcast %198 : f32 to vector<8x16xf32>
    %200 = arith.mulf %6, %199 : vector<8x16xf32>
    %201 = arith.addf %197, %200 : vector<8x16xf32>
    %c5_99 = arith.constant 5 : index
    %c4_100 = arith.constant 4 : index
    %202 = memref.load %arg2[%c5_99, %c4_100] : memref<9x8xf32, #tpu.memory_space<smem>>
    %203 = vector.broadcast %202 : f32 to vector<8x16xf32>
    %204 = arith.mulf %7, %203 : vector<8x16xf32>
    %205 = arith.addf %201, %204 : vector<8x16xf32>
    %c6_101 = arith.constant 6 : index
    %c4_102 = arith.constant 4 : index
    %206 = memref.load %arg2[%c6_101, %c4_102] : memref<9x8xf32, #tpu.memory_space<smem>>
    %207 = vector.broadcast %206 : f32 to vector<8x16xf32>
    %208 = arith.mulf %8, %207 : vector<8x16xf32>
    %209 = arith.addf %205, %208 : vector<8x16xf32>
    %c7_103 = arith.constant 7 : index
    %c4_104 = arith.constant 4 : index
    %210 = memref.load %arg2[%c7_103, %c4_104] : memref<9x8xf32, #tpu.memory_space<smem>>
    %211 = vector.broadcast %210 : f32 to vector<8x16xf32>
    %212 = arith.mulf %9, %211 : vector<8x16xf32>
    %213 = arith.addf %209, %212 : vector<8x16xf32>
    %c8_105 = arith.constant 8 : index
    %c4_106 = arith.constant 4 : index
    %214 = memref.load %arg2[%c8_105, %c4_106] : memref<9x8xf32, #tpu.memory_space<smem>>
    %215 = vector.broadcast %214 : f32 to vector<8x16xf32>
    %216 = arith.mulf %10, %215 : vector<8x16xf32>
    %217 = arith.addf %213, %216 : vector<8x16xf32>
    %c4_107 = arith.constant 4 : index
    %218 = memref.load %arg3[%c4_107] : memref<8xf32, #tpu.memory_space<smem>>
    %219 = vector.broadcast %218 : f32 to vector<8x16xf32>
    %220 = arith.addf %217, %219 : vector<8x16xf32>
    %cst_108 = arith.constant 0.000000e+00 : f32
    %221 = vector.broadcast %cst_108 : f32 to vector<8x16xf32>
    %222 = arith.maximumf %220, %221 : vector<8x16xf32>
    %c0_109 = arith.constant 0 : index
    %c4_110 = arith.constant 4 : index
    %c0_111 = arith.constant 0 : index
    %c0_112 = arith.constant 0 : index
    %223 = vector.load %arg4[%c0_109, %c4_110, %c0_111, %c0_112] : memref<1x8x8x16xf32, #tpu.memory_space<vmem>>, vector<1x1x8x16xf32>
    %224 = vector.shape_cast %223 : vector<1x1x8x16xf32> to vector<8x16xf32>
    %225 = vector.shape_cast %222 : vector<8x16xf32> to vector<1x1x8x16xf32>
    tpu.vector_store %arg4[%c0_109, %c4_110, %c0_111, %c0_112], %225 {strides = array<i32>} : memref<1x8x8x16xf32, #tpu.memory_space<vmem>>, vector<1x1x8x16xf32>,
    %c0_113 = arith.constant 0 : index
    %c5_114 = arith.constant 5 : index
    %226 = memref.load %arg2[%c0_113, %c5_114] : memref<9x8xf32, #tpu.memory_space<smem>>
    %227 = vector.broadcast %226 : f32 to vector<8x16xf32>
    %228 = arith.mulf %2, %227 : vector<8x16xf32>
    %c1_115 = arith.constant 1 : index
    %c5_116 = arith.constant 5 : index
    %229 = memref.load %arg2[%c1_115, %c5_116] : memref<9x8xf32, #tpu.memory_space<smem>>
    %230 = vector.broadcast %229 : f32 to vector<8x16xf32>
    %231 = arith.mulf %3, %230 : vector<8x16xf32>
    %232 = arith.addf %228, %231 : vector<8x16xf32>
    %c2_117 = arith.constant 2 : index
    %c5_118 = arith.constant 5 : index
    %233 = memref.load %arg2[%c2_117, %c5_118] : memref<9x8xf32, #tpu.memory_space<smem>>
    %234 = vector.broadcast %233 : f32 to vector<8x16xf32>
    %235 = arith.mulf %4, %234 : vector<8x16xf32>
    %236 = arith.addf %232, %235 : vector<8x16xf32>
    %c3_119 = arith.constant 3 : index
    %c5_120 = arith.constant 5 : index
    %237 = memref.load %arg2[%c3_119, %c5_120] : memref<9x8xf32, #tpu.memory_space<smem>>
    %238 = vector.broadcast %237 : f32 to vector<8x16xf32>
    %239 = arith.mulf %5, %238 : vector<8x16xf32>
    %240 = arith.addf %236, %239 : vector<8x16xf32>
    %c4_121 = arith.constant 4 : index
    %c5_122 = arith.constant 5 : index
    %241 = memref.load %arg2[%c4_121, %c5_122] : memref<9x8xf32, #tpu.memory_space<smem>>
    %242 = vector.broadcast %241 : f32 to vector<8x16xf32>
    %243 = arith.mulf %6, %242 : vector<8x16xf32>
    %244 = arith.addf %240, %243 : vector<8x16xf32>
    %c5_123 = arith.constant 5 : index
    %c5_124 = arith.constant 5 : index
    %245 = memref.load %arg2[%c5_123, %c5_124] : memref<9x8xf32, #tpu.memory_space<smem>>
    %246 = vector.broadcast %245 : f32 to vector<8x16xf32>
    %247 = arith.mulf %7, %246 : vector<8x16xf32>
    %248 = arith.addf %244, %247 : vector<8x16xf32>
    %c6_125 = arith.constant 6 : index
    %c5_126 = arith.constant 5 : index
    %249 = memref.load %arg2[%c6_125, %c5_126] : memref<9x8xf32, #tpu.memory_space<smem>>
    %250 = vector.broadcast %249 : f32 to vector<8x16xf32>
    %251 = arith.mulf %8, %250 : vector<8x16xf32>
    %252 = arith.addf %248, %251 : vector<8x16xf32>
    %c7_127 = arith.constant 7 : index
    %c5_128 = arith.constant 5 : index
    %253 = memref.load %arg2[%c7_127, %c5_128] : memref<9x8xf32, #tpu.memory_space<smem>>
    %254 = vector.broadcast %253 : f32 to vector<8x16xf32>
    %255 = arith.mulf %9, %254 : vector<8x16xf32>
    %256 = arith.addf %252, %255 : vector<8x16xf32>
    %c8_129 = arith.constant 8 : index
    %c5_130 = arith.constant 5 : index
    %257 = memref.load %arg2[%c8_129, %c5_130] : memref<9x8xf32, #tpu.memory_space<smem>>
    %258 = vector.broadcast %257 : f32 to vector<8x16xf32>
    %259 = arith.mulf %10, %258 : vector<8x16xf32>
    %260 = arith.addf %256, %259 : vector<8x16xf32>
    %c5_131 = arith.constant 5 : index
    %261 = memref.load %arg3[%c5_131] : memref<8xf32, #tpu.memory_space<smem>>
    %262 = vector.broadcast %261 : f32 to vector<8x16xf32>
    %263 = arith.addf %260, %262 : vector<8x16xf32>
    %cst_132 = arith.constant 0.000000e+00 : f32
    %264 = vector.broadcast %cst_132 : f32 to vector<8x16xf32>
    %265 = arith.maximumf %263, %264 : vector<8x16xf32>
    %c0_133 = arith.constant 0 : index
    %c5_134 = arith.constant 5 : index
    %c0_135 = arith.constant 0 : index
    %c0_136 = arith.constant 0 : index
    %266 = vector.load %arg4[%c0_133, %c5_134, %c0_135, %c0_136] : memref<1x8x8x16xf32, #tpu.memory_space<vmem>>, vector<1x1x8x16xf32>
    %267 = vector.shape_cast %266 : vector<1x1x8x16xf32> to vector<8x16xf32>
    %268 = vector.shape_cast %265 : vector<8x16xf32> to vector<1x1x8x16xf32>
    tpu.vector_store %arg4[%c0_133, %c5_134, %c0_135, %c0_136], %268 {strides = array<i32>} : memref<1x8x8x16xf32, #tpu.memory_space<vmem>>, vector<1x1x8x16xf32>,
    %c0_137 = arith.constant 0 : index
    %c6_138 = arith.constant 6 : index
    %269 = memref.load %arg2[%c0_137, %c6_138] : memref<9x8xf32, #tpu.memory_space<smem>>
    %270 = vector.broadcast %269 : f32 to vector<8x16xf32>
    %271 = arith.mulf %2, %270 : vector<8x16xf32>
    %c1_139 = arith.constant 1 : index
    %c6_140 = arith.constant 6 : index
    %272 = memref.load %arg2[%c1_139, %c6_140] : memref<9x8xf32, #tpu.memory_space<smem>>
    %273 = vector.broadcast %272 : f32 to vector<8x16xf32>
    %274 = arith.mulf %3, %273 : vector<8x16xf32>
    %275 = arith.addf %271, %274 : vector<8x16xf32>
    %c2_141 = arith.constant 2 : index
    %c6_142 = arith.constant 6 : index
    %276 = memref.load %arg2[%c2_141, %c6_142] : memref<9x8xf32, #tpu.memory_space<smem>>
    %277 = vector.broadcast %276 : f32 to vector<8x16xf32>
    %278 = arith.mulf %4, %277 : vector<8x16xf32>
    %279 = arith.addf %275, %278 : vector<8x16xf32>
    %c3_143 = arith.constant 3 : index
    %c6_144 = arith.constant 6 : index
    %280 = memref.load %arg2[%c3_143, %c6_144] : memref<9x8xf32, #tpu.memory_space<smem>>
    %281 = vector.broadcast %280 : f32 to vector<8x16xf32>
    %282 = arith.mulf %5, %281 : vector<8x16xf32>
    %283 = arith.addf %279, %282 : vector<8x16xf32>
    %c4_145 = arith.constant 4 : index
    %c6_146 = arith.constant 6 : index
    %284 = memref.load %arg2[%c4_145, %c6_146] : memref<9x8xf32, #tpu.memory_space<smem>>
    %285 = vector.broadcast %284 : f32 to vector<8x16xf32>
    %286 = arith.mulf %6, %285 : vector<8x16xf32>
    %287 = arith.addf %283, %286 : vector<8x16xf32>
    %c5_147 = arith.constant 5 : index
    %c6_148 = arith.constant 6 : index
    %288 = memref.load %arg2[%c5_147, %c6_148] : memref<9x8xf32, #tpu.memory_space<smem>>
    %289 = vector.broadcast %288 : f32 to vector<8x16xf32>
    %290 = arith.mulf %7, %289 : vector<8x16xf32>
    %291 = arith.addf %287, %290 : vector<8x16xf32>
    %c6_149 = arith.constant 6 : index
    %c6_150 = arith.constant 6 : index
    %292 = memref.load %arg2[%c6_149, %c6_150] : memref<9x8xf32, #tpu.memory_space<smem>>
    %293 = vector.broadcast %292 : f32 to vector<8x16xf32>
    %294 = arith.mulf %8, %293 : vector<8x16xf32>
    %295 = arith.addf %291, %294 : vector<8x16xf32>
    %c7_151 = arith.constant 7 : index
    %c6_152 = arith.constant 6 : index
    %296 = memref.load %arg2[%c7_151, %c6_152] : memref<9x8xf32, #tpu.memory_space<smem>>
    %297 = vector.broadcast %296 : f32 to vector<8x16xf32>
    %298 = arith.mulf %9, %297 : vector<8x16xf32>
    %299 = arith.addf %295, %298 : vector<8x16xf32>
    %c8_153 = arith.constant 8 : index
    %c6_154 = arith.constant 6 : index
    %300 = memref.load %arg2[%c8_153, %c6_154] : memref<9x8xf32, #tpu.memory_space<smem>>
    %301 = vector.broadcast %300 : f32 to vector<8x16xf32>
    %302 = arith.mulf %10, %301 : vector<8x16xf32>
    %303 = arith.addf %299, %302 : vector<8x16xf32>
    %c6_155 = arith.constant 6 : index
    %304 = memref.load %arg3[%c6_155] : memref<8xf32, #tpu.memory_space<smem>>
    %305 = vector.broadcast %304 : f32 to vector<8x16xf32>
    %306 = arith.addf %303, %305 : vector<8x16xf32>
    %cst_156 = arith.constant 0.000000e+00 : f32
    %307 = vector.broadcast %cst_156 : f32 to vector<8x16xf32>
    %308 = arith.maximumf %306, %307 : vector<8x16xf32>
    %c0_157 = arith.constant 0 : index
    %c6_158 = arith.constant 6 : index
    %c0_159 = arith.constant 0 : index
    %c0_160 = arith.constant 0 : index
    %309 = vector.load %arg4[%c0_157, %c6_158, %c0_159, %c0_160] : memref<1x8x8x16xf32, #tpu.memory_space<vmem>>, vector<1x1x8x16xf32>
    %310 = vector.shape_cast %309 : vector<1x1x8x16xf32> to vector<8x16xf32>
    %311 = vector.shape_cast %308 : vector<8x16xf32> to vector<1x1x8x16xf32>
    tpu.vector_store %arg4[%c0_157, %c6_158, %c0_159, %c0_160], %311 {strides = array<i32>} : memref<1x8x8x16xf32, #tpu.memory_space<vmem>>, vector<1x1x8x16xf32>,
    %c0_161 = arith.constant 0 : index
    %c7_162 = arith.constant 7 : index
    %312 = memref.load %arg2[%c0_161, %c7_162] : memref<9x8xf32, #tpu.memory_space<smem>>
    %313 = vector.broadcast %312 : f32 to vector<8x16xf32>
    %314 = arith.mulf %2, %313 : vector<8x16xf32>
    %c1_163 = arith.constant 1 : index
    %c7_164 = arith.constant 7 : index
    %315 = memref.load %arg2[%c1_163, %c7_164] : memref<9x8xf32, #tpu.memory_space<smem>>
    %316 = vector.broadcast %315 : f32 to vector<8x16xf32>
    %317 = arith.mulf %3, %316 : vector<8x16xf32>
    %318 = arith.addf %314, %317 : vector<8x16xf32>
    %c2_165 = arith.constant 2 : index
    %c7_166 = arith.constant 7 : index
    %319 = memref.load %arg2[%c2_165, %c7_166] : memref<9x8xf32, #tpu.memory_space<smem>>
    %320 = vector.broadcast %319 : f32 to vector<8x16xf32>
    %321 = arith.mulf %4, %320 : vector<8x16xf32>
    %322 = arith.addf %318, %321 : vector<8x16xf32>
    %c3_167 = arith.constant 3 : index
    %c7_168 = arith.constant 7 : index
    %323 = memref.load %arg2[%c3_167, %c7_168] : memref<9x8xf32, #tpu.memory_space<smem>>
    %324 = vector.broadcast %323 : f32 to vector<8x16xf32>
    %325 = arith.mulf %5, %324 : vector<8x16xf32>
    %326 = arith.addf %322, %325 : vector<8x16xf32>
    %c4_169 = arith.constant 4 : index
    %c7_170 = arith.constant 7 : index
    %327 = memref.load %arg2[%c4_169, %c7_170] : memref<9x8xf32, #tpu.memory_space<smem>>
    %328 = vector.broadcast %327 : f32 to vector<8x16xf32>
    %329 = arith.mulf %6, %328 : vector<8x16xf32>
    %330 = arith.addf %326, %329 : vector<8x16xf32>
    %c5_171 = arith.constant 5 : index
    %c7_172 = arith.constant 7 : index
    %331 = memref.load %arg2[%c5_171, %c7_172] : memref<9x8xf32, #tpu.memory_space<smem>>
    %332 = vector.broadcast %331 : f32 to vector<8x16xf32>
    %333 = arith.mulf %7, %332 : vector<8x16xf32>
    %334 = arith.addf %330, %333 : vector<8x16xf32>
    %c6_173 = arith.constant 6 : index
    %c7_174 = arith.constant 7 : index
    %335 = memref.load %arg2[%c6_173, %c7_174] : memref<9x8xf32, #tpu.memory_space<smem>>
    %336 = vector.broadcast %335 : f32 to vector<8x16xf32>
    %337 = arith.mulf %8, %336 : vector<8x16xf32>
    %338 = arith.addf %334, %337 : vector<8x16xf32>
    %c7_175 = arith.constant 7 : index
    %c7_176 = arith.constant 7 : index
    %339 = memref.load %arg2[%c7_175, %c7_176] : memref<9x8xf32, #tpu.memory_space<smem>>
    %340 = vector.broadcast %339 : f32 to vector<8x16xf32>
    %341 = arith.mulf %9, %340 : vector<8x16xf32>
    %342 = arith.addf %338, %341 : vector<8x16xf32>
    %c8_177 = arith.constant 8 : index
    %c7_178 = arith.constant 7 : index
    %343 = memref.load %arg2[%c8_177, %c7_178] : memref<9x8xf32, #tpu.memory_space<smem>>
    %344 = vector.broadcast %343 : f32 to vector<8x16xf32>
    %345 = arith.mulf %10, %344 : vector<8x16xf32>
    %346 = arith.addf %342, %345 : vector<8x16xf32>
    %c7_179 = arith.constant 7 : index
    %347 = memref.load %arg3[%c7_179] : memref<8xf32, #tpu.memory_space<smem>>
    %348 = vector.broadcast %347 : f32 to vector<8x16xf32>
    %349 = arith.addf %346, %348 : vector<8x16xf32>
    %cst_180 = arith.constant 0.000000e+00 : f32
    %350 = vector.broadcast %cst_180 : f32 to vector<8x16xf32>
    %351 = arith.maximumf %349, %350 : vector<8x16xf32>
    %c0_181 = arith.constant 0 : index
    %c7_182 = arith.constant 7 : index
    %c0_183 = arith.constant 0 : index
    %c0_184 = arith.constant 0 : index
    %352 = vector.load %arg4[%c0_181, %c7_182, %c0_183, %c0_184] : memref<1x8x8x16xf32, #tpu.memory_space<vmem>>, vector<1x1x8x16xf32>
    %353 = vector.shape_cast %352 : vector<1x1x8x16xf32> to vector<8x16xf32>
    %354 = vector.shape_cast %351 : vector<8x16xf32> to vector<1x1x8x16xf32>
    tpu.vector_store %arg4[%c0_181, %c7_182, %c0_183, %c0_184], %354 {strides = array<i32>} : memref<1x8x8x16xf32, #tpu.memory_space<vmem>>, vector<1x1x8x16xf32>,
    return
  }
  func.func @transform_0(%arg0: i32) -> (i32, i32, i32) {
    %c0_i32 = arith.constant 0 : i32
    %c0_i32_0 = arith.constant 0 : i32
    %c0_i32_1 = arith.constant 0 : i32
    return %arg0, %c0_i32, %c0_i32_0 : i32, i32, i32
  }
  func.func @transform_1(%arg0: i32) -> (i32, i32) {
    %c0_i32 = arith.constant 0 : i32
    %c0_i32_0 = arith.constant 0 : i32
    %c0_i32_1 = arith.constant 0 : i32
    return %c0_i32, %c0_i32_0 : i32, i32
  }
  func.func @transform_2(%arg0: i32) -> i32 {
    %c0_i32 = arith.constant 0 : i32
    %c0_i32_0 = arith.constant 0 : i32
    return %c0_i32 : i32
  }
  func.func @transform_3(%arg0: i32) -> (i32, i32, i32, i32) {
    %c0_i32 = arith.constant 0 : i32
    %c0_i32_0 = arith.constant 0 : i32
    %c0_i32_1 = arith.constant 0 : i32
    %c0_i32_2 = arith.constant 0 : i32
    return %arg0, %c0_i32, %c0_i32_0, %c0_i32_1 : i32, i32, i32, i32
  }
}

module attributes {stable_mosaic.version = 11 : i64} {
  func.func @_linear_kernel(%arg0: i32, %arg1: memref<2x64xf32, #tpu.memory_space<vmem>>, %arg2: memref<64x32xf32, #tpu.memory_space<vmem>>, %arg3: memref<1x32xf32, #tpu.memory_space<vmem>>, %arg4: memref<2x32xf32, #tpu.memory_space<vmem>>) attributes {dimension_semantics = [#tpu.dimension_semantics<parallel>], iteration_bounds = array<i64: 1>, scalar_prefetch = 0 : i64, scratch_operands = 0 : i64, tpu.core_type = #tpu.core_type<tc>, window_params = [{transform_indices = @transform_0, window_bounds = array<i64: 2, 64>}, {pipeline_mode = #tpu.pipeline_mode<synchronous>, transform_indices = @transform_1, window_bounds = array<i64: 64, 32>}, {pipeline_mode = #tpu.pipeline_mode<synchronous>, transform_indices = @transform_2, window_bounds = array<i64: 1, 32>}, {transform_indices = @transform_3, window_bounds = array<i64: 2, 32>}]} {
    %c0 = arith.constant 0 : index
    %c0_0 = arith.constant 0 : index
    %0 = vector.load %arg1[%c0, %c0_0] : memref<2x64xf32, #tpu.memory_space<vmem>>, vector<2x64xf32>
    %c0_1 = arith.constant 0 : index
    %c0_2 = arith.constant 0 : index
    %1 = vector.load %arg2[%c0_1, %c0_2] : memref<64x32xf32, #tpu.memory_space<vmem>>, vector<64x32xf32>
    %cst = arith.constant dense<0.000000e+00> : vector<2x32xf32>
    %2 = tpu.matmul %0, %1, %cst {dimension_numbers = #tpu.dot_dimension_numbers<[1], [0], [0], [1], [0, 0, 1, 1], [], []>} : vector<2x64xf32>, vector<64x32xf32>, vector<2x32xf32> -> vector<2x32xf32>
    %c0_3 = arith.constant 0 : index
    %c0_4 = arith.constant 0 : index
    %3 = vector.load %arg3[%c0_3, %c0_4] : memref<1x32xf32, #tpu.memory_space<vmem>>, vector<1x32xf32>
    %4 = vector.broadcast %3 : vector<1x32xf32> to vector<2x32xf32>
    %5 = arith.addf %2, %4 : vector<2x32xf32>
    %6 = math.tanh %5 : vector<2x32xf32>
    %c0_5 = arith.constant 0 : index
    %c0_6 = arith.constant 0 : index
    %7 = vector.load %arg4[%c0_5, %c0_6] : memref<2x32xf32, #tpu.memory_space<vmem>>, vector<2x32xf32>
    tpu.vector_store %arg4[%c0_5, %c0_6], %6 {strides = array<i32>} : memref<2x32xf32, #tpu.memory_space<vmem>>, vector<2x32xf32>,
    return
  }
  func.func @transform_0(%arg0: i32) -> (i32, i32) {
    %c0_i32 = arith.constant 0 : i32
    %c0_i32_0 = arith.constant 0 : i32
    return %arg0, %c0_i32 : i32, i32
  }
  func.func @transform_1(%arg0: i32) -> (i32, i32) {
    %c0_i32 = arith.constant 0 : i32
    %c0_i32_0 = arith.constant 0 : i32
    %c0_i32_1 = arith.constant 0 : i32
    return %c0_i32, %c0_i32_0 : i32, i32
  }
  func.func @transform_2(%arg0: i32) -> (i32, i32) {
    %c0_i32 = arith.constant 0 : i32
    %c0_i32_0 = arith.constant 0 : i32
    %c0_i32_1 = arith.constant 0 : i32
    return %c0_i32, %c0_i32_0 : i32, i32
  }
  func.func @transform_3(%arg0: i32) -> (i32, i32) {
    %c0_i32 = arith.constant 0 : i32
    %c0_i32_0 = arith.constant 0 : i32
    return %arg0, %c0_i32 : i32, i32
  }
}

module attributes {stable_mosaic.version = 11 : i64} {
  func.func @_linear_kernel(%arg0: i32, %arg1: memref<256x64xf32, #tpu.memory_space<vmem>>, %arg2: memref<64x32xf32, #tpu.memory_space<vmem>>, %arg3: memref<1x32xf32, #tpu.memory_space<vmem>>, %arg4: memref<256x32xf32, #tpu.memory_space<vmem>>) attributes {dimension_semantics = [#tpu.dimension_semantics<parallel>], iteration_bounds = array<i64: 1>, scalar_prefetch = 0 : i64, scratch_operands = 0 : i64, tpu.core_type = #tpu.core_type<tc>, window_params = [{transform_indices = @transform_0, window_bounds = array<i64: 256, 64>}, {pipeline_mode = #tpu.pipeline_mode<synchronous>, transform_indices = @transform_1, window_bounds = array<i64: 64, 32>}, {pipeline_mode = #tpu.pipeline_mode<synchronous>, transform_indices = @transform_2, window_bounds = array<i64: 1, 32>}, {transform_indices = @transform_3, window_bounds = array<i64: 256, 32>}]} {
    %c0 = arith.constant 0 : index
    %c0_0 = arith.constant 0 : index
    %0 = vector.load %arg1[%c0, %c0_0] : memref<256x64xf32, #tpu.memory_space<vmem>>, vector<256x64xf32>
    %c0_1 = arith.constant 0 : index
    %c0_2 = arith.constant 0 : index
    %1 = vector.load %arg2[%c0_1, %c0_2] : memref<64x32xf32, #tpu.memory_space<vmem>>, vector<64x32xf32>
    %cst = arith.constant dense<0.000000e+00> : vector<256x32xf32>
    %2 = tpu.matmul %0, %1, %cst {dimension_numbers = #tpu.dot_dimension_numbers<[1], [0], [0], [1], [0, 0, 1, 1], [], []>} : vector<256x64xf32>, vector<64x32xf32>, vector<256x32xf32> -> vector<256x32xf32>
    %c0_3 = arith.constant 0 : index
    %c0_4 = arith.constant 0 : index
    %3 = vector.load %arg3[%c0_3, %c0_4] : memref<1x32xf32, #tpu.memory_space<vmem>>, vector<1x32xf32>
    %4 = vector.broadcast %3 : vector<1x32xf32> to vector<256x32xf32>
    %5 = arith.addf %2, %4 : vector<256x32xf32>
    %c0_5 = arith.constant 0 : index
    %c0_6 = arith.constant 0 : index
    %6 = vector.load %arg4[%c0_5, %c0_6] : memref<256x32xf32, #tpu.memory_space<vmem>>, vector<256x32xf32>
    tpu.vector_store %arg4[%c0_5, %c0_6], %5 {strides = array<i32>} : memref<256x32xf32, #tpu.memory_space<vmem>>, vector<256x32xf32>,
    return
  }
  func.func @transform_0(%arg0: i32) -> (i32, i32) {
    %c0_i32 = arith.constant 0 : i32
    %c0_i32_0 = arith.constant 0 : i32
    return %arg0, %c0_i32 : i32, i32
  }
  func.func @transform_1(%arg0: i32) -> (i32, i32) {
    %c0_i32 = arith.constant 0 : i32
    %c0_i32_0 = arith.constant 0 : i32
    %c0_i32_1 = arith.constant 0 : i32
    return %c0_i32, %c0_i32_0 : i32, i32
  }
  func.func @transform_2(%arg0: i32) -> (i32, i32) {
    %c0_i32 = arith.constant 0 : i32
    %c0_i32_0 = arith.constant 0 : i32
    %c0_i32_1 = arith.constant 0 : i32
    return %c0_i32, %c0_i32_0 : i32, i32
  }
  func.func @transform_3(%arg0: i32) -> (i32, i32) {
    %c0_i32 = arith.constant 0 : i32
    %c0_i32_0 = arith.constant 0 : i32
    return %arg0, %c0_i32 : i32, i32
  }
}

module attributes {stable_mosaic.version = 11 : i64} {
  func.func @_decoder_kernel(%arg0: i32, %arg1: memref<1x2x32xf32, #tpu.memory_space<vmem>>, %arg2: memref<2x32xf32, #tpu.memory_space<vmem>>, %arg3: memref<2x32xf32, #tpu.memory_space<vmem>>, %arg4: memref<2x32xf32, #tpu.memory_space<vmem>>, %arg5: memref<2x32x128xf32, #tpu.memory_space<vmem>>, %arg6: memref<2x128x64xf32, #tpu.memory_space<vmem>>, %arg7: memref<32x128xf32, #tpu.memory_space<vmem>>, %arg8: memref<32x128xf32, #tpu.memory_space<vmem>>, %arg9: memref<32x128xf32, #tpu.memory_space<vmem>>, %arg10: memref<1x128xf32, #tpu.memory_space<vmem>>, %arg11: memref<32x32xf32, #tpu.memory_space<vmem>>, %arg12: memref<64x32xf32, #tpu.memory_space<vmem>>, %arg13: memref<1x32xf32, #tpu.memory_space<vmem>>, %arg14: memref<32x128xf32, #tpu.memory_space<vmem>>, %arg15: memref<1x128xf32, #tpu.memory_space<vmem>>, %arg16: memref<1x2x128xf32, #tpu.memory_space<vmem>>, %arg17: memref<2x32xf32, #tpu.memory_space<vmem>>, %arg18: memref<2x32xf32, #tpu.memory_space<vmem>>, %arg19: memref<2x32xf32, #tpu.memory_space<vmem>>) attributes {dimension_semantics = [#tpu.dimension_semantics<arbitrary>], iteration_bounds = array<i64: 7>, scalar_prefetch = 0 : i64, scratch_operands = 3 : i64, tpu.core_type = #tpu.core_type<tc>, window_params = [{transform_indices = @transform_0, window_bounds = array<i64: 1, 2, 32>}, {pipeline_mode = #tpu.pipeline_mode<synchronous>, transform_indices = @transform_1, window_bounds = array<i64: 2, 32>}, {pipeline_mode = #tpu.pipeline_mode<synchronous>, transform_indices = @transform_2, window_bounds = array<i64: 2, 32>}, {pipeline_mode = #tpu.pipeline_mode<synchronous>, transform_indices = @transform_3, window_bounds = array<i64: 2, 32>}, {pipeline_mode = #tpu.pipeline_mode<synchronous>, transform_indices = @transform_4, window_bounds = array<i64: 2, 32, 128>}, {pipeline_mode = #tpu.pipeline_mode<synchronous>, transform_indices = @transform_5, window_bounds = array<i64: 2, 128, 64>}, {pipeline_mode = #tpu.pipeline_mode<synchronous>, transform_indices = @transform_6, window_bounds = array<i64: 32, 128>}, {pipeline_mode = #tpu.pipeline_mode<synchronous>, transform_indices = @transform_7, window_bounds = array<i64: 32, 128>}, {pipeline_mode = #tpu.pipeline_mode<synchronous>, transform_indices = @transform_8, window_bounds = array<i64: 32, 128>}, {pipeline_mode = #tpu.pipeline_mode<synchronous>, transform_indices = @transform_9, window_bounds = array<i64: 1, 128>}, {pipeline_mode = #tpu.pipeline_mode<synchronous>, transform_indices = @transform_10, window_bounds = array<i64: 32, 32>}, {pipeline_mode = #tpu.pipeline_mode<synchronous>, transform_indices = @transform_11, window_bounds = array<i64: 64, 32>}, {pipeline_mode = #tpu.pipeline_mode<synchronous>, transform_indices = @transform_12, window_bounds = array<i64: 1, 32>}, {pipeline_mode = #tpu.pipeline_mode<synchronous>, transform_indices = @transform_13, window_bounds = array<i64: 32, 128>}, {pipeline_mode = #tpu.pipeline_mode<synchronous>, transform_indices = @transform_14, window_bounds = array<i64: 1, 128>}, {transform_indices = @transform_15, window_bounds = array<i64: 1, 2, 128>}]} {
    %c0_i32 = arith.constant 0 : i32
    %0 = arith.cmpi eq, %arg0, %c0_i32 : i32
    %1 = arith.extui %0 : i1 to i32
    %c0_i32_0 = arith.constant 0 : i32
    %2 = arith.cmpi ne, %1, %c0_i32_0 : i32
    scf.if %2 {
      %c0_65 = arith.constant 0 : index
      %c0_66 = arith.constant 0 : index
      %109 = vector.load %arg2[%c0_65, %c0_66] : memref<2x32xf32, #tpu.memory_space<vmem>>, vector<2x32xf32>
      %c0_67 = arith.constant 0 : index
      %c0_68 = arith.constant 0 : index
      %110 = vector.load %arg17[%c0_67, %c0_68] : memref<2x32xf32, #tpu.memory_space<vmem>>, vector<2x32xf32>
      tpu.vector_store %arg17[%c0_67, %c0_68], %109 {strides = array<i32>} : memref<2x32xf32, #tpu.memory_space<vmem>>, vector<2x32xf32>,
      %c0_69 = arith.constant 0 : index
      %c0_70 = arith.constant 0 : index
      %111 = vector.load %arg3[%c0_69, %c0_70] : memref<2x32xf32, #tpu.memory_space<vmem>>, vector<2x32xf32>
      %c0_71 = arith.constant 0 : index
      %c0_72 = arith.constant 0 : index
      %112 = vector.load %arg18[%c0_71, %c0_72] : memref<2x32xf32, #tpu.memory_space<vmem>>, vector<2x32xf32>
      tpu.vector_store %arg18[%c0_71, %c0_72], %111 {strides = array<i32>} : memref<2x32xf32, #tpu.memory_space<vmem>>, vector<2x32xf32>,
      %c0_73 = arith.constant 0 : index
      %c0_74 = arith.constant 0 : index
      %113 = vector.load %arg4[%c0_73, %c0_74] : memref<2x32xf32, #tpu.memory_space<vmem>>, vector<2x32xf32>
      %c0_75 = arith.constant 0 : index
      %c0_76 = arith.constant 0 : index
      %114 = vector.load %arg19[%c0_75, %c0_76] : memref<2x32xf32, #tpu.memory_space<vmem>>, vector<2x32xf32>
      tpu.vector_store %arg19[%c0_75, %c0_76], %113 {strides = array<i32>} : memref<2x32xf32, #tpu.memory_space<vmem>>, vector<2x32xf32>,
    } else {
    }
    %c0 = arith.constant 0 : index
    %c0_1 = arith.constant 0 : index
    %c0_2 = arith.constant 0 : index
    %3 = vector.load %arg1[%c0, %c0_1, %c0_2] : memref<1x2x32xf32, #tpu.memory_space<vmem>>, vector<1x2x32xf32>
    %4 = vector.shape_cast %3 : vector<1x2x32xf32> to vector<2x32xf32>
    %c0_3 = arith.constant 0 : index
    %c0_4 = arith.constant 0 : index
    %5 = vector.load %arg7[%c0_3, %c0_4] : memref<32x128xf32, #tpu.memory_space<vmem>>, vector<32x128xf32>
    %cst = arith.constant dense<0.000000e+00> : vector<2x128xf32>
    %6 = tpu.matmul %4, %5, %cst {dimension_numbers = #tpu.dot_dimension_numbers<[1], [0], [0], [1], [0, 0, 1, 1], [], []>} : vector<2x32xf32>, vector<32x128xf32>, vector<2x128xf32> -> vector<2x128xf32>
    %c0_5 = arith.constant 0 : index
    %c0_6 = arith.constant 0 : index
    %7 = vector.load %arg19[%c0_5, %c0_6] : memref<2x32xf32, #tpu.memory_space<vmem>>, vector<2x32xf32>
    %c0_7 = arith.constant 0 : index
    %c0_8 = arith.constant 0 : index
    %8 = vector.load %arg8[%c0_7, %c0_8] : memref<32x128xf32, #tpu.memory_space<vmem>>, vector<32x128xf32>
    %cst_9 = arith.constant dense<0.000000e+00> : vector<2x128xf32>
    %9 = tpu.matmul %7, %8, %cst_9 {dimension_numbers = #tpu.dot_dimension_numbers<[1], [0], [0], [1], [0, 0, 1, 1], [], []>} : vector<2x32xf32>, vector<32x128xf32>, vector<2x128xf32> -> vector<2x128xf32>
    %10 = arith.addf %6, %9 : vector<2x128xf32>
    %c0_10 = arith.constant 0 : index
    %c0_11 = arith.constant 0 : index
    %11 = vector.load %arg17[%c0_10, %c0_11] : memref<2x32xf32, #tpu.memory_space<vmem>>, vector<2x32xf32>
    %c0_12 = arith.constant 0 : index
    %c0_13 = arith.constant 0 : index
    %12 = vector.load %arg9[%c0_12, %c0_13] : memref<32x128xf32, #tpu.memory_space<vmem>>, vector<32x128xf32>
    %cst_14 = arith.constant dense<0.000000e+00> : vector<2x128xf32>
    %13 = tpu.matmul %11, %12, %cst_14 {dimension_numbers = #tpu.dot_dimension_numbers<[1], [0], [0], [1], [0, 0, 1, 1], [], []>} : vector<2x32xf32>, vector<32x128xf32>, vector<2x128xf32> -> vector<2x128xf32>
    %14 = arith.addf %10, %13 : vector<2x128xf32>
    %c0_15 = arith.constant 0 : index
    %c0_16 = arith.constant 0 : index
    %15 = vector.load %arg10[%c0_15, %c0_16] : memref<1x128xf32, #tpu.memory_space<vmem>>, vector<1x128xf32>
    %16 = vector.broadcast %15 : vector<1x128xf32> to vector<2x128xf32>
    %17 = arith.addf %14, %16 : vector<2x128xf32>
    %c0_17 = arith.constant 0 : index
    %c0_18 = arith.constant 0 : index
    %18 = vector.load %arg18[%c0_17, %c0_18] : memref<2x32xf32, #tpu.memory_space<vmem>>, vector<2x32xf32>
    %19 = vector.extract_strided_slice %17 {offsets = [0, 0], sizes = [2, 32], strides = [1, 1]} : vector<2x128xf32> to vector<2x32xf32>
    %20 = arith.negf %19 : vector<2x32xf32>
    %21 = math.exp %20 : vector<2x32xf32>
    %cst_19 = arith.constant 1.000000e+00 : f32
    %22 = vector.broadcast %cst_19 : f32 to vector<2x32xf32>
    %23 = arith.addf %22, %21 : vector<2x32xf32>
    %24 = arith.divf %22, %23 : vector<2x32xf32>
    %25 = vector.extract_strided_slice %17 {offsets = [0, 32], sizes = [2, 32], strides = [1, 1]} : vector<2x128xf32> to vector<2x32xf32>
    %26 = arith.negf %25 : vector<2x32xf32>
    %27 = math.exp %26 : vector<2x32xf32>
    %cst_20 = arith.constant 1.000000e+00 : f32
    %28 = vector.broadcast %cst_20 : f32 to vector<2x32xf32>
    %29 = arith.addf %28, %27 : vector<2x32xf32>
    %30 = arith.divf %28, %29 : vector<2x32xf32>
    %31 = vector.extract_strided_slice %17 {offsets = [0, 64], sizes = [2, 32], strides = [1, 1]} : vector<2x128xf32> to vector<2x32xf32>
    %32 = math.tanh %31 : vector<2x32xf32>
    %33 = vector.extract_strided_slice %17 {offsets = [0, 96], sizes = [2, 32], strides = [1, 1]} : vector<2x128xf32> to vector<2x32xf32>
    %34 = arith.negf %33 : vector<2x32xf32>
    %35 = math.exp %34 : vector<2x32xf32>
    %cst_21 = arith.constant 1.000000e+00 : f32
    %36 = vector.broadcast %cst_21 : f32 to vector<2x32xf32>
    %37 = arith.addf %36, %35 : vector<2x32xf32>
    %38 = arith.divf %36, %37 : vector<2x32xf32>
    %39 = arith.mulf %30, %18 : vector<2x32xf32>
    %40 = arith.mulf %24, %32 : vector<2x32xf32>
    %41 = arith.addf %39, %40 : vector<2x32xf32>
    %42 = math.tanh %41 : vector<2x32xf32>
    %43 = arith.mulf %38, %42 : vector<2x32xf32>
    %c0_22 = arith.constant 0 : index
    %c0_23 = arith.constant 0 : index
    %44 = vector.load %arg17[%c0_22, %c0_23] : memref<2x32xf32, #tpu.memory_space<vmem>>, vector<2x32xf32>
    tpu.vector_store %arg17[%c0_22, %c0_23], %43 {strides = array<i32>} : memref<2x32xf32, #tpu.memory_space<vmem>>, vector<2x32xf32>,
    %c0_24 = arith.constant 0 : index
    %c0_25 = arith.constant 0 : index
    %45 = vector.load %arg18[%c0_24, %c0_25] : memref<2x32xf32, #tpu.memory_space<vmem>>, vector<2x32xf32>
    tpu.vector_store %arg18[%c0_24, %c0_25], %41 {strides = array<i32>} : memref<2x32xf32, #tpu.memory_space<vmem>>, vector<2x32xf32>,
    %46 = vector.extract_strided_slice %43 {offsets = [0, 0], sizes = [1, 32], strides = [1, 1]} : vector<2x32xf32> to vector<1x32xf32>
    %c0_26 = arith.constant 0 : index
    %c0_27 = arith.constant 0 : index
    %c0_28 = arith.constant 0 : index
    %47 = vector.load %arg5[%c0_26, %c0_27, %c0_28] : memref<2x32x128xf32, #tpu.memory_space<vmem>>, vector<1x32x128xf32>
    %48 = vector.shape_cast %47 : vector<1x32x128xf32> to vector<32x128xf32>
    %cst_29 = arith.constant dense<0.000000e+00> : vector<1x128xf32>
    %49 = tpu.matmul %46, %48, %cst_29 {dimension_numbers = #tpu.dot_dimension_numbers<[1], [0], [0], [1], [0, 0, 1, 1], [], []>} : vector<1x32xf32>, vector<32x128xf32>, vector<1x128xf32> -> vector<1x128xf32>
    %cst_30 = arith.constant dense<0xFF800000> : vector<1xf32>
    %50 = vector.multi_reduction <maximumf>, %49, %cst_30 [1] : vector<1x128xf32> to vector<1xf32>
    %51 = vector.shape_cast %50 : vector<1xf32> to vector<1x1xf32>
    %52 = vector.broadcast %51 : vector<1x1xf32> to vector<1x128xf32>
    %53 = arith.subf %49, %52 : vector<1x128xf32>
    %54 = math.exp %53 : vector<1x128xf32>
    %cst_31 = arith.constant dense<0.000000e+00> : vector<1xf32>
    %55 = vector.multi_reduction <add>, %54, %cst_31 [1] : vector<1x128xf32> to vector<1xf32>
    %56 = vector.shape_cast %55 : vector<1xf32> to vector<1x1xf32>
    %57 = tpu.reciprocal %56 {approx = true} : vector<1x1xf32> -> vector<1x1xf32>
    %58 = vector.broadcast %57 : vector<1x1xf32> to vector<1x128xf32>
    %59 = arith.mulf %54, %58 : vector<1x128xf32>
    %c0_32 = arith.constant 0 : index
    %c0_33 = arith.constant 0 : index
    %c0_34 = arith.constant 0 : index
    %60 = vector.load %arg6[%c0_32, %c0_33, %c0_34] : memref<2x128x64xf32, #tpu.memory_space<vmem>>, vector<1x128x64xf32>
    %61 = vector.shape_cast %60 : vector<1x128x64xf32> to vector<128x64xf32>
    %cst_35 = arith.constant dense<0.000000e+00> : vector<1x64xf32>
    %62 = tpu.matmul %59, %61, %cst_35 {dimension_numbers = #tpu.dot_dimension_numbers<[1], [0], [0], [1], [0, 0, 1, 1], [], []>} : vector<1x128xf32>, vector<128x64xf32>, vector<1x64xf32> -> vector<1x64xf32>
    %63 = vector.extract_strided_slice %43 {offsets = [1, 0], sizes = [1, 32], strides = [1, 1]} : vector<2x32xf32> to vector<1x32xf32>
    %c1 = arith.constant 1 : index
    %c0_36 = arith.constant 0 : index
    %c0_37 = arith.constant 0 : index
    %64 = vector.load %arg5[%c1, %c0_36, %c0_37] : memref<2x32x128xf32, #tpu.memory_space<vmem>>, vector<1x32x128xf32>
    %65 = vector.shape_cast %64 : vector<1x32x128xf32> to vector<32x128xf32>
    %cst_38 = arith.constant dense<0.000000e+00> : vector<1x128xf32>
    %66 = tpu.matmul %63, %65, %cst_38 {dimension_numbers = #tpu.dot_dimension_numbers<[1], [0], [0], [1], [0, 0, 1, 1], [], []>} : vector<1x32xf32>, vector<32x128xf32>, vector<1x128xf32> -> vector<1x128xf32>
    %cst_39 = arith.constant dense<0xFF800000> : vector<1xf32>
    %67 = vector.multi_reduction <maximumf>, %66, %cst_39 [1] : vector<1x128xf32> to vector<1xf32>
    %68 = vector.shape_cast %67 : vector<1xf32> to vector<1x1xf32>
    %69 = vector.broadcast %68 : vector<1x1xf32> to vector<1x128xf32>
    %70 = arith.subf %66, %69 : vector<1x128xf32>
    %71 = math.exp %70 : vector<1x128xf32>
    %cst_40 = arith.constant dense<0.000000e+00> : vector<1xf32>
    %72 = vector.multi_reduction <add>, %71, %cst_40 [1] : vector<1x128xf32> to vector<1xf32>
    %73 = vector.shape_cast %72 : vector<1xf32> to vector<1x1xf32>
    %74 = tpu.reciprocal %73 {approx = true} : vector<1x1xf32> -> vector<1x1xf32>
    %75 = vector.broadcast %74 : vector<1x1xf32> to vector<1x128xf32>
    %76 = arith.mulf %71, %75 : vector<1x128xf32>
    %c1_41 = arith.constant 1 : index
    %c0_42 = arith.constant 0 : index
    %c0_43 = arith.constant 0 : index
    %77 = vector.load %arg6[%c1_41, %c0_42, %c0_43] : memref<2x128x64xf32, #tpu.memory_space<vmem>>, vector<1x128x64xf32>
    %78 = vector.shape_cast %77 : vector<1x128x64xf32> to vector<128x64xf32>
    %cst_44 = arith.constant dense<0.000000e+00> : vector<1x64xf32>
    %79 = tpu.matmul %76, %78, %cst_44 {dimension_numbers = #tpu.dot_dimension_numbers<[1], [0], [0], [1], [0, 0, 1, 1], [], []>} : vector<1x128xf32>, vector<128x64xf32>, vector<1x64xf32> -> vector<1x64xf32>
    %80 = tpu.concatenate %62, %79 in 0 : vector<1x64xf32>, vector<1x64xf32> -> vector<2x64xf32>
    %c0_45 = arith.constant 0 : index
    %c0_46 = arith.constant 0 : index
    %81 = vector.load %arg11[%c0_45, %c0_46] : memref<32x32xf32, #tpu.memory_space<vmem>>, vector<32x32xf32>
    %cst_47 = arith.constant dense<0.000000e+00> : vector<2x32xf32>
    %82 = tpu.matmul %43, %81, %cst_47 {dimension_numbers = #tpu.dot_dimension_numbers<[1], [0], [0], [1], [0, 0, 1, 1], [], []>} : vector<2x32xf32>, vector<32x32xf32>, vector<2x32xf32> -> vector<2x32xf32>
    %c0_48 = arith.constant 0 : index
    %c0_49 = arith.constant 0 : index
    %83 = vector.load %arg12[%c0_48, %c0_49] : memref<64x32xf32, #tpu.memory_space<vmem>>, vector<64x32xf32>
    %cst_50 = arith.constant dense<0.000000e+00> : vector<2x32xf32>
    %84 = tpu.matmul %80, %83, %cst_50 {dimension_numbers = #tpu.dot_dimension_numbers<[1], [0], [0], [1], [0, 0, 1, 1], [], []>} : vector<2x64xf32>, vector<64x32xf32>, vector<2x32xf32> -> vector<2x32xf32>
    %85 = arith.addf %82, %84 : vector<2x32xf32>
    %c0_51 = arith.constant 0 : index
    %c0_52 = arith.constant 0 : index
    %86 = vector.load %arg13[%c0_51, %c0_52] : memref<1x32xf32, #tpu.memory_space<vmem>>, vector<1x32xf32>
    %87 = vector.broadcast %86 : vector<1x32xf32> to vector<2x32xf32>
    %88 = arith.addf %85, %87 : vector<2x32xf32>
    %89 = math.tanh %88 : vector<2x32xf32>
    %c0_53 = arith.constant 0 : index
    %c0_54 = arith.constant 0 : index
    %90 = vector.load %arg19[%c0_53, %c0_54] : memref<2x32xf32, #tpu.memory_space<vmem>>, vector<2x32xf32>
    tpu.vector_store %arg19[%c0_53, %c0_54], %89 {strides = array<i32>} : memref<2x32xf32, #tpu.memory_space<vmem>>, vector<2x32xf32>,
    %c0_55 = arith.constant 0 : index
    %c0_56 = arith.constant 0 : index
    %91 = vector.load %arg14[%c0_55, %c0_56] : memref<32x128xf32, #tpu.memory_space<vmem>>, vector<32x128xf32>
    %cst_57 = arith.constant dense<0.000000e+00> : vector<2x128xf32>
    %92 = tpu.matmul %89, %91, %cst_57 {dimension_numbers = #tpu.dot_dimension_numbers<[1], [0], [0], [1], [0, 0, 1, 1], [], []>} : vector<2x32xf32>, vector<32x128xf32>, vector<2x128xf32> -> vector<2x128xf32>
    %c0_58 = arith.constant 0 : index
    %c0_59 = arith.constant 0 : index
    %93 = vector.load %arg15[%c0_58, %c0_59] : memref<1x128xf32, #tpu.memory_space<vmem>>, vector<1x128xf32>
    %94 = vector.broadcast %93 : vector<1x128xf32> to vector<2x128xf32>
    %95 = arith.addf %92, %94 : vector<2x128xf32>
    %cst_60 = arith.constant dense<0xFF800000> : vector<2xf32>
    %96 = vector.multi_reduction <maximumf>, %95, %cst_60 [1] : vector<2x128xf32> to vector<2xf32>
    %97 = vector.shape_cast %96 : vector<2xf32> to vector<2x1xf32>
    %98 = vector.broadcast %97 : vector<2x1xf32> to vector<2x128xf32>
    %99 = arith.subf %95, %98 : vector<2x128xf32>
    %100 = math.exp %99 : vector<2x128xf32>
    %cst_61 = arith.constant dense<0.000000e+00> : vector<2xf32>
    %101 = vector.multi_reduction <add>, %100, %cst_61 [1] : vector<2x128xf32> to vector<2xf32>
    %102 = vector.shape_cast %101 : vector<2xf32> to vector<2x1xf32>
    %103 = math.log %102 : vector<2x1xf32>
    %104 = vector.broadcast %103 : vector<2x1xf32> to vector<2x128xf32>
    %105 = arith.subf %99, %104 : vector<2x128xf32>
    %c0_62 = arith.constant 0 : index
    %c0_63 = arith.constant 0 : index
    %c0_64 = arith.constant 0 : index
    %106 = vector.load %arg16[%c0_62, %c0_63, %c0_64] : memref<1x2x128xf32, #tpu.memory_space<vmem>>, vector<1x2x128xf32>
    %107 = vector.shape_cast %106 : vector<1x2x128xf32> to vector<2x128xf32>
    %108 = vector.shape_cast %105 : vector<2x128xf32> to vector<1x2x128xf32>
    tpu.vector_store %arg16[%c0_62, %c0_63, %c0_64], %108 {strides = array<i32>} : memref<1x2x128xf32, #tpu.memory_space<vmem>>, vector<1x2x128xf32>,
    return
  }
  func.func @transform_0(%arg0: i32) -> (i32, i32, i32) {
    %c0_i32 = arith.constant 0 : i32
    %c0_i32_0 = arith.constant 0 : i32
    %c0_i32_1 = arith.constant 0 : i32
    return %arg0, %c0_i32, %c0_i32_0 : i32, i32, i32
  }
  func.func @transform_1(%arg0: i32) -> (i32, i32) {
    %c0_i32 = arith.constant 0 : i32
    %c0_i32_0 = arith.constant 0 : i32
    %c0_i32_1 = arith.constant 0 : i32
    return %c0_i32, %c0_i32_0 : i32, i32
  }
  func.func @transform_2(%arg0: i32) -> (i32, i32) {
    %c0_i32 = arith.constant 0 : i32
    %c0_i32_0 = arith.constant 0 : i32
    %c0_i32_1 = arith.constant 0 : i32
    return %c0_i32, %c0_i32_0 : i32, i32
  }
  func.func @transform_3(%arg0: i32) -> (i32, i32) {
    %c0_i32 = arith.constant 0 : i32
    %c0_i32_0 = arith.constant 0 : i32
    %c0_i32_1 = arith.constant 0 : i32
    return %c0_i32, %c0_i32_0 : i32, i32
  }
  func.func @transform_4(%arg0: i32) -> (i32, i32, i32) {
    %c0_i32 = arith.constant 0 : i32
    %c0_i32_0 = arith.constant 0 : i32
    %c0_i32_1 = arith.constant 0 : i32
    %c0_i32_2 = arith.constant 0 : i32
    return %c0_i32, %c0_i32_0, %c0_i32_1 : i32, i32, i32
  }
  func.func @transform_5(%arg0: i32) -> (i32, i32, i32) {
    %c0_i32 = arith.constant 0 : i32
    %c0_i32_0 = arith.constant 0 : i32
    %c0_i32_1 = arith.constant 0 : i32
    %c0_i32_2 = arith.constant 0 : i32
    return %c0_i32, %c0_i32_0, %c0_i32_1 : i32, i32, i32
  }
  func.func @transform_6(%arg0: i32) -> (i32, i32) {
    %c0_i32 = arith.constant 0 : i32
    %c0_i32_0 = arith.constant 0 : i32
    %c0_i32_1 = arith.constant 0 : i32
    return %c0_i32, %c0_i32_0 : i32, i32
  }
  func.func @transform_7(%arg0: i32) -> (i32, i32) {
    %c0_i32 = arith.constant 0 : i32
    %c0_i32_0 = arith.constant 0 : i32
    %c0_i32_1 = arith.constant 0 : i32
    return %c0_i32, %c0_i32_0 : i32, i32
  }
  func.func @transform_8(%arg0: i32) -> (i32, i32) {
    %c0_i32 = arith.constant 0 : i32
    %c0_i32_0 = arith.constant 0 : i32
    %c0_i32_1 = arith.constant 0 : i32
    return %c0_i32, %c0_i32_0 : i32, i32
  }
  func.func @transform_9(%arg0: i32) -> (i32, i32) {
    %c0_i32 = arith.constant 0 : i32
    %c0_i32_0 = arith.constant 0 : i32
    %c0_i32_1 = arith.constant 0 : i32
    return %c0_i32, %c0_i32_0 : i32, i32
  }
  func.func @transform_10(%arg0: i32) -> (i32, i32) {
    %c0_i32 = arith.constant 0 : i32
    %c0_i32_0 = arith.constant 0 : i32
    %c0_i32_1 = arith.constant 0 : i32
    return %c0_i32, %c0_i32_0 : i32, i32
  }
  func.func @transform_11(%arg0: i32) -> (i32, i32) {
    %c0_i32 = arith.constant 0 : i32
    %c0_i32_0 = arith.constant 0 : i32
    %c0_i32_1 = arith.constant 0 : i32
    return %c0_i32, %c0_i32_0 : i32, i32
  }
  func.func @transform_12(%arg0: i32) -> (i32, i32) {
    %c0_i32 = arith.constant 0 : i32
    %c0_i32_0 = arith.constant 0 : i32
    %c0_i32_1 = arith.constant 0 : i32
    return %c0_i32, %c0_i32_0 : i32, i32
  }
  func.func @transform_13(%arg0: i32) -> (i32, i32) {
    %c0_i32 = arith.constant 0 : i32
    %c0_i32_0 = arith.constant 0 : i32
    %c0_i32_1 = arith.constant 0 : i32
    return %c0_i32, %c0_i32_0 : i32, i32
  }
  func.func @transform_14(%arg0: i32) -> (i32, i32) {
    %c0_i32 = arith.constant 0 : i32
    %c0_i32_0 = arith.constant 0 : i32
    %c0_i32_1 = arith.constant 0 : i32
    return %c0_i32, %c0_i32_0 : i32, i32
  }
  func.func @transform_15(%arg0: i32) -> (i32, i32, i32) {
    %c0_i32 = arith.constant 0 : i32
    %c0_i32_0 = arith.constant 0 : i32
    %c0_i32_1 = arith.constant 0 : i32
    return %arg0, %c0_i32, %c0_i32_0 : i32, i32, i32
  }
}

</mosaic_0001>

<llo_original>
// kernel: forward.6
$region0: #{forward.6}
  #allocation0 [shape = 'u32[]', space=smem, size = 0x4, offset = 0x4, fixed_abs, tag = 'smem constant byte address 0x4 - core index']
  #allocation1 [shape = 'u32[144,128]{1,0:T(1,128)}', space=vmem, size = 0x12000, scoped, tag = 'internal scratch']
  %s0 = inlined_call_operand.vmem [shape: f32[2,10,18], index: 0, kind: input, shape index: {}]
  %s1 = inlined_call_operand.vmem [shape: f32[9,8], index: 1, kind: input, shape index: {}]
  %s2 = inlined_call_operand.vmem [shape: f32[8], index: 2, kind: input, shape index: {}]
  %s3 = inlined_call_operand.vmem [shape: f32[2,8,8,16], index: 3, kind: output, shape index: {}]
  %s4 = sld [smem:[#allocation0]]
  $region53: #{forward.6} parent=0
    _
  %s6 = ssub.s32 1, %s4
  %s7 = scalar_select 0, %s6, %s4
  $region1: #{forward.6} parent=0
    #allocation2 [shape = 'u8[8192]{0}', space=smem, size = 0x2000, scoped, tag = 'input window, operand 1, single buffered']
    #allocation3 [shape = 's32[2]{0}', space=sflag, size = 0x8, scoped, tag = 'scoped memory for forward.6']
    #allocation4 [shape = 'u8[512]{0}', space=smem, size = 0x200, scoped, tag = 'input window, operand 2, single buffered']
    #allocation5 [shape = 's32[1]{0}', space=sflag, size = 0x4, scoped, tag = 'scoped memory for forward.6']
    %8 = vsyncpa [#allocation3], 0
    %9 = vsyncpa [#allocation5], 0
    loop: start=0, step=1, limit=4
    $region2: #{forward.6} parent=1 // loop_pre_header
      _
    $region3: #{forward.6} parent=1 // loop_header
      %s11 = sphi 0, %s15
      %p12 = scmp.ge.s32.totalorder %s11, 4
      %s21 = sphi 0, %s23
      %s24 = sphi 0, %s21
      %s25 = sphi 0, %s24
      %s41 = sphi 0, %s25
      %s45 = sphi 0, %s45
      %s47 = sphi 0, %s45
      %s48 = sphi 0, %s47
      %s62 = sphi 0, %s48
      %s66 = sphi 0, %s66
      %s68 = sphi 0, %s66
      %s69 = sphi 0, %s68
      %s83 = sphi 0, %s69
      %s89 = sphi 0, %s91
      %s92 = sphi 0, %s89
      %s93 = sphi 0, %s92
      %s109 = sphi 0, %s93
    $region4: #{forward.6} parent=1 // loop_header_branch
      %14 = sbr.rel (%p12) target = $region8
    $region5: #{forward.6} parent=1 // loop_body
      %s16 = ssub.s32 %s11, 1
      %s17 = ssub.s32 %s11, 2
      %s18 = sadd.s32 %s11, 1
      %s19 = ssub.s32 %s11, %s18
      %p20 = scmp.eq.s32.totalorder %s19, 0
      %s22 = sadd.s32 %s21, 1
      %s23 = scalar_select %p20, %s21, %s22
      %p26 = pneg %p20
      %p27 = scmp.eq.s32.totalorder %s11, 1
      %p28 = por %p26, %p27
      %p29 = scmp.ne.s32.totalorder %s21, %s24
      %p30 = scmp.eq.s32.totalorder %s11, 0
      %p31 = por %p29, %p30
      %p32 = scmp.ne.s32.totalorder %s21, %s24
      %p33 = scmp.eq.s32.totalorder %s16, 1
      %p34 = por %p32, %p33
      %p35 = scmp.ne.s32.totalorder %s24, %s25
      %p36 = scmp.eq.s32.totalorder %s16, 0
      %p37 = por %p35, %p36
      %p38 = scmp.ne.s32.totalorder %s24, %s25
      %p39 = scmp.eq.s32.totalorder %s17, 1
      %p40 = por %p38, %p39
      %p42 = scmp.ne.s32.totalorder %s25, %s41
      %p43 = scmp.eq.s32.totalorder %s17, 0
      %p44 = por %p42, %p43
      %s46 = sadd.s32 %s45, 1
      %p49 = scmp.eq.s32.totalorder %s11, 1
      %p50 = scmp.ne.s32.totalorder %s45, %s47
      %p51 = scmp.eq.s32.totalorder %s11, 0
      %p52 = por %p50, %p51
      %p53 = scmp.ne.s32.totalorder %s45, %s47
      %p54 = scmp.eq.s32.totalorder %s16, 1
      %p55 = por %p53, %p54
      %p56 = scmp.ne.s32.totalorder %s47, %s48
      %p57 = scmp.eq.s32.totalorder %s16, 0
      %p58 = por %p56, %p57
      %p59 = scmp.ne.s32.totalorder %s47, %s48
      %p60 = scmp.eq.s32.totalorder %s17, 1
      %p61 = por %p59, %p60
      %p63 = scmp.ne.s32.totalorder %s48, %s62
      %p64 = scmp.eq.s32.totalorder %s17, 0
      %p65 = por %p63, %p64
      %s67 = sadd.s32 %s66, 1
      %p70 = scmp.eq.s32.totalorder %s11, 1
      %p71 = scmp.ne.s32.totalorder %s66, %s68
      %p72 = scmp.eq.s32.totalorder %s11, 0
      %p73 = por %p71, %p72
      %p74 = scmp.ne.s32.totalorder %s66, %s68
      %p75 = scmp.eq.s32.totalorder %s16, 1
      %p76 = por %p74, %p75
      %p77 = scmp.ne.s32.totalorder %s68, %s69
      %p78 = scmp.eq.s32.totalorder %s16, 0
      %p79 = por %p77, %p78
      %p80 = scmp.ne.s32.totalorder %s68, %s69
      %p81 = scmp.eq.s32.totalorder %s17, 1
      %p82 = por %p80, %p81
      %p84 = scmp.ne.s32.totalorder %s69, %s83
      %p85 = scmp.eq.s32.totalorder %s17, 0
      %p86 = por %p84, %p85
      %s87 = ssub.s32 %s11, %s18
      %p88 = scmp.eq.s32.totalorder %s87, 0
      %s90 = sadd.s32 %s89, 1
      %s91 = scalar_select %p88, %s89, %s90
      %p94 = pneg %p88
      %p95 = scmp.eq.s32.totalorder %s11, 1
      %p96 = por %p94, %p95
      %p97 = scmp.ne.s32.totalorder %s89, %s92
      %p98 = scmp.eq.s32.totalorder %s11, 0
      %p99 = por %p97, %p98
      %p100 = scmp.ne.s32.totalorder %s89, %s92
      %p101 = scmp.eq.s32.totalorder %s16, 1
      %p102 = por %p100, %p101
      %p103 = scmp.ne.s32.totalorder %s92, %s93
      %p104 = scmp.eq.s32.totalorder %s16, 0
      %p105 = por %p103, %p104
      %p106 = scmp.ne.s32.totalorder %s92, %s93
      %p107 = scmp.eq.s32.totalorder %s17, 1
      %p108 = por %p106, %p107
      %p110 = scmp.ne.s32.totalorder %s93, %s109
      %p111 = scmp.eq.s32.totalorder %s17, 0
      %p112 = por %p110, %p111
      %p113 = scmp.le.s32.totalorder 1, %s11
      %p114 = scmp.lt.s32.totalorder %s11, 3
      %p115 = pnand %p113, %p114
      %p116 = pneg %p115
      // Predicated region
      $region9: #{forward.6} parent=5 // pred_check
        _
      $region10: #{forward.6} parent=5 // pred_check_branch
        %118 = sbr.rel (%p115) target = $region12
      $region11: #{forward.6} parent=5 // pred_region
        %s119 = ssub.s32 %s11, 1
        // Predicated region
        $region13: #{forward.6} parent=11 // pred_check
          %p120 = pneg %p58
        $region14: #{forward.6} parent=11 // pred_check_branch
          %122 = sbr.rel (%p120) target = $region16
        $region15: #{forward.6} parent=11 // pred_region
          %s124 = ssub.s32 256, 256
          %125 = vsyncadd [#allocation3], %s124
          %s126 = sshll.u32 %s1, 4
          %s127 = int_to_ptr.vmem [resolvable:$true] %s126
          %132 = dma.vmem_to_smem %s127, 256, [#allocation2], [#allocation3], 128, 128, 8
        $region16: #{forward.6} parent=11 // pred_fallthru
          _
        // Predicated region
        $region17: #{forward.6} parent=11 // pred_check
          %p133 = pneg %p79
        $region18: #{forward.6} parent=11 // pred_check_branch
          %135 = sbr.rel (%p133) target = $region20
        $region19: #{forward.6} parent=11 // pred_region
          %s137 = ssub.s32 16, 16
          %138 = vsyncadd [#allocation5], %s137
          %s140 = sshll.u32 %s2, 4
          %s141 = int_to_ptr.vmem [resolvable:$true] %s140
          %143 = dma.vmem_to_smem %s141, 16, [#allocation4], [#allocation5]
        $region20: #{forward.6} parent=11 // pred_fallthru
          _
      $region12: #{forward.6} parent=5 // pred_fallthru
        _
      %p144 = scmp.lt.s32.totalorder %s11, 2
      // Predicated region
      $region21: #{forward.6} parent=5 // pred_check
        %p145 = pneg %p144
      $region22: #{forward.6} parent=5 // pred_check_branch
        %147 = sbr.rel (%p145) target = $region24
      $region23: #{forward.6} parent=5 // pred_region
        // Predicated region
        $region25: #{forward.6} parent=23 // pred_check
          %p148 = pneg %p31
        $region26: #{forward.6} parent=23 // pred_check_branch
          %150 = sbr.rel (%p148) target = $region28
        $region27: #{forward.6} parent=23 // pred_region
          %p151 = scmp.lt.s32.totalorder %s11, 1
          %s152 = scalar_select %p151, %s11, 1
          %s153 = smul.addr %s152, 2
          %s154 = smul.addr %s153, 8
          %s155 = scalar_lea.vmem %s0, %s154
        $region28: #{forward.6} parent=23 // pred_fallthru
          _
      $region24: #{forward.6} parent=5 // pred_fallthru
        _
      %p156 = scmp.le.s32.totalorder 1, %s11
      %p157 = scmp.lt.s32.totalorder %s11, 3
      %p158 = pnand %p156, %p157
      %p159 = pneg %p158
      // Predicated region
      $region29: #{forward.6} parent=5 // pred_check
        _
      $region30: #{forward.6} parent=5 // pred_check_branch
        %161 = sbr.rel (%p158) target = $region32
      $region31: #{forward.6} parent=5 // pred_region
        %s162 = ssub.s32 %s11, 1
        // Predicated region
        $region33: #{forward.6} parent=31 // pred_check
          %p163 = pneg %p58
        $region34: #{forward.6} parent=31 // pred_check_branch
          %165 = sbr.rel (%p163) target = $region36
        $region35: #{forward.6} parent=31 // pred_region
          %166 = dma.done [#allocation3], 256
        $region36: #{forward.6} parent=31 // pred_fallthru
          _
        // Predicated region
        $region37: #{forward.6} parent=31 // pred_check
          %p167 = pneg %p79
        $region38: #{forward.6} parent=31 // pred_check_branch
          %169 = sbr.rel (%p167) target = $region40
        $region39: #{forward.6} parent=31 // pred_region
          %170 = dma.done [#allocation5], 16
        $region40: #{forward.6} parent=31 // pred_fallthru
          _
        %171 = sfence
        %p172 = scmp.lt.s32.totalorder %s16, 1
        %s173 = scalar_select %p172, %s16, 1
        %s174 = smul.addr %s173, 2
        %s175 = smul.addr %s174, 8
        %s176 = scalar_lea.vmem %s0, %s175
        %p177 = pneg %p37
        %p178 = pneg %p34
        %p179 = pneg %p58
        %p180 = pneg %p55
        %p181 = pneg %p79
        %p182 = pneg %p76
        %p183 = pneg %p105
        %p184 = pneg %p102
        %p185 = scmp.lt.s32.totalorder %s16, 1
        %s186 = scalar_select %p185, %s16, 1
        %s187 = smul.addr %s186, 8
        %s188 = smul.addr %s187, 8
        %s189 = scalar_lea.vmem %s3, %s188
        %p190 = scmp.lt.s32.totalorder %s16, 1
        %s191 = scalar_select %p190, %s16, 1
        %s192 = smul.addr %s191, 2
        %s193 = smul.addr %s192, 8
        %s194 = scalar_lea.vmem %s0, %s193
        %p195 = scmp.lt.s32.totalorder %s16, 1
        %s196 = scalar_select %p195, %s16, 1
        %s197 = smul.addr %s196, 8
        %s198 = smul.addr %s197, 8
        %s199 = scalar_lea.vmem %s3, %s198
        %v200 = vld [vmem:[%s194] sm:$0xff]
        %v201 = vld [vmem:[%s194 + $0x8] sm:$0x3]
        %s202 = sld [smem:[#allocation2]]
        %v203 = vstv %s202
        %v204 = vmul.f32 %v200, %v203
        %s205 = sld [smem:[#allocation2 + $0x80]]
        %v206 = vstv %s205
        %v207 = vmul.f32 %v200, %v206
        %209 = vrot.lane.b32.xlu0 %v207, 127
        %v210 = vpop.permute.xlu0 %209
        %v212 = vadd.f32 %v204, %v210
        %s213 = sld [smem:[#allocation2 + $0x100]]
        %v214 = vstv %s213
        %v215 = vmul.f32 %v200, %v214
        %217 = vrot.lane.b32.xlu0 %v215, 126
        %v218 = vpop.permute.xlu0 %217
        %v220 = vadd.f32 %v212, %v218
        %s221 = sld [smem:[#allocation2 + $0x180]]
        %v222 = vstv %s221
        %v223 = vmul.f32 %v200, %v222
        %v224 = vmul.f32 %v201, %v222
        %vm227 = vcmask 1046528
        %v228 = vrot.slane %v223, 1
        %v229 = vrot.slane %v224, 1
        %v230 = vsel %vm227, %v228, %v229
        %v232 = vadd.f32 %v220, %v230
        %s233 = sld [smem:[#allocation2 + $0x200]]
        %v234 = vstv %s233
        %v235 = vmul.f32 %v200, %v234
        %v236 = vmul.f32 %v201, %v234
        %v239 = vrot.slane %v235, 1
        %v240 = vrot.slane %v236, 1
        %v241 = vsel %vm227, %v239, %v240
        %242 = vrot.lane.b32.xlu0 %v241, 127
        %v243 = vpop.permute.xlu0 %242
        %v245 = vadd.f32 %v232, %v243
        %s246 = sld [smem:[#allocation2 + $0x280]]
        %v247 = vstv %s246
        %v248 = vmul.f32 %v200, %v247
        %v249 = vmul.f32 %v201, %v247
        %v252 = vrot.slane %v248, 1
        %v253 = vrot.slane %v249, 1
        %v254 = vsel %vm227, %v252, %v253
        %255 = vrot.lane.b32.xlu0 %v254, 126
        %v256 = vpop.permute.xlu0 %255
        %v258 = vadd.f32 %v245, %v256
        %s259 = sld [smem:[#allocation2 + $0x300]]
        %v260 = vstv %s259
        %v261 = vmul.f32 %v200, %v260
        %v262 = vmul.f32 %v201, %v260
        %vm265 = vcmask 1045504
        %v266 = vrot.slane %v261, 2
        %v267 = vrot.slane %v262, 2
        %v268 = vsel %vm265, %v266, %v267
        %v270 = vadd.f32 %v258, %v268
        %s271 = sld [smem:[#allocation2 + $0x380]]
        %v272 = vstv %s271
        %v273 = vmul.f32 %v200, %v272
        %v274 = vmul.f32 %v201, %v272
        %v277 = vrot.slane %v273, 2
        %v278 = vrot.slane %v274, 2
        %v279 = vsel %vm265, %v277, %v278
        %280 = vrot.lane.b32.xlu0 %v279, 127
        %v281 = vpop.permute.xlu0 %280
        %v283 = vadd.f32 %v270, %v281
        %s284 = sld [smem:[#allocation2 + $0x400]]
        %v285 = vstv %s284
        %v286 = vmul.f32 %v200, %v285
        %v287 = vmul.f32 %v201, %v285
        %v290 = vrot.slane %v286, 2
        %v291 = vrot.slane %v287, 2
        %v292 = vsel %vm265, %v290, %v291
        %293 = vrot.lane.b32.xlu0 %v292, 126
        %v294 = vpop.permute.xlu0 %293
        %v296 = vadd.f32 %v283, %v294
        %s297 = sld [smem:[#allocation4]]
        %v298 = vstv %s297
        %v299 = vadd.f32 %v296, %v298
        %v300 = vmax.f32 %v299, 0.0
        %vm301 = vcmask 130048
        %302 = vst.msk [vmem:[%s199] sm:$0xff] %vm301, %v300
        %s303 = sld [smem:[#allocation2 + $0x1]]
        %v304 = vstv %s303
        %v305 = vmul.f32 %v200, %v304
        %s306 = sld [smem:[#allocation2 + $0x81]]
        %v307 = vstv %s306
        %v308 = vmul.f32 %v200, %v307
        %310 = vrot.lane.b32.xlu0 %v308, 127
        %v311 = vpop.permute.xlu0 %310
        %v313 = vadd.f32 %v305, %v311
        %s314 = sld [smem:[#allocation2 + $0x101]]
        %v315 = vstv %s314
        %v316 = vmul.f32 %v200, %v315
        %318 = vrot.lane.b32.xlu0 %v316, 126
        %v319 = vpop.permute.xlu0 %318
        %v321 = vadd.f32 %v313, %v319
        %s322 = sld [smem:[#allocation2 + $0x181]]
        %v323 = vstv %s322
        %v324 = vmul.f32 %v200, %v323
        %v325 = vmul.f32 %v201, %v323
        %v328 = vrot.slane %v324, 1
        %v329 = vrot.slane %v325, 1
        %v330 = vsel %vm227, %v328, %v329
        %v332 = vadd.f32 %v321, %v330
        %s333 = sld [smem:[#allocation2 + $0x201]]
        %v334 = vstv %s333
        %v335 = vmul.f32 %v200, %v334
        %v336 = vmul.f32 %v201, %v334
        %v339 = vrot.slane %v335, 1
        %v340 = vrot.slane %v336, 1
        %v341 = vsel %vm227, %v339, %v340
        %342 = vrot.lane.b32.xlu0 %v341, 127
        %v343 = vpop.permute.xlu0 %342
        %v345 = vadd.f32 %v332, %v343
        %s346 = sld [smem:[#allocation2 + $0x281]]
        %v347 = vstv %s346
        %v348 = vmul.f32 %v200, %v347
        %v349 = vmul.f32 %v201, %v347
        %v352 = vrot.slane %v348, 1
        %v353 = vrot.slane %v349, 1
        %v354 = vsel %vm227, %v352, %v353
        %355 = vrot.lane.b32.xlu0 %v354, 126
        %v356 = vpop.permute.xlu0 %355
        %v358 = vadd.f32 %v345, %v356
        %s359 = sld [smem:[#allocation2 + $0x301]]
        %v360 = vstv %s359
        %v361 = vmul.f32 %v200, %v360
        %v362 = vmul.f32 %v201, %v360
        %v365 = vrot.slane %v361, 2
        %v366 = vrot.slane %v362, 2
        %v367 = vsel %vm265, %v365, %v366
        %v369 = vadd.f32 %v358, %v367
        %s370 = sld [smem:[#allocation2 + $0x381]]
        %v371 = vstv %s370
        %v372 = vmul.f32 %v200, %v371
        %v373 = vmul.f32 %v201, %v371
        %v376 = vrot.slane %v372, 2
        %v377 = vrot.slane %v373, 2
        %v378 = vsel %vm265, %v376, %v377
        %379 = vrot.lane.b32.xlu0 %v378, 127
        %v380 = vpop.permute.xlu0 %379
        %v382 = vadd.f32 %v369, %v380
        %s383 = sld [smem:[#allocation2 + $0x401]]
        %v384 = vstv %s383
        %v385 = vmul.f32 %v200, %v384
        %v386 = vmul.f32 %v201, %v384
        %v389 = vrot.slane %v385, 2
        %v390 = vrot.slane %v386, 2
        %v391 = vsel %vm265, %v389, %v390
        %392 = vrot.lane.b32.xlu0 %v391, 126
        %v393 = vpop.permute.xlu0 %392
        %v395 = vadd.f32 %v382, %v393
        %s396 = sld [smem:[#allocation4 + $0x1]]
        %v397 = vstv %s396
        %v398 = vadd.f32 %v395, %v397
        %v399 = vmax.f32 %v398, 0.0
        %s400 = scalar_lea.vmem %s199, 8
        %401 = vst.msk [vmem:[%s400] sm:$0xff] %vm301, %v399
        %s402 = sld [smem:[#allocation2 + $0x2]]
        %v403 = vstv %s402
        %v404 = vmul.f32 %v200, %v403
        %s405 = sld [smem:[#allocation2 + $0x82]]
        %v406 = vstv %s405
        %v407 = vmul.f32 %v200, %v406
        %409 = vrot.lane.b32.xlu0 %v407, 127
        %v410 = vpop.permute.xlu0 %409
        %v412 = vadd.f32 %v404, %v410
        %s413 = sld [smem:[#allocation2 + $0x102]]
        %v414 = vstv %s413
        %v415 = vmul.f32 %v200, %v414
        %417 = vrot.lane.b32.xlu0 %v415, 126
        %v418 = vpop.permute.xlu0 %417
        %v420 = vadd.f32 %v412, %v418
        %s421 = sld [smem:[#allocation2 + $0x182]]
        %v422 = vstv %s421
        %v423 = vmul.f32 %v200, %v422
        %v424 = vmul.f32 %v201, %v422
        %v427 = vrot.slane %v423, 1
        %v428 = vrot.slane %v424, 1
        %v429 = vsel %vm227, %v427, %v428
        %v431 = vadd.f32 %v420, %v429
        %s432 = sld [smem:[#allocation2 + $0x202]]
        %v433 = vstv %s432
        %v434 = vmul.f32 %v200, %v433
        %v435 = vmul.f32 %v201, %v433
        %v438 = vrot.slane %v434, 1
        %v439 = vrot.slane %v435, 1
        %v440 = vsel %vm227, %v438, %v439
        %441 = vrot.lane.b32.xlu0 %v440, 127
        %v442 = vpop.permute.xlu0 %441
        %v444 = vadd.f32 %v431, %v442
        %s445 = sld [smem:[#allocation2 + $0x282]]
        %v446 = vstv %s445
        %v447 = vmul.f32 %v200, %v446
        %v448 = vmul.f32 %v201, %v446
        %v451 = vrot.slane %v447, 1
        %v452 = vrot.slane %v448, 1
        %v453 = vsel %vm227, %v451, %v452
        %454 = vrot.lane.b32.xlu0 %v453, 126
        %v455 = vpop.permute.xlu0 %454
        %v457 = vadd.f32 %v444, %v455
        %s458 = sld [smem:[#allocation2 + $0x302]]
        %v459 = vstv %s458
        %v460 = vmul.f32 %v200, %v459
        %v461 = vmul.f32 %v201, %v459
        %v464 = vrot.slane %v460, 2
        %v465 = vrot.slane %v461, 2
        %v466 = vsel %vm265, %v464, %v465
        %v468 = vadd.f32 %v457, %v466
        %s469 = sld [smem:[#allocation2 + $0x382]]
        %v470 = vstv %s469
        %v471 = vmul.f32 %v200, %v470
        %v472 = vmul.f32 %v201, %v470
        %v475 = vrot.slane %v471, 2
        %v476 = vrot.slane %v472, 2
        %v477 = vsel %vm265, %v475, %v476
        %478 = vrot.lane.b32.xlu0 %v477, 127
        %v479 = vpop.permute.xlu0 %478
        %v481 = vadd.f32 %v468, %v479
        %s482 = sld [smem:[#allocation2 + $0x402]]
        %v483 = vstv %s482
        %v484 = vmul.f32 %v200, %v483
        %v485 = vmul.f32 %v201, %v483
        %v488 = vrot.slane %v484, 2
        %v489 = vrot.slane %v485, 2
        %v490 = vsel %vm265, %v488, %v489
        %491 = vrot.lane.b32.xlu0 %v490, 126
        %v492 = vpop.permute.xlu0 %491
        %v494 = vadd.f32 %v481, %v492
        %s495 = sld [smem:[#allocation4 + $0x2]]
        %v496 = vstv %s495
        %v497 = vadd.f32 %v494, %v496
        %v498 = vmax.f32 %v497, 0.0
        %s499 = scalar_lea.vmem %s199, 16
        %500 = vst.msk [vmem:[%s499] sm:$0xff] %vm301, %v498
        %s501 = sld [smem:[#allocation2 + $0x3]]
        %v502 = vstv %s501
        %v503 = vmul.f32 %v200, %v502
        %s504 = sld [smem:[#allocation2 + $0x83]]
        %v505 = vstv %s504
        %v506 = vmul.f32 %v200, %v505
        %508 = vrot.lane.b32.xlu0 %v506, 127
        %v509 = vpop.permute.xlu0 %508
        %v511 = vadd.f32 %v503, %v509
        %s512 = sld [smem:[#allocation2 + $0x103]]
        %v513 = vstv %s512
        %v514 = vmul.f32 %v200, %v513
        %516 = vrot.lane.b32.xlu0 %v514, 126
        %v517 = vpop.permute.xlu0 %516
        %v519 = vadd.f32 %v511, %v517
        %s520 = sld [smem:[#allocation2 + $0x183]]
        %v521 = vstv %s520
        %v522 = vmul.f32 %v200, %v521
        %v523 = vmul.f32 %v201, %v521
        %v526 = vrot.slane %v522, 1
        %v527 = vrot.slane %v523, 1
        %v528 = vsel %vm227, %v526, %v527
        %v530 = vadd.f32 %v519, %v528
        %s531 = sld [smem:[#allocation2 + $0x203]]
        %v532 = vstv %s531
        %v533 = vmul.f32 %v200, %v532
        %v534 = vmul.f32 %v201, %v532
        %v537 = vrot.slane %v533, 1
        %v538 = vrot.slane %v534, 1
        %v539 = vsel %vm227, %v537, %v538
        %540 = vrot.lane.b32.xlu0 %v539, 127
        %v541 = vpop.permute.xlu0 %540
        %v543 = vadd.f32 %v530, %v541
        %s544 = sld [smem:[#allocation2 + $0x283]]
        %v545 = vstv %s544
        %v546 = vmul.f32 %v200, %v545
        %v547 = vmul.f32 %v201, %v545
        %v550 = vrot.slane %v546, 1
        %v551 = vrot.slane %v547, 1
        %v552 = vsel %vm227, %v550, %v551
        %553 = vrot.lane.b32.xlu0 %v552, 126
        %v554 = vpop.permute.xlu0 %553
        %v556 = vadd.f32 %v543, %v554
        %s557 = sld [smem:[#allocation2 + $0x303]]
        %v558 = vstv %s557
        %v559 = vmul.f32 %v200, %v558
        %v560 = vmul.f32 %v201, %v558
        %v563 = vrot.slane %v559, 2
        %v564 = vrot.slane %v560, 2
        %v565 = vsel %vm265, %v563, %v564
        %v567 = vadd.f32 %v556, %v565
        %s568 = sld [smem:[#allocation2 + $0x383]]
        %v569 = vstv %s568
        %v570 = vmul.f32 %v200, %v569
        %v571 = vmul.f32 %v201, %v569
        %v574 = vrot.slane %v570, 2
        %v575 = vrot.slane %v571, 2
        %v576 = vsel %vm265, %v574, %v575
        %577 = vrot.lane.b32.xlu0 %v576, 127
        %v578 = vpop.permute.xlu0 %577
        %v580 = vadd.f32 %v567, %v578
        %s581 = sld [smem:[#allocation2 + $0x403]]
        %v582 = vstv %s581
        %v583 = vmul.f32 %v200, %v582
        %v584 = vmul.f32 %v201, %v582
        %v587 = vrot.slane %v583, 2
        %v588 = vrot.slane %v584, 2
        %v589 = vsel %vm265, %v587, %v588
        %590 = vrot.lane.b32.xlu0 %v589, 126
        %v591 = vpop.permute.xlu0 %590
        %v593 = vadd.f32 %v580, %v591
        %s594 = sld [smem:[#allocation4 + $0x3]]
        %v595 = vstv %s594
        %v596 = vadd.f32 %v593, %v595
        %v597 = vmax.f32 %v596, 0.0
        %s598 = scalar_lea.vmem %s199, 24
        %599 = vst.msk [vmem:[%s598] sm:$0xff] %vm301, %v597
        %s600 = sld [smem:[#allocation2 + $0x4]]
        %v601 = vstv %s600
        %v602 = vmul.f32 %v200, %v601
        %s603 = sld [smem:[#allocation2 + $0x84]]
        %v604 = vstv %s603
        %v605 = vmul.f32 %v200, %v604
        %607 = vrot.lane.b32.xlu0 %v605, 127
        %v608 = vpop.permute.xlu0 %607
        %v610 = vadd.f32 %v602, %v608
        %s611 = sld [smem:[#allocation2 + $0x104]]
        %v612 = vstv %s611
        %v613 = vmul.f32 %v200, %v612
        %615 = vrot.lane.b32.xlu0 %v613, 126
        %v616 = vpop.permute.xlu0 %615
        %v618 = vadd.f32 %v610, %v616
        %s619 = sld [smem:[#allocation2 + $0x184]]
        %v620 = vstv %s619
        %v621 = vmul.f32 %v200, %v620
        %v622 = vmul.f32 %v201, %v620
        %v625 = vrot.slane %v621, 1
        %v626 = vrot.slane %v622, 1
        %v627 = vsel %vm227, %v625, %v626
        %v629 = vadd.f32 %v618, %v627
        %s630 = sld [smem:[#allocation2 + $0x204]]
        %v631 = vstv %s630
        %v632 = vmul.f32 %v200, %v631
        %v633 = vmul.f32 %v201, %v631
        %v636 = vrot.slane %v632, 1
        %v637 = vrot.slane %v633, 1
        %v638 = vsel %vm227, %v636, %v637
        %639 = vrot.lane.b32.xlu0 %v638, 127
        %v640 = vpop.permute.xlu0 %639
        %v642 = vadd.f32 %v629, %v640
        %s643 = sld [smem:[#allocation2 + $0x284]]
        %v644 = vstv %s643
        %v645 = vmul.f32 %v200, %v644
        %v646 = vmul.f32 %v201, %v644
        %v649 = vrot.slane %v645, 1
        %v650 = vrot.slane %v646, 1
        %v651 = vsel %vm227, %v649, %v650
        %652 = vrot.lane.b32.xlu0 %v651, 126
        %v653 = vpop.permute.xlu0 %652
        %v655 = vadd.f32 %v642, %v653
        %s656 = sld [smem:[#allocation2 + $0x304]]
        %v657 = vstv %s656
        %v658 = vmul.f32 %v200, %v657
        %v659 = vmul.f32 %v201, %v657
        %v662 = vrot.slane %v658, 2
        %v663 = vrot.slane %v659, 2
        %v664 = vsel %vm265, %v662, %v663
        %v666 = vadd.f32 %v655, %v664
        %s667 = sld [smem:[#allocation2 + $0x384]]
        %v668 = vstv %s667
        %v669 = vmul.f32 %v200, %v668
        %v670 = vmul.f32 %v201, %v668
        %v673 = vrot.slane %v669, 2
        %v674 = vrot.slane %v670, 2
        %v675 = vsel %vm265, %v673, %v674
        %676 = vrot.lane.b32.xlu0 %v675, 127
        %v677 = vpop.permute.xlu0 %676
        %v679 = vadd.f32 %v666, %v677
        %s680 = sld [smem:[#allocation2 + $0x404]]
        %v681 = vstv %s680
        %v682 = vmul.f32 %v200, %v681
        %v683 = vmul.f32 %v201, %v681
        %v686 = vrot.slane %v682, 2
        %v687 = vrot.slane %v683, 2
        %v688 = vsel %vm265, %v686, %v687
        %689 = vrot.lane.b32.xlu0 %v688, 126
        %v690 = vpop.permute.xlu0 %689
        %v692 = vadd.f32 %v679, %v690
        %s693 = sld [smem:[#allocation4 + $0x4]]
        %v694 = vstv %s693
        %v695 = vadd.f32 %v692, %v694
        %v696 = vmax.f32 %v695, 0.0
        %s697 = scalar_lea.vmem %s199, 32
        %698 = vst.msk [vmem:[%s697] sm:$0xff] %vm301, %v696
        %s699 = sld [smem:[#allocation2 + $0x5]]
        %v700 = vstv %s699
        %v701 = vmul.f32 %v200, %v700
        %s702 = sld [smem:[#allocation2 + $0x85]]
        %v703 = vstv %s702
        %v704 = vmul.f32 %v200, %v703
        %706 = vrot.lane.b32.xlu0 %v704, 127
        %v707 = vpop.permute.xlu0 %706
        %v709 = vadd.f32 %v701, %v707
        %s710 = sld [smem:[#allocation2 + $0x105]]
        %v711 = vstv %s710
        %v712 = vmul.f32 %v200, %v711
        %714 = vrot.lane.b32.xlu0 %v712, 126
        %v715 = vpop.permute.xlu0 %714
        %v717 = vadd.f32 %v709, %v715
        %s718 = sld [smem:[#allocation2 + $0x185]]
        %v719 = vstv %s718
        %v720 = vmul.f32 %v200, %v719
        %v721 = vmul.f32 %v201, %v719
        %v724 = vrot.slane %v720, 1
        %v725 = vrot.slane %v721, 1
        %v726 = vsel %vm227, %v724, %v725
        %v728 = vadd.f32 %v717, %v726
        %s729 = sld [smem:[#allocation2 + $0x205]]
        %v730 = vstv %s729
        %v731 = vmul.f32 %v200, %v730
        %v732 = vmul.f32 %v201, %v730
        %v735 = vrot.slane %v731, 1
        %v736 = vrot.slane %v732, 1
        %v737 = vsel %vm227, %v735, %v736
        %738 = vrot.lane.b32.xlu0 %v737, 127
        %v739 = vpop.permute.xlu0 %738
        %v741 = vadd.f32 %v728, %v739
        %s742 = sld [smem:[#allocation2 + $0x285]]
        %v743 = vstv %s742
        %v744 = vmul.f32 %v200, %v743
        %v745 = vmul.f32 %v201, %v743
        %v748 = vrot.slane %v744, 1
        %v749 = vrot.slane %v745, 1
        %v750 = vsel %vm227, %v748, %v749
        %751 = vrot.lane.b32.xlu0 %v750, 126
        %v752 = vpop.permute.xlu0 %751
        %v754 = vadd.f32 %v741, %v752
        %s755 = sld [smem:[#allocation2 + $0x305]]
        %v756 = vstv %s755
        %v757 = vmul.f32 %v200, %v756
        %v758 = vmul.f32 %v201, %v756
        %v761 = vrot.slane %v757, 2
        %v762 = vrot.slane %v758, 2
        %v763 = vsel %vm265, %v761, %v762
        %v765 = vadd.f32 %v754, %v763
        %s766 = sld [smem:[#allocation2 + $0x385]]
        %v767 = vstv %s766
        %v768 = vmul.f32 %v200, %v767
        %v769 = vmul.f32 %v201, %v767
        %v772 = vrot.slane %v768, 2
        %v773 = vrot.slane %v769, 2
        %v774 = vsel %vm265, %v772, %v773
        %775 = vrot.lane.b32.xlu0 %v774, 127
        %v776 = vpop.permute.xlu0 %775
        %v778 = vadd.f32 %v765, %v776
        %s779 = sld [smem:[#allocation2 + $0x405]]
        %v780 = vstv %s779
        %v781 = vmul.f32 %v200, %v780
        %v782 = vmul.f32 %v201, %v780
        %v785 = vrot.slane %v781, 2
        %v786 = vrot.slane %v782, 2
        %v787 = vsel %vm265, %v785, %v786
        %788 = vrot.lane.b32.xlu0 %v787, 126
        %v789 = vpop.permute.xlu0 %788
        %v791 = vadd.f32 %v778, %v789
        %s792 = sld [smem:[#allocation4 + $0x5]]
        %v793 = vstv %s792
        %v794 = vadd.f32 %v791, %v793
        %v795 = vmax.f32 %v794, 0.0
        %s796 = scalar_lea.vmem %s199, 40
        %797 = vst.msk [vmem:[%s796] sm:$0xff] %vm301, %v795
        %s798 = sld [smem:[#allocation2 + $0x6]]
        %v799 = vstv %s798
        %v800 = vmul.f32 %v200, %v799
        %s801 = sld [smem:[#allocation2 + $0x86]]
        %v802 = vstv %s801
        %v803 = vmul.f32 %v200, %v802
        %805 = vrot.lane.b32.xlu0 %v803, 127
        %v806 = vpop.permute.xlu0 %805
        %v808 = vadd.f32 %v800, %v806
        %s809 = sld [smem:[#allocation2 + $0x106]]
        %v810 = vstv %s809
        %v811 = vmul.f32 %v200, %v810
        %813 = vrot.lane.b32.xlu0 %v811, 126
        %v814 = vpop.permute.xlu0 %813
        %v816 = vadd.f32 %v808, %v814
        %s817 = sld [smem:[#allocation2 + $0x186]]
        %v818 = vstv %s817
        %v819 = vmul.f32 %v200, %v818
        %v820 = vmul.f32 %v201, %v818
        %v823 = vrot.slane %v819, 1
        %v824 = vrot.slane %v820, 1
        %v825 = vsel %vm227, %v823, %v824
        %v827 = vadd.f32 %v816, %v825
        %s828 = sld [smem:[#allocation2 + $0x206]]
        %v829 = vstv %s828
        %v830 = vmul.f32 %v200, %v829
        %v831 = vmul.f32 %v201, %v829
        %v834 = vrot.slane %v830, 1
        %v835 = vrot.slane %v831, 1
        %v836 = vsel %vm227, %v834, %v835
        %837 = vrot.lane.b32.xlu0 %v836, 127
        %v838 = vpop.permute.xlu0 %837
        %v840 = vadd.f32 %v827, %v838
        %s841 = sld [smem:[#allocation2 + $0x286]]
        %v842 = vstv %s841
        %v843 = vmul.f32 %v200, %v842
        %v844 = vmul.f32 %v201, %v842
        %v847 = vrot.slane %v843, 1
        %v848 = vrot.slane %v844, 1
        %v849 = vsel %vm227, %v847, %v848
        %850 = vrot.lane.b32.xlu0 %v849, 126
        %v851 = vpop.permute.xlu0 %850
        %v853 = vadd.f32 %v840, %v851
        %s854 = sld [smem:[#allocation2 + $0x306]]
        %v855 = vstv %s854
        %v856 = vmul.f32 %v200, %v855
        %v857 = vmul.f32 %v201, %v855
        %v860 = vrot.slane %v856, 2
        %v861 = vrot.slane %v857, 2
        %v862 = vsel %vm265, %v860, %v861
        %v864 = vadd.f32 %v853, %v862
        %s865 = sld [smem:[#allocation2 + $0x386]]
        %v866 = vstv %s865
        %v867 = vmul.f32 %v200, %v866
        %v868 = vmul.f32 %v201, %v866
        %v871 = vrot.slane %v867, 2
        %v872 = vrot.slane %v868, 2
        %v873 = vsel %vm265, %v871, %v872
        %874 = vrot.lane.b32.xlu0 %v873, 127
        %v875 = vpop.permute.xlu0 %874
        %v877 = vadd.f32 %v864, %v875
        %s878 = sld [smem:[#allocation2 + $0x406]]
        %v879 = vstv %s878
        %v880 = vmul.f32 %v200, %v879
        %v881 = vmul.f32 %v201, %v879
        %v884 = vrot.slane %v880, 2
        %v885 = vrot.slane %v881, 2
        %v886 = vsel %vm265, %v884, %v885
        %887 = vrot.lane.b32.xlu0 %v886, 126
        %v888 = vpop.permute.xlu0 %887
        %v890 = vadd.f32 %v877, %v888
        %s891 = sld [smem:[#allocation4 + $0x6]]
        %v892 = vstv %s891
        %v893 = vadd.f32 %v890, %v892
        %v894 = vmax.f32 %v893, 0.0
        %s895 = scalar_lea.vmem %s199, 48
        %896 = vst.msk [vmem:[%s895] sm:$0xff] %vm301, %v894
        %s897 = sld [smem:[#allocation2 + $0x7]]
        %v898 = vstv %s897
        %v899 = vmul.f32 %v200, %v898
        %s900 = sld [smem:[#allocation2 + $0x87]]
        %v901 = vstv %s900
        %v902 = vmul.f32 %v200, %v901
        %904 = vrot.lane.b32.xlu0 %v902, 127
        %v905 = vpop.permute.xlu0 %904
        %v907 = vadd.f32 %v899, %v905
        %s908 = sld [smem:[#allocation2 + $0x107]]
        %v909 = vstv %s908
        %v910 = vmul.f32 %v200, %v909
        %912 = vrot.lane.b32.xlu0 %v910, 126
        %v913 = vpop.permute.xlu0 %912
        %v915 = vadd.f32 %v907, %v913
        %s916 = sld [smem:[#allocation2 + $0x187]]
        %v917 = vstv %s916
        %v918 = vmul.f32 %v200, %v917
        %v919 = vmul.f32 %v201, %v917
        %v922 = vrot.slane %v918, 1
        %v923 = vrot.slane %v919, 1
        %v924 = vsel %vm227, %v922, %v923
        %v926 = vadd.f32 %v915, %v924
        %s927 = sld [smem:[#allocation2 + $0x207]]
        %v928 = vstv %s927
        %v929 = vmul.f32 %v200, %v928
        %v930 = vmul.f32 %v201, %v928
        %v933 = vrot.slane %v929, 1
        %v934 = vrot.slane %v930, 1
        %v935 = vsel %vm227, %v933, %v934
        %936 = vrot.lane.b32.xlu0 %v935, 127
        %v937 = vpop.permute.xlu0 %936
        %v939 = vadd.f32 %v926, %v937
        %s940 = sld [smem:[#allocation2 + $0x287]]
        %v941 = vstv %s940
        %v942 = vmul.f32 %v200, %v941
        %v943 = vmul.f32 %v201, %v941
        %v946 = vrot.slane %v942, 1
        %v947 = vrot.slane %v943, 1
        %v948 = vsel %vm227, %v946, %v947
        %949 = vrot.lane.b32.xlu0 %v948, 126
        %v950 = vpop.permute.xlu0 %949
        %v952 = vadd.f32 %v939, %v950
        %s953 = sld [smem:[#allocation2 + $0x307]]
        %v954 = vstv %s953
        %v955 = vmul.f32 %v200, %v954
        %v956 = vmul.f32 %v201, %v954
        %v959 = vrot.slane %v955, 2
        %v960 = vrot.slane %v956, 2
        %v961 = vsel %vm265, %v959, %v960
        %v963 = vadd.f32 %v952, %v961
        %s964 = sld [smem:[#allocation2 + $0x387]]
        %v965 = vstv %s964
        %v966 = vmul.f32 %v200, %v965
        %v967 = vmul.f32 %v201, %v965
        %v970 = vrot.slane %v966, 2
        %v971 = vrot.slane %v967, 2
        %v972 = vsel %vm265, %v970, %v971
        %973 = vrot.lane.b32.xlu0 %v972, 127
        %v974 = vpop.permute.xlu0 %973
        %v976 = vadd.f32 %v963, %v974
        %s977 = sld [smem:[#allocation2 + $0x407]]
        %v978 = vstv %s977
        %v979 = vmul.f32 %v200, %v978
        %v980 = vmul.f32 %v201, %v978
        %v983 = vrot.slane %v979, 2
        %v984 = vrot.slane %v980, 2
        %v985 = vsel %vm265, %v983, %v984
        %986 = vrot.lane.b32.xlu0 %v985, 126
        %v987 = vpop.permute.xlu0 %986
        %v989 = vadd.f32 %v976, %v987
        %s990 = sld [smem:[#allocation4 + $0x7]]
        %v991 = vstv %s990
        %v992 = vadd.f32 %v989, %v991
        %v993 = vmax.f32 %v992, 0.0
        %s994 = scalar_lea.vmem %s199, 56
        %995 = vst.msk [vmem:[%s994] sm:$0xff] %vm301, %v993
        %p996 = scmp.lt.s32.totalorder %s16, 1
        %s997 = scalar_select %p996, %s16, 1
        %s998 = smul.addr %s997, 8
        %s999 = smul.addr %s998, 8
        %s1000 = scalar_lea.vmem %s3, %s999
        // Predicated region
        $region41: #{forward.6} parent=31 // pred_check
          %p1001 = pneg %p102
        $region42: #{forward.6} parent=31 // pred_check_branch
          %1003 = sbr.rel (%p1001) target = $region44
        $region43: #{forward.6} parent=31 // pred_region
          _
        $region44: #{forward.6} parent=31 // pred_fallthru
          _
      $region32: #{forward.6} parent=5 // pred_fallthru
        _
      %p1004 = scmp.le.s32.totalorder 2, %s11
      // Predicated region
      $region45: #{forward.6} parent=5 // pred_check
        %p1005 = pneg %p1004
      $region46: #{forward.6} parent=5 // pred_check_branch
        %1007 = sbr.rel (%p1005) target = $region48
      $region47: #{forward.6} parent=5 // pred_region
        %s1008 = ssub.s32 %s11, 2
        // Predicated region
        $region49: #{forward.6} parent=47 // pred_check
          %p1009 = pneg %p108
        $region50: #{forward.6} parent=47 // pred_check_branch
          %1011 = sbr.rel (%p1009) target = $region52
        $region51: #{forward.6} parent=47 // pred_region
          %p1012 = scmp.lt.s32.totalorder %s17, 1
          %s1013 = scalar_select %p1012, %s17, 1
          %s1014 = smul.addr %s1013, 8
          %s1015 = smul.addr %s1014, 8
          %s1016 = scalar_lea.vmem %s3, %s1015
        $region52: #{forward.6} parent=47 // pred_fallthru
          _
      $region48: #{forward.6} parent=5 // pred_fallthru
        _
    $region6: #{forward.6} parent=1 // loop_footer
      %s15 = sadd.s32 1, %s11
    $region7: #{forward.6} parent=1 // loop_footer_branch
      %10 = sbr.rel target = $region3
    $region8: #{forward.6} parent=1 // loop_exit
      _
    %1017 = vsyncpa [#allocation3], 1
    %s1018 = scalar_lea.sflag [#allocation3], 1
    %1019 = vsyncpa %s1018, 1
    %1020 = vsyncpa [#allocation5], 1

// kernel: forward.8
$region0: #{forward.8}
  #allocation0 [shape = 'u32[]', space=smem, size = 0x4, offset = 0x4, fixed_abs, tag = 'smem constant byte address 0x4 - core index']
  #allocation1 [shape = 'u32[144,128]{1,0:T(1,128)}', space=vmem, size = 0x12000, scoped, tag = 'internal scratch']
  %s0 = inlined_call_operand.vmem [shape: f32[2,64], index: 0, kind: input, shape index: {}]
  %s1 = inlined_call_operand.vmem [shape: f32[64,32], index: 1, kind: input, shape index: {}]
  %s2 = inlined_call_operand.vmem [shape: f32[1,32], index: 2, kind: input, shape index: {}]
  %s3 = inlined_call_operand.vmem [shape: f32[2,32], index: 3, kind: output, shape index: {}]
  %s4 = sld [smem:[#allocation0]]
  $region22: #{forward.8} parent=0
    _
  %s6 = ssub.s32 1, %s4
  %s7 = scalar_select 0, %s6, %s4
  // Predicated region
  $region2: #{forward.8} parent=0 // pred_check
    _
  $region3: #{forward.8} parent=0 // pred_check_branch
    %9 = sbr.rel (0) target = $region5
  $region4: #{forward.8} parent=0 // pred_region
    _
  $region5: #{forward.8} parent=0 // pred_fallthru
    _
  // Predicated region
  $region6: #{forward.8} parent=0 // pred_check
    _
  $region7: #{forward.8} parent=0 // pred_check_branch
    %11 = sbr.rel (0) target = $region9
  $region8: #{forward.8} parent=0 // pred_region
    _
  $region9: #{forward.8} parent=0 // pred_fallthru
    _
  // Predicated region
  $region10: #{forward.8} parent=0 // pred_check
    _
  $region11: #{forward.8} parent=0 // pred_check_branch
    %13 = sbr.rel (0) target = $region13
  $region12: #{forward.8} parent=0 // pred_region
    _
  $region13: #{forward.8} parent=0 // pred_fallthru
    _
  %v14 = vld [vmem:[%s0] sm:$0x3]
  %v15 = vld [vmem:[%s1] sm:$0xff]
  %v16 = vld [vmem:[%s1 + $0x8] sm:$0xff]
  %v17 = vld [vmem:[%s1 + $0x10] sm:$0xff]
  %v18 = vld [vmem:[%s1 + $0x18] sm:$0xff]
  %v19 = vld [vmem:[%s1 + $0x20] sm:$0xff]
  %v20 = vld [vmem:[%s1 + $0x28] sm:$0xff]
  %v21 = vld [vmem:[%s1 + $0x30] sm:$0xff]
  %v22 = vld [vmem:[%s1 + $0x38] sm:$0xff]
  %v23 = vld [vmem:[%s2] sm:$0x1]
  %v25 = vlaneseq
  %v26 = vshrl.u32 %v25, 7
  %v27 = vsub.s32 0, %v26
  %v28 = vrot.slane %v23, %v27
  %vm30 = vcmask 523264
  %v32 = vsel %vm30, %v14, 0
  %34 = vmatprep.subr.mxu0 0.0
  %35 = vmatpush1.msra.mxu0 0.0
  %36 = vmatprep.subr.mxu0 0.0
  %37 = vmatpush1.msra.mxu0 0.0
  %38 = vmatprep.subr.mxu0 0.0
  %39 = vmatpush1.msra.mxu0 0.0
  %40 = vmatprep.subr.mxu0 0.0
  %41 = vmatpush1.msra.mxu0 0.0
  %42 = vmatprep.subr.mxu0 0.0
  %43 = vmatpush1.msra.mxu0 0.0
  %44 = vmatprep.subr.mxu0 0.0
  %45 = vmatpush1.msra.mxu0 0.0
  %46 = vmatprep.subr.mxu0 0.0
  %47 = vmatpush1.msra.mxu0 0.0
  %48 = vmatprep.subr.mxu0 0.0
  %49 = vmatpush1.msra.mxu0 0.0
  %50 = vmatprep.subr.mxu0 0.0
  %51 = vmatpush1.msra.mxu0 %v22
  %52 = vmatprep.subr.mxu0 0.0
  %53 = vmatpush1.msra.mxu0 %v21
  %54 = vmatprep.subr.mxu0 0.0
  %55 = vmatpush1.msra.mxu0 %v20
  %56 = vmatprep.subr.mxu0 0.0
  %57 = vmatpush1.msra.mxu0 %v19
  %58 = vmatprep.subr.mxu0 0.0
  %59 = vmatpush1.msra.mxu0 %v18
  %60 = vmatprep.subr.mxu0 0.0
  %61 = vmatpush1.msra.mxu0 %v17
  %62 = vmatprep.subr.mxu0 0.0
  %63 = vmatpush1.msra.mxu0 %v16
  %64 = vmatprep.subr.mxu0 0.0
  %65 = vmatpush1.msra.mxu0 %v15
  %66 = vmatprep.subr.mxu0 0.0
  %67 = vmatpush2.msra.mxu0 0.0
  %68 = vmatprep.subr.mxu0 0.0
  %69 = vmatpush2.msra.mxu0 0.0
  %70 = vmatprep.subr.mxu0 0.0
  %71 = vmatpush2.msra.mxu0 0.0
  %72 = vmatprep.subr.mxu0 0.0
  %73 = vmatpush2.msra.mxu0 0.0
  %74 = vmatprep.subr.mxu0 0.0
  %75 = vmatpush2.msra.mxu0 0.0
  %76 = vmatprep.subr.mxu0 0.0
  %77 = vmatpush2.msra.mxu0 0.0
  %78 = vmatprep.subr.mxu0 0.0
  %79 = vmatpush2.msra.mxu0 0.0
  %80 = vmatprep.subr.mxu0 0.0
  %81 = vmatpush2.msra.mxu0 0.0
  %82 = vmatprep.subr.mxu0 0.0
  %83 = vmatpush2.msra.mxu0 0.0
  %84 = vmatprep.subr.mxu0 0.0
  %85 = vmatpush2.msra.mxu0 0.0
  %86 = vmatprep.subr.mxu0 0.0
  %87 = vmatpush2.msra.mxu0 0.0
  %88 = vmatprep.subr.mxu0 0.0
  %89 = vmatpush2.msra.mxu0 0.0
  %90 = vmatprep.subr.mxu0 0.0
  %91 = vmatpush2.msra.mxu0 0.0
  %92 = vmatprep.subr.mxu0 0.0
  %93 = vmatpush2.msra.mxu0 0.0
  %94 = vmatprep.subr.mxu0 0.0
  %95 = vmatpush2.msra.mxu0 0.0
  %96 = vmatprep.subr.mxu0 0.0
  %97 = vmatpush2.msra.mxu0 0.0
  %98 = vmatprep.mubr.f32.mxu0 0.0
  %99 = vmatmul.mubr.f32.gmra.mxu0 %v32
  %v100 = vpop.f32.mrf.mxu0
  %v101 = vadd.f32 %v28, %v100
  %v102 = vpop.f32.mrf.mxu0
  %103 = vdwg.mxu0
  %v104 = vtanh.pop %v101
  %vm105 = vcmask 254976
  %106 = vst.msk [vmem:[%s3] sm:$0x3] %vm105, %v104
  // Predicated region
  $region14: #{forward.8} parent=0 // pred_check
    _
  $region15: #{forward.8} parent=0 // pred_check_branch
    %108 = sbr.rel (0) target = $region17
  $region16: #{forward.8} parent=0 // pred_region
    _
  $region17: #{forward.8} parent=0 // pred_fallthru
    _
  // Predicated region
  $region18: #{forward.8} parent=0 // pred_check
    _
  $region19: #{forward.8} parent=0 // pred_check_branch
    %110 = sbr.rel (0) target = $region21
  $region20: #{forward.8} parent=0 // pred_region
    _
  $region21: #{forward.8} parent=0 // pred_fallthru
    _

// kernel: forward.7
$region0: #{forward.7}
  #allocation0 [shape = 'u32[]', space=smem, size = 0x4, offset = 0x4, fixed_abs, tag = 'smem constant byte address 0x4 - core index']
  #allocation1 [shape = 'u32[144,128]{1,0:T(1,128)}', space=vmem, size = 0x12000, scoped, tag = 'internal scratch']
  #allocation2 [shape = 'f32[16,32]{1,0:T(8,128)}', space=vmem, size = 0x2000, scoped, tag = 'scratch operand']
  #allocation3 [shape = 'f32[16,32]{1,0:T(8,128)}', space=vmem, size = 0x2000, scoped, tag = 'scratch operand']
  #allocation4 [shape = 'f32[16,32]{1,0:T(8,128)}', space=vmem, size = 0x2000, scoped, tag = 'scratch operand']
  #allocation5 [shape = 'f32[16,32]{1,0:T(8,128)}', space=vmem, size = 0x2000, scoped, tag = 'scratch operand']
  %s0 = inlined_call_operand.vmem [shape: f32[16,16,8], index: 0, kind: input, shape index: {}, may-alias: {0,1}]
  %s1 = inlined_call_operand.vmem [shape: f32[16,16,8], index: 1, kind: input, shape index: {}, may-alias: {0,1}]
  %s2 = inlined_call_operand.vmem [shape: f32[8,128], index: 2, kind: input, shape index: {}]
  %s3 = inlined_call_operand.vmem [shape: f32[32,128], index: 3, kind: input, shape index: {}]
  %s4 = inlined_call_operand.vmem [shape: f32[1,128], index: 4, kind: input, shape index: {}]
  %s5 = inlined_call_operand.vmem [shape: f32[8,128], index: 5, kind: input, shape index: {}]
  %s6 = inlined_call_operand.vmem [shape: f32[32,128], index: 6, kind: input, shape index: {}]
  %s7 = inlined_call_operand.vmem [shape: f32[1,128], index: 7, kind: input, shape index: {}]
  %s8 = inlined_call_operand.vmem [shape: f32[16,16,32], index: 8, kind: output, shape index: {0}]
  %s9 = inlined_call_operand.vmem [shape: f32[16,16,32], index: 9, kind: output, shape index: {1}]
  %10 = xla_tuple %s8, %s9
  %s11 = sld [smem:[#allocation0]]
  $region77: #{forward.7} parent=0
    _
  %s13 = ssub.s32 1, %s11
  %s14 = scalar_select 0, %s13, %s11
  loop: start=0, step=1, limit=18
  $region2: #{forward.7} parent=0 // loop_pre_header
    _
  $region3: #{forward.7} parent=0 // loop_header
    %s16 = sphi 0, %s20
    %p17 = scmp.ge.s32.totalorder %s16, 18
    %s26 = sphi 0, %s28
    %s29 = sphi 0, %s26
    %s30 = sphi 0, %s29
    %s46 = sphi 0, %s30
    %s54 = sphi 0, %s56
    %s57 = sphi 0, %s54
    %s58 = sphi 0, %s57
    %s74 = sphi 0, %s58
    %s78 = sphi 0, %s78
    %s80 = sphi 0, %s78
    %s81 = sphi 0, %s80
    %s95 = sphi 0, %s81
    %s99 = sphi 0, %s99
    %s101 = sphi 0, %s99
    %s102 = sphi 0, %s101
    %s116 = sphi 0, %s102
    %s120 = sphi 0, %s120
    %s122 = sphi 0, %s120
    %s123 = sphi 0, %s122
    %s137 = sphi 0, %s123
    %s141 = sphi 0, %s141
    %s143 = sphi 0, %s141
    %s144 = sphi 0, %s143
    %s158 = sphi 0, %s144
    %s162 = sphi 0, %s162
    %s164 = sphi 0, %s162
    %s165 = sphi 0, %s164
    %s179 = sphi 0, %s165
    %s183 = sphi 0, %s183
    %s185 = sphi 0, %s183
    %s186 = sphi 0, %s185
    %s200 = sphi 0, %s186
    %s206 = sphi 0, %s208
    %s209 = sphi 0, %s206
    %s210 = sphi 0, %s209
    %s226 = sphi 0, %s210
    %s234 = sphi 0, %s236
    %s237 = sphi 0, %s234
    %s238 = sphi 0, %s237
    %s254 = sphi 0, %s238
  $region4: #{forward.7} parent=0 // loop_header_branch
    %19 = sbr.rel (%p17) target = $region8
  $region5: #{forward.7} parent=0 // loop_body
    %s21 = ssub.s32 %s16, 1
    %s22 = ssub.s32 %s16, 2
    %s23 = sadd.s32 %s16, 1
    %s24 = ssub.s32 %s16, %s23
    %p25 = scmp.eq.s32.totalorder %s24, 0
    %s27 = sadd.s32 %s26, 1
    %s28 = scalar_select %p25, %s26, %s27
    %p31 = pneg %p25
    %p32 = scmp.eq.s32.totalorder %s16, 15
    %p33 = por %p31, %p32
    %p34 = scmp.ne.s32.totalorder %s26, %s29
    %p35 = scmp.eq.s32.totalorder %s16, 0
    %p36 = por %p34, %p35
    %p37 = scmp.ne.s32.totalorder %s26, %s29
    %p38 = scmp.eq.s32.totalorder %s21, 15
    %p39 = por %p37, %p38
    %p40 = scmp.ne.s32.totalorder %s29, %s30
    %p41 = scmp.eq.s32.totalorder %s21, 0
    %p42 = por %p40, %p41
    %p43 = scmp.ne.s32.totalorder %s29, %s30
    %p44 = scmp.eq.s32.totalorder %s22, 15
    %p45 = por %p43, %p44
    %p47 = scmp.ne.s32.totalorder %s30, %s46
    %p48 = scmp.eq.s32.totalorder %s22, 0
    %p49 = por %p47, %p48
    %s50 = ssub.s32 15, %s16
    %s51 = ssub.s32 15, %s23
    %s52 = ssub.s32 %s50, %s51
    %p53 = scmp.eq.s32.totalorder %s52, 0
    %s55 = sadd.s32 %s54, 1
    %s56 = scalar_select %p53, %s54, %s55
    %p59 = pneg %p53
    %p60 = scmp.eq.s32.totalorder %s16, 15
    %p61 = por %p59, %p60
    %p62 = scmp.ne.s32.totalorder %s54, %s57
    %p63 = scmp.eq.s32.totalorder %s16, 0
    %p64 = por %p62, %p63
    %p65 = scmp.ne.s32.totalorder %s54, %s57
    %p66 = scmp.eq.s32.totalorder %s21, 15
    %p67 = por %p65, %p66
    %p68 = scmp.ne.s32.totalorder %s57, %s58
    %p69 = scmp.eq.s32.totalorder %s21, 0
    %p70 = por %p68, %p69
    %p71 = scmp.ne.s32.totalorder %s57, %s58
    %p72 = scmp.eq.s32.totalorder %s22, 15
    %p73 = por %p71, %p72
    %p75 = scmp.ne.s32.totalorder %s58, %s74
    %p76 = scmp.eq.s32.totalorder %s22, 0
    %p77 = por %p75, %p76
    %s79 = sadd.s32 %s78, 1
    %p82 = scmp.eq.s32.totalorder %s16, 15
    %p83 = scmp.ne.s32.totalorder %s78, %s80
    %p84 = scmp.eq.s32.totalorder %s16, 0
    %p85 = por %p83, %p84
    %p86 = scmp.ne.s32.totalorder %s78, %s80
    %p87 = scmp.eq.s32.totalorder %s21, 15
    %p88 = por %p86, %p87
    %p89 = scmp.ne.s32.totalorder %s80, %s81
    %p90 = scmp.eq.s32.totalorder %s21, 0
    %p91 = por %p89, %p90
    %p92 = scmp.ne.s32.totalorder %s80, %s81
    %p93 = scmp.eq.s32.totalorder %s22, 15
    %p94 = por %p92, %p93
    %p96 = scmp.ne.s32.totalorder %s81, %s95
    %p97 = scmp.eq.s32.totalorder %s22, 0
    %p98 = por %p96, %p97
    %s100 = sadd.s32 %s99, 1
    %p103 = scmp.eq.s32.totalorder %s16, 15
    %p104 = scmp.ne.s32.totalorder %s99, %s101
    %p105 = scmp.eq.s32.totalorder %s16, 0
    %p106 = por %p104, %p105
    %p107 = scmp.ne.s32.totalorder %s99, %s101
    %p108 = scmp.eq.s32.totalorder %s21, 15
    %p109 = por %p107, %p108
    %p110 = scmp.ne.s32.totalorder %s101, %s102
    %p111 = scmp.eq.s32.totalorder %s21, 0
    %p112 = por %p110, %p111
    %p113 = scmp.ne.s32.totalorder %s101, %s102
    %p114 = scmp.eq.s32.totalorder %s22, 15
    %p115 = por %p113, %p114
    %p117 = scmp.ne.s32.totalorder %s102, %s116
    %p118 = scmp.eq.s32.totalorder %s22, 0
    %p119 = por %p117, %p118
    %s121 = sadd.s32 %s120, 1
    %p124 = scmp.eq.s32.totalorder %s16, 15
    %p125 = scmp.ne.s32.totalorder %s120, %s122
    %p126 = scmp.eq.s32.totalorder %s16, 0
    %p127 = por %p125, %p126
    %p128 = scmp.ne.s32.totalorder %s120, %s122
    %p129 = scmp.eq.s32.totalorder %s21, 15
    %p130 = por %p128, %p129
    %p131 = scmp.ne.s32.totalorder %s122, %s123
    %p132 = scmp.eq.s32.totalorder %s21, 0
    %p133 = por %p131, %p132
    %p134 = scmp.ne.s32.totalorder %s122, %s123
    %p135 = scmp.eq.s32.totalorder %s22, 15
    %p136 = por %p134, %p135
    %p138 = scmp.ne.s32.totalorder %s123, %s137
    %p139 = scmp.eq.s32.totalorder %s22, 0
    %p140 = por %p138, %p139
    %s142 = sadd.s32 %s141, 1
    %p145 = scmp.eq.s32.totalorder %s16, 15
    %p146 = scmp.ne.s32.totalorder %s141, %s143
    %p147 = scmp.eq.s32.totalorder %s16, 0
    %p148 = por %p146, %p147
    %p149 = scmp.ne.s32.totalorder %s141, %s143
    %p150 = scmp.eq.s32.totalorder %s21, 15
    %p151 = por %p149, %p150
    %p152 = scmp.ne.s32.totalorder %s143, %s144
    %p153 = scmp.eq.s32.totalorder %s21, 0
    %p154 = por %p152, %p153
    %p155 = scmp.ne.s32.totalorder %s143, %s144
    %p156 = scmp.eq.s32.totalorder %s22, 15
    %p157 = por %p155, %p156
    %p159 = scmp.ne.s32.totalorder %s144, %s158
    %p160 = scmp.eq.s32.totalorder %s22, 0
    %p161 = por %p159, %p160
    %s163 = sadd.s32 %s162, 1
    %p166 = scmp.eq.s32.totalorder %s16, 15
    %p167 = scmp.ne.s32.totalorder %s162, %s164
    %p168 = scmp.eq.s32.totalorder %s16, 0
    %p169 = por %p167, %p168
    %p170 = scmp.ne.s32.totalorder %s162, %s164
    %p171 = scmp.eq.s32.totalorder %s21, 15
    %p172 = por %p170, %p171
    %p173 = scmp.ne.s32.totalorder %s164, %s165
    %p174 = scmp.eq.s32.totalorder %s21, 0
    %p175 = por %p173, %p174
    %p176 = scmp.ne.s32.totalorder %s164, %s165
    %p177 = scmp.eq.s32.totalorder %s22, 15
    %p178 = por %p176, %p177
    %p180 = scmp.ne.s32.totalorder %s165, %s179
    %p181 = scmp.eq.s32.totalorder %s22, 0
    %p182 = por %p180, %p181
    %s184 = sadd.s32 %s183, 1
    %p187 = scmp.eq.s32.totalorder %s16, 15
    %p188 = scmp.ne.s32.totalorder %s183, %s185
    %p189 = scmp.eq.s32.totalorder %s16, 0
    %p190 = por %p188, %p189
    %p191 = scmp.ne.s32.totalorder %s183, %s185
    %p192 = scmp.eq.s32.totalorder %s21, 15
    %p193 = por %p191, %p192
    %p194 = scmp.ne.s32.totalorder %s185, %s186
    %p195 = scmp.eq.s32.totalorder %s21, 0
    %p196 = por %p194, %p195
    %p197 = scmp.ne.s32.totalorder %s185, %s186
    %p198 = scmp.eq.s32.totalorder %s22, 15
    %p199 = por %p197, %p198
    %p201 = scmp.ne.s32.totalorder %s186, %s200
    %p202 = scmp.eq.s32.totalorder %s22, 0
    %p203 = por %p201, %p202
    %s204 = ssub.s32 %s16, %s23
    %p205 = scmp.eq.s32.totalorder %s204, 0
    %s207 = sadd.s32 %s206, 1
    %s208 = scalar_select %p205, %s206, %s207
    %p211 = pneg %p205
    %p212 = scmp.eq.s32.totalorder %s16, 15
    %p213 = por %p211, %p212
    %p214 = scmp.ne.s32.totalorder %s206, %s209
    %p215 = scmp.eq.s32.totalorder %s16, 0
    %p216 = por %p214, %p215
    %p217 = scmp.ne.s32.totalorder %s206, %s209
    %p218 = scmp.eq.s32.totalorder %s21, 15
    %p219 = por %p217, %p218
    %p220 = scmp.ne.s32.totalorder %s209, %s210
    %p221 = scmp.eq.s32.totalorder %s21, 0
    %p222 = por %p220, %p221
    %p223 = scmp.ne.s32.totalorder %s209, %s210
    %p224 = scmp.eq.s32.totalorder %s22, 15
    %p225 = por %p223, %p224
    %p227 = scmp.ne.s32.totalorder %s210, %s226
    %p228 = scmp.eq.s32.totalorder %s22, 0
    %p229 = por %p227, %p228
    %s230 = ssub.s32 15, %s16
    %s231 = ssub.s32 15, %s23
    %s232 = ssub.s32 %s230, %s231
    %p233 = scmp.eq.s32.totalorder %s232, 0
    %s235 = sadd.s32 %s234, 1
    %s236 = scalar_select %p233, %s234, %s235
    %p239 = pneg %p233
    %p240 = scmp.eq.s32.totalorder %s16, 15
    %p241 = por %p239, %p240
    %p242 = scmp.ne.s32.totalorder %s234, %s237
    %p243 = scmp.eq.s32.totalorder %s16, 0
    %p244 = por %p242, %p243
    %p245 = scmp.ne.s32.totalorder %s234, %s237
    %p246 = scmp.eq.s32.totalorder %s21, 15
    %p247 = por %p245, %p246
    %p248 = scmp.ne.s32.totalorder %s237, %s238
    %p249 = scmp.eq.s32.totalorder %s21, 0
    %p250 = por %p248, %p249
    %p251 = scmp.ne.s32.totalorder %s237, %s238
    %p252 = scmp.eq.s32.totalorder %s22, 15
    %p253 = por %p251, %p252
    %p255 = scmp.ne.s32.totalorder %s238, %s254
    %p256 = scmp.eq.s32.totalorder %s22, 0
    %p257 = por %p255, %p256
    %p258 = scmp.le.s32.totalorder 1, %s16
    %p259 = scmp.lt.s32.totalorder %s16, 17
    %p260 = pnand %p258, %p259
    %p261 = pneg %p260
    // Predicated region
    $region9: #{forward.7} parent=5 // pred_check
      _
    $region10: #{forward.7} parent=5 // pred_check_branch
      %263 = sbr.rel (%p260) target = $region12
    $region11: #{forward.7} parent=5 // pred_region
      %s264 = ssub.s32 %s16, 1
      // Predicated region
      $region13: #{forward.7} parent=11 // pred_check
        %p265 = pneg %p91
      $region14: #{forward.7} parent=11 // pred_check_branch
        %267 = sbr.rel (%p265) target = $region16
      $region15: #{forward.7} parent=11 // pred_region
        _
      $region16: #{forward.7} parent=11 // pred_fallthru
        _
      // Predicated region
      $region17: #{forward.7} parent=11 // pred_check
        %p268 = pneg %p112
      $region18: #{forward.7} parent=11 // pred_check_branch
        %270 = sbr.rel (%p268) target = $region20
      $region19: #{forward.7} parent=11 // pred_region
        _
      $region20: #{forward.7} parent=11 // pred_fallthru
        _
      // Predicated region
      $region21: #{forward.7} parent=11 // pred_check
        %p271 = pneg %p133
      $region22: #{forward.7} parent=11 // pred_check_branch
        %273 = sbr.rel (%p271) target = $region24
      $region23: #{forward.7} parent=11 // pred_region
        _
      $region24: #{forward.7} parent=11 // pred_fallthru
        _
      // Predicated region
      $region25: #{forward.7} parent=11 // pred_check
        %p274 = pneg %p154
      $region26: #{forward.7} parent=11 // pred_check_branch
        %276 = sbr.rel (%p274) target = $region28
      $region27: #{forward.7} parent=11 // pred_region
        _
      $region28: #{forward.7} parent=11 // pred_fallthru
        _
      // Predicated region
      $region29: #{forward.7} parent=11 // pred_check
        %p277 = pneg %p175
      $region30: #{forward.7} parent=11 // pred_check_branch
        %279 = sbr.rel (%p277) target = $region32
      $region31: #{forward.7} parent=11 // pred_region
        _
      $region32: #{forward.7} parent=11 // pred_fallthru
        _
      // Predicated region
      $region33: #{forward.7} parent=11 // pred_check
        %p280 = pneg %p196
      $region34: #{forward.7} parent=11 // pred_check_branch
        %282 = sbr.rel (%p280) target = $region36
      $region35: #{forward.7} parent=11 // pred_region
        _
      $region36: #{forward.7} parent=11 // pred_fallthru
        _
    $region12: #{forward.7} parent=5 // pred_fallthru
      _
    %p283 = scmp.lt.s32.totalorder %s16, 16
    // Predicated region
    $region37: #{forward.7} parent=5 // pred_check
      %p284 = pneg %p283
    $region38: #{forward.7} parent=5 // pred_check_branch
      %286 = sbr.rel (%p284) target = $region40
    $region39: #{forward.7} parent=5 // pred_region
      // Predicated region
      $region41: #{forward.7} parent=39 // pred_check
        %p287 = pneg %p36
      $region42: #{forward.7} parent=39 // pred_check_branch
        %289 = sbr.rel (%p287) target = $region44
      $region43: #{forward.7} parent=39 // pred_region
        %p290 = scmp.lt.s32.totalorder %s16, 15
        %s291 = scalar_select %p290, %s16, 15
        %s292 = smul.addr %s291, 2
        %s293 = smul.addr %s292, 8
        %s294 = scalar_lea.vmem %s0, %s293
      $region44: #{forward.7} parent=39 // pred_fallthru
        _
      // Predicated region
      $region45: #{forward.7} parent=39 // pred_check
        %p295 = pneg %p64
      $region46: #{forward.7} parent=39 // pred_check_branch
        %297 = sbr.rel (%p295) target = $region48
      $region47: #{forward.7} parent=39 // pred_region
        %s298 = ssub.s32 15, %s16
        %p299 = scmp.lt.s32.totalorder %s298, 15
        %s300 = scalar_select %p299, %s298, 15
        %s301 = smul.addr %s300, 2
        %s302 = smul.addr %s301, 8
        %s303 = scalar_lea.vmem %s1, %s302
        %s304 = ssub.s32 15, %s16
      $region48: #{forward.7} parent=39 // pred_fallthru
        _
    $region40: #{forward.7} parent=5 // pred_fallthru
      _
    %p305 = scmp.le.s32.totalorder 1, %s16
    %p306 = scmp.lt.s32.totalorder %s16, 17
    %p307 = pnand %p305, %p306
    %p308 = pneg %p307
    // Predicated region
    $region49: #{forward.7} parent=5 // pred_check
      _
    $region50: #{forward.7} parent=5 // pred_check_branch
      %310 = sbr.rel (%p307) target = $region52
    $region51: #{forward.7} parent=5 // pred_region
      %s311 = ssub.s32 %s16, 1
      %p312 = scmp.lt.s32.totalorder %s21, 15
      %s313 = scalar_select %p312, %s21, 15
      %s314 = smul.addr %s313, 2
      %s315 = smul.addr %s314, 8
      %s316 = scalar_lea.vmem %s0, %s315
      %p317 = pneg %p42
      %p318 = pneg %p39
      %s319 = ssub.s32 15, %s21
      %p320 = scmp.lt.s32.totalorder %s319, 15
      %s321 = scalar_select %p320, %s319, 15
      %s322 = smul.addr %s321, 2
      %s323 = smul.addr %s322, 8
      %s324 = scalar_lea.vmem %s1, %s323
      %p325 = pneg %p70
      %p326 = pneg %p67
      %p327 = pneg %p91
      %p328 = pneg %p88
      %p329 = pneg %p112
      %p330 = pneg %p109
      %p331 = pneg %p133
      %p332 = pneg %p130
      %p333 = pneg %p154
      %p334 = pneg %p151
      %p335 = pneg %p175
      %p336 = pneg %p172
      %p337 = pneg %p196
      %p338 = pneg %p193
      %p339 = pneg %p222
      %p340 = pneg %p219
      %p341 = scmp.lt.s32.totalorder %s21, 15
      %s342 = scalar_select %p341, %s21, 15
      %s343 = smul.addr %s342, 2
      %s344 = smul.addr %s343, 8
      %s345 = scalar_lea.vmem %s8, %s344
      %p346 = pneg %p250
      %p347 = pneg %p247
      %s348 = ssub.s32 15, %s21
      %p349 = scmp.lt.s32.totalorder %s348, 15
      %s350 = scalar_select %p349, %s348, 15
      %s351 = smul.addr %s350, 2
      %s352 = smul.addr %s351, 8
      %s353 = scalar_lea.vmem %s9, %s352
      %p354 = scmp.lt.s32.totalorder %s21, 15
      %s355 = scalar_select %p354, %s21, 15
      %s356 = smul.addr %s355, 2
      %s357 = smul.addr %s356, 8
      %s358 = scalar_lea.vmem %s0, %s357
      %s359 = ssub.s32 15, %s21
      %p360 = scmp.lt.s32.totalorder %s359, 15
      %s361 = scalar_select %p360, %s359, 15
      %s362 = smul.addr %s361, 2
      %s363 = smul.addr %s362, 8
      %s364 = scalar_lea.vmem %s1, %s363
      %s365 = ssub.s32 15, %s21
      %p366 = scmp.lt.s32.totalorder %s21, 15
      %s367 = scalar_select %p366, %s21, 15
      %s368 = smul.addr %s367, 2
      %s369 = smul.addr %s368, 8
      %s370 = scalar_lea.vmem %s8, %s369
      %s371 = ssub.s32 15, %s21
      %p372 = scmp.lt.s32.totalorder %s371, 15
      %s373 = scalar_select %p372, %s371, 15
      %s374 = smul.addr %s373, 2
      %s375 = smul.addr %s374, 8
      %s376 = scalar_lea.vmem %s9, %s375
      %s377 = ssub.s32 15, %s21
      %p378 = scmp.eq.s32.totalorder %s21, 0
      // Predicated region
      $region53: #{forward.7} parent=51 // pred_check
        %p379 = pneg %p378
      $region54: #{forward.7} parent=51 // pred_check_branch
        %381 = sbr.rel (%p379) target = $region56
      $region55: #{forward.7} parent=51 // pred_region
        %vm382 = vcmask 261120
        %383 = vst.msk [vmem:[#allocation2] sm:$0xff] %vm382, 0.0
        %384 = vst.msk [vmem:[#allocation2 + $0x8] sm:$0xff] %vm382, 0.0
        %385 = vst.msk [vmem:[#allocation3] sm:$0xff] %vm382, 0.0
        %386 = vst.msk [vmem:[#allocation3 + $0x8] sm:$0xff] %vm382, 0.0
        %387 = vst.msk [vmem:[#allocation4] sm:$0xff] %vm382, 0.0
        %388 = vst.msk [vmem:[#allocation4 + $0x8] sm:$0xff] %vm382, 0.0
        %389 = vst.msk [vmem:[#allocation5] sm:$0xff] %vm382, 0.0
        %390 = vst.msk [vmem:[#allocation5 + $0x8] sm:$0xff] %vm382, 0.0
      $region56: #{forward.7} parent=51 // pred_fallthru
        _
      %v391 = vld [vmem:[%s358] sm:$0xff]
      %v392 = vld [vmem:[%s358 + $0x8] sm:$0xff]
      %v393 = vld [vmem:[%s2] sm:$0xff]
      %v394 = vld [vmem:[#allocation2] sm:$0xff]
      %v395 = vld [vmem:[#allocation2 + $0x8] sm:$0xff]
      %v396 = vld [vmem:[%s3] sm:$0xff]
      %v397 = vld [vmem:[%s3 + $0x8] sm:$0xff]
      %v398 = vld [vmem:[%s3 + $0x10] sm:$0xff]
      %v399 = vld [vmem:[%s3 + $0x18] sm:$0xff]
      %vm400 = vcmask 261120
      %v402 = vsel %vm400, %v394, 0
      %v405 = vsel %vm400, %v395, 0
      %407 = vmatprep.subr.mxu0 0.0
      %408 = vmatpush1.msra.mxu0 0.0
      %409 = vmatprep.subr.mxu0 0.0
      %410 = vmatpush1.msra.mxu0 0.0
      %411 = vmatprep.subr.mxu0 0.0
      %412 = vmatpush1.msra.mxu0 0.0
      %413 = vmatprep.subr.mxu0 0.0
      %414 = vmatpush1.msra.mxu0 0.0
      %415 = vmatprep.subr.mxu0 0.0
      %416 = vmatpush1.msra.mxu0 0.0
      %417 = vmatprep.subr.mxu0 0.0
      %418 = vmatpush1.msra.mxu0 0.0
      %419 = vmatprep.subr.mxu0 0.0
      %420 = vmatpush1.msra.mxu0 0.0
      %421 = vmatprep.subr.mxu0 0.0
      %422 = vmatpush1.msra.mxu0 0.0
      %423 = vmatprep.subr.mxu0 0.0
      %424 = vmatpush1.msra.mxu0 0.0
      %425 = vmatprep.subr.mxu0 0.0
      %426 = vmatpush1.msra.mxu0 0.0
      %427 = vmatprep.subr.mxu0 0.0
      %428 = vmatpush1.msra.mxu0 0.0
      %429 = vmatprep.subr.mxu0 0.0
      %430 = vmatpush1.msra.mxu0 0.0
      %431 = vmatprep.subr.mxu0 0.0
      %432 = vmatpush1.msra.mxu0 %v399
      %433 = vmatprep.subr.mxu0 0.0
      %434 = vmatpush1.msra.mxu0 %v398
      %435 = vmatprep.subr.mxu0 0.0
      %436 = vmatpush1.msra.mxu0 %v397
      %437 = vmatprep.subr.mxu0 0.0
      %438 = vmatpush1.msra.mxu0 %v396
      %439 = vmatprep.subr.mxu0 0.0
      %440 = vmatpush2.msra.mxu0 0.0
      %441 = vmatprep.subr.mxu0 0.0
      %442 = vmatpush2.msra.mxu0 0.0
      %443 = vmatprep.subr.mxu0 0.0
      %444 = vmatpush2.msra.mxu0 0.0
      %445 = vmatprep.subr.mxu0 0.0
      %446 = vmatpush2.msra.mxu0 0.0
      %447 = vmatprep.subr.mxu0 0.0
      %448 = vmatpush2.msra.mxu0 0.0
      %449 = vmatprep.subr.mxu0 0.0
      %450 = vmatpush2.msra.mxu0 0.0
      %451 = vmatprep.subr.mxu0 0.0
      %452 = vmatpush2.msra.mxu0 0.0
      %453 = vmatprep.subr.mxu0 0.0
      %454 = vmatpush2.msra.mxu0 0.0
      %455 = vmatprep.subr.mxu0 0.0
      %456 = vmatpush2.msra.mxu0 0.0
      %457 = vmatprep.subr.mxu0 0.0
      %458 = vmatpush2.msra.mxu0 0.0
      %459 = vmatprep.subr.mxu0 0.0
      %460 = vmatpush2.msra.mxu0 0.0
      %461 = vmatprep.subr.mxu0 0.0
      %462 = vmatpush2.msra.mxu0 0.0
      %463 = vmatprep.subr.mxu0 0.0
      %464 = vmatpush2.msra.mxu0 0.0
      %465 = vmatprep.subr.mxu0 0.0
      %466 = vmatpush2.msra.mxu0 0.0
      %467 = vmatprep.subr.mxu0 0.0
      %468 = vmatpush2.msra.mxu0 0.0
      %469 = vmatprep.subr.mxu0 0.0
      %470 = vmatpush2.msra.mxu0 0.0
      %471 = vmatprep.mubr.f32.mxu0 0.0
      %472 = vmatmul.mubr.f32.gmra.mxu0 %v402
      %v473 = vpop.f32.mrf.mxu0
      %v474 = vadd.f32 0.0, %v473
      %v475 = vpop.f32.mrf.mxu0
      %476 = vmatprep.mubr.f32.mxu0 0.0
      %477 = vmatmul.mubr.f32.gmra.mxu0 %v405
      %v478 = vpop.f32.mrf.mxu0
      %v479 = vadd.f32 0.0, %v478
      %v480 = vpop.f32.mrf.mxu0
      %481 = vdwg.mxu0
      %vm482 = vcmask 64512
      %v484 = vsel %vm482, %v391, 0
      %v487 = vsel %vm482, %v392, 0
      %489 = vmatprep.subr.mxu0 0.0
      %490 = vmatpush1.msra.mxu0 0.0
      %491 = vmatprep.subr.mxu0 0.0
      %492 = vmatpush1.msra.mxu0 0.0
      %493 = vmatprep.subr.mxu0 0.0
      %494 = vmatpush1.msra.mxu0 0.0
      %495 = vmatprep.subr.mxu0 0.0
      %496 = vmatpush1.msra.mxu0 0.0
      %497 = vmatprep.subr.mxu0 0.0
      %498 = vmatpush1.msra.mxu0 0.0
      %499 = vmatprep.subr.mxu0 0.0
      %500 = vmatpush1.msra.mxu0 0.0
      %501 = vmatprep.subr.mxu0 0.0
      %502 = vmatpush1.msra.mxu0 0.0
      %503 = vmatprep.subr.mxu0 0.0
      %504 = vmatpush1.msra.mxu0 0.0
      %505 = vmatprep.subr.mxu0 0.0
      %506 = vmatpush1.msra.mxu0 0.0
      %507 = vmatprep.subr.mxu0 0.0
      %508 = vmatpush1.msra.mxu0 0.0
      %509 = vmatprep.subr.mxu0 0.0
      %510 = vmatpush1.msra.mxu0 0.0
      %511 = vmatprep.subr.mxu0 0.0
      %512 = vmatpush1.msra.mxu0 0.0
      %513 = vmatprep.subr.mxu0 0.0
      %514 = vmatpush1.msra.mxu0 0.0
      %515 = vmatprep.subr.mxu0 0.0
      %516 = vmatpush1.msra.mxu0 0.0
      %517 = vmatprep.subr.mxu0 0.0
      %518 = vmatpush1.msra.mxu0 0.0
      %519 = vmatprep.subr.mxu0 0.0
      %520 = vmatpush1.msra.mxu0 %v393
      %521 = vmatprep.subr.mxu0 0.0
      %522 = vmatpush2.msra.mxu0 0.0
      %523 = vmatprep.subr.mxu0 0.0
      %524 = vmatpush2.msra.mxu0 0.0
      %525 = vmatprep.subr.mxu0 0.0
      %526 = vmatpush2.msra.mxu0 0.0
      %527 = vmatprep.subr.mxu0 0.0
      %528 = vmatpush2.msra.mxu0 0.0
      %529 = vmatprep.subr.mxu0 0.0
      %530 = vmatpush2.msra.mxu0 0.0
      %531 = vmatprep.subr.mxu0 0.0
      %532 = vmatpush2.msra.mxu0 0.0
      %533 = vmatprep.subr.mxu0 0.0
      %534 = vmatpush2.msra.mxu0 0.0
      %535 = vmatprep.subr.mxu0 0.0
      %536 = vmatpush2.msra.mxu0 0.0
      %537 = vmatprep.subr.mxu0 0.0
      %538 = vmatpush2.msra.mxu0 0.0
      %539 = vmatprep.subr.mxu0 0.0
      %540 = vmatpush2.msra.mxu0 0.0
      %541 = vmatprep.subr.mxu0 0.0
      %542 = vmatpush2.msra.mxu0 0.0
      %543 = vmatprep.subr.mxu0 0.0
      %544 = vmatpush2.msra.mxu0 0.0
      %545 = vmatprep.subr.mxu0 0.0
      %546 = vmatpush2.msra.mxu0 0.0
      %547 = vmatprep.subr.mxu0 0.0
      %548 = vmatpush2.msra.mxu0 0.0
      %549 = vmatprep.subr.mxu0 0.0
      %550 = vmatpush2.msra.mxu0 0.0
      %551 = vmatprep.subr.mxu0 0.0
      %552 = vmatpush2.msra.mxu0 0.0
      %553 = vmatprep.mubr.f32.mxu0 0.0
      %554 = vmatmul.mubr.f32.gmra.mxu0 %v484
      %v555 = vpop.f32.mrf.mxu0
      %v556 = vadd.f32 %v474, %v555
      %v557 = vpop.f32.mrf.mxu0
      %558 = vmatprep.mubr.f32.mxu0 0.0
      %559 = vmatmul.mubr.f32.gmra.mxu0 %v487
      %v560 = vpop.f32.mrf.mxu0
      %v561 = vadd.f32 %v479, %v560
      %v562 = vpop.f32.mrf.mxu0
      %563 = vdwg.mxu0
      %v564 = vld [vmem:[%s4] sm:$0x1]
      %v566 = vlaneseq
      %v567 = vshrl.u32 %v566, 7
      %v568 = vsub.s32 0, %v567
      %v569 = vrot.slane %v564, %v568
      %v571 = vadd.f32 %v556, %v569
      %v572 = vadd.f32 %v561, %v569
      %v573 = vld [vmem:[#allocation3] sm:$0xff]
      %v574 = vld [vmem:[#allocation3 + $0x8] sm:$0xff]
      %v575 = vxor.u32 %v571, 2147483648
      %v576 = vxor.u32 %v572, 2147483648
      %v577 = vmul.f32 %v575, 1.442695
      %v578 = vpow.pop %v577
      %v579 = vmul.f32 %v576, 1.442695
      %v580 = vpow.pop %v579
      %v581 = vadd.f32 %v578, 1.0
      %v582 = vadd.f32 %v580, 1.0
      %v583 = vrcp.pop %v581
      %v584 = vmul.f32 1.0, %v583
      %v585 = vrcp.pop %v582
      %v586 = vmul.f32 1.0, %v585
      %v587 = vtanh.pop %v571
      %v588 = vtanh.pop %v572
      %591 = vrot.lane.b32.xlu0 %v573, 32
      %v592 = vpop.permute.xlu0 %591
      %593 = vrot.lane.b32.xlu0 %v574, 32
      %v594 = vpop.permute.xlu0 %593
      %v597 = vmul.f32 %v584, %v592
      %v598 = vmul.f32 %v586, %v594
      %601 = vrot.lane.b32.xlu0 %v587, 64
      %v602 = vpop.permute.xlu0 %601
      %603 = vrot.lane.b32.xlu0 %v588, 64
      %v604 = vpop.permute.xlu0 %603
      %v607 = vmul.f32 %v584, %v602
      %v608 = vmul.f32 %v586, %v604
      %611 = vrot.lane.b32.xlu0 %v607, 32
      %v612 = vpop.permute.xlu0 %611
      %613 = vrot.lane.b32.xlu0 %v608, 32
      %v614 = vpop.permute.xlu0 %613
      %v617 = vadd.f32 %v597, %v612
      %v618 = vadd.f32 %v598, %v614
      %v619 = vtanh.pop %v617
      %v620 = vtanh.pop %v618
      %623 = vrot.lane.b32.xlu0 %v619, 64
      %v624 = vpop.permute.xlu0 %623
      %625 = vrot.lane.b32.xlu0 %v620, 64
      %v626 = vpop.permute.xlu0 %625
      %v629 = vmul.f32 %v584, %v624
      %v630 = vmul.f32 %v586, %v626
      %633 = vrot.lane.b32.xlu0 %v629, 32
      %v634 = vpop.permute.xlu0 %633
      %635 = vrot.lane.b32.xlu0 %v630, 32
      %v636 = vpop.permute.xlu0 %635
      %639 = vst.msk [vmem:[#allocation2] sm:$0xff] %vm400, %v634
      %640 = vst.msk [vmem:[#allocation2 + $0x8] sm:$0xff] %vm400, %v636
      %643 = vrot.lane.b32.xlu0 %v617, 96
      %v644 = vpop.permute.xlu0 %643
      %645 = vrot.lane.b32.xlu0 %v618, 96
      %v646 = vpop.permute.xlu0 %645
      %649 = vst.msk [vmem:[#allocation3] sm:$0xff] %vm400, %v644
      %650 = vst.msk [vmem:[#allocation3 + $0x8] sm:$0xff] %vm400, %v646
      %651 = vst.msk [vmem:[%s370] sm:$0xff] %vm400, %v634
      %652 = vst.msk [vmem:[%s370 + $0x8] sm:$0xff] %vm400, %v636
      %v653 = vld [vmem:[%s364] sm:$0xff]
      %v654 = vld [vmem:[%s364 + $0x8] sm:$0xff]
      %v655 = vld [vmem:[%s5] sm:$0xff]
      %v656 = vld [vmem:[#allocation4] sm:$0xff]
      %v657 = vld [vmem:[#allocation4 + $0x8] sm:$0xff]
      %v658 = vld [vmem:[%s6] sm:$0xff]
      %v659 = vld [vmem:[%s6 + $0x8] sm:$0xff]
      %v660 = vld [vmem:[%s6 + $0x10] sm:$0xff]
      %v661 = vld [vmem:[%s6 + $0x18] sm:$0xff]
      %v663 = vsel %vm400, %v656, 0
      %v666 = vsel %vm400, %v657, 0
      %668 = vmatprep.subr.mxu0 0.0
      %669 = vmatpush1.msra.mxu0 0.0
      %670 = vmatprep.subr.mxu0 0.0
      %671 = vmatpush1.msra.mxu0 0.0
      %672 = vmatprep.subr.mxu0 0.0
      %673 = vmatpush1.msra.mxu0 0.0
      %674 = vmatprep.subr.mxu0 0.0
      %675 = vmatpush1.msra.mxu0 0.0
      %676 = vmatprep.subr.mxu0 0.0
      %677 = vmatpush1.msra.mxu0 0.0
      %678 = vmatprep.subr.mxu0 0.0
      %679 = vmatpush1.msra.mxu0 0.0
      %680 = vmatprep.subr.mxu0 0.0
      %681 = vmatpush1.msra.mxu0 0.0
      %682 = vmatprep.subr.mxu0 0.0
      %683 = vmatpush1.msra.mxu0 0.0
      %684 = vmatprep.subr.mxu0 0.0
      %685 = vmatpush1.msra.mxu0 0.0
      %686 = vmatprep.subr.mxu0 0.0
      %687 = vmatpush1.msra.mxu0 0.0
      %688 = vmatprep.subr.mxu0 0.0
      %689 = vmatpush1.msra.mxu0 0.0
      %690 = vmatprep.subr.mxu0 0.0
      %691 = vmatpush1.msra.mxu0 0.0
      %692 = vmatprep.subr.mxu0 0.0
      %693 = vmatpush1.msra.mxu0 %v661
      %694 = vmatprep.subr.mxu0 0.0
      %695 = vmatpush1.msra.mxu0 %v660
      %696 = vmatprep.subr.mxu0 0.0
      %697 = vmatpush1.msra.mxu0 %v659
      %698 = vmatprep.subr.mxu0 0.0
      %699 = vmatpush1.msra.mxu0 %v658
      %700 = vmatprep.subr.mxu0 0.0
      %701 = vmatpush2.msra.mxu0 0.0
      %702 = vmatprep.subr.mxu0 0.0
      %703 = vmatpush2.msra.mxu0 0.0
      %704 = vmatprep.subr.mxu0 0.0
      %705 = vmatpush2.msra.mxu0 0.0
      %706 = vmatprep.subr.mxu0 0.0
      %707 = vmatpush2.msra.mxu0 0.0
      %708 = vmatprep.subr.mxu0 0.0
      %709 = vmatpush2.msra.mxu0 0.0
      %710 = vmatprep.subr.mxu0 0.0
      %711 = vmatpush2.msra.mxu0 0.0
      %712 = vmatprep.subr.mxu0 0.0
      %713 = vmatpush2.msra.mxu0 0.0
      %714 = vmatprep.subr.mxu0 0.0
      %715 = vmatpush2.msra.mxu0 0.0
      %716 = vmatprep.subr.mxu0 0.0
      %717 = vmatpush2.msra.mxu0 0.0
      %718 = vmatprep.subr.mxu0 0.0
      %719 = vmatpush2.msra.mxu0 0.0
      %720 = vmatprep.subr.mxu0 0.0
      %721 = vmatpush2.msra.mxu0 0.0
      %722 = vmatprep.subr.mxu0 0.0
      %723 = vmatpush2.msra.mxu0 0.0
      %724 = vmatprep.subr.mxu0 0.0
      %725 = vmatpush2.msra.mxu0 0.0
      %726 = vmatprep.subr.mxu0 0.0
      %727 = vmatpush2.msra.mxu0 0.0
      %728 = vmatprep.subr.mxu0 0.0
      %729 = vmatpush2.msra.mxu0 0.0
      %730 = vmatprep.subr.mxu0 0.0
      %731 = vmatpush2.msra.mxu0 0.0
      %732 = vmatprep.mubr.f32.mxu0 0.0
      %733 = vmatmul.mubr.f32.gmra.mxu0 %v663
      %v734 = vpop.f32.mrf.mxu0
      %v735 = vadd.f32 0.0, %v734
      %v736 = vpop.f32.mrf.mxu0
      %737 = vmatprep.mubr.f32.mxu0 0.0
      %738 = vmatmul.mubr.f32.gmra.mxu0 %v666
      %v739 = vpop.f32.mrf.mxu0
      %v740 = vadd.f32 0.0, %v739
      %v741 = vpop.f32.mrf.mxu0
      %742 = vdwg.mxu0
      %v744 = vsel %vm482, %v653, 0
      %v747 = vsel %vm482, %v654, 0
      %749 = vmatprep.subr.mxu0 0.0
      %750 = vmatpush1.msra.mxu0 0.0
      %751 = vmatprep.subr.mxu0 0.0
      %752 = vmatpush1.msra.mxu0 0.0
      %753 = vmatprep.subr.mxu0 0.0
      %754 = vmatpush1.msra.mxu0 0.0
      %755 = vmatprep.subr.mxu0 0.0
      %756 = vmatpush1.msra.mxu0 0.0
      %757 = vmatprep.subr.mxu0 0.0
      %758 = vmatpush1.msra.mxu0 0.0
      %759 = vmatprep.subr.mxu0 0.0
      %760 = vmatpush1.msra.mxu0 0.0
      %761 = vmatprep.subr.mxu0 0.0
      %762 = vmatpush1.msra.mxu0 0.0
      %763 = vmatprep.subr.mxu0 0.0
      %764 = vmatpush1.msra.mxu0 0.0
      %765 = vmatprep.subr.mxu0 0.0
      %766 = vmatpush1.msra.mxu0 0.0
      %767 = vmatprep.subr.mxu0 0.0
      %768 = vmatpush1.msra.mxu0 0.0
      %769 = vmatprep.subr.mxu0 0.0
      %770 = vmatpush1.msra.mxu0 0.0
      %771 = vmatprep.subr.mxu0 0.0
      %772 = vmatpush1.msra.mxu0 0.0
      %773 = vmatprep.subr.mxu0 0.0
      %774 = vmatpush1.msra.mxu0 0.0
      %775 = vmatprep.subr.mxu0 0.0
      %776 = vmatpush1.msra.mxu0 0.0
      %777 = vmatprep.subr.mxu0 0.0
      %778 = vmatpush1.msra.mxu0 0.0
      %779 = vmatprep.subr.mxu0 0.0
      %780 = vmatpush1.msra.mxu0 %v655
      %781 = vmatprep.subr.mxu0 0.0
      %782 = vmatpush2.msra.mxu0 0.0
      %783 = vmatprep.subr.mxu0 0.0
      %784 = vmatpush2.msra.mxu0 0.0
      %785 = vmatprep.subr.mxu0 0.0
      %786 = vmatpush2.msra.mxu0 0.0
      %787 = vmatprep.subr.mxu0 0.0
      %788 = vmatpush2.msra.mxu0 0.0
      %789 = vmatprep.subr.mxu0 0.0
      %790 = vmatpush2.msra.mxu0 0.0
      %791 = vmatprep.subr.mxu0 0.0
      %792 = vmatpush2.msra.mxu0 0.0
      %793 = vmatprep.subr.mxu0 0.0
      %794 = vmatpush2.msra.mxu0 0.0
      %795 = vmatprep.subr.mxu0 0.0
      %796 = vmatpush2.msra.mxu0 0.0
      %797 = vmatprep.subr.mxu0 0.0
      %798 = vmatpush2.msra.mxu0 0.0
      %799 = vmatprep.subr.mxu0 0.0
      %800 = vmatpush2.msra.mxu0 0.0
      %801 = vmatprep.subr.mxu0 0.0
      %802 = vmatpush2.msra.mxu0 0.0
      %803 = vmatprep.subr.mxu0 0.0
      %804 = vmatpush2.msra.mxu0 0.0
      %805 = vmatprep.subr.mxu0 0.0
      %806 = vmatpush2.msra.mxu0 0.0
      %807 = vmatprep.subr.mxu0 0.0
      %808 = vmatpush2.msra.mxu0 0.0
      %809 = vmatprep.subr.mxu0 0.0
      %810 = vmatpush2.msra.mxu0 0.0
      %811 = vmatprep.subr.mxu0 0.0
      %812 = vmatpush2.msra.mxu0 0.0
      %813 = vmatprep.mubr.f32.mxu0 0.0
      %814 = vmatmul.mubr.f32.gmra.mxu0 %v744
      %v815 = vpop.f32.mrf.mxu0
      %v816 = vadd.f32 %v735, %v815
      %v817 = vpop.f32.mrf.mxu0
      %818 = vmatprep.mubr.f32.mxu0 0.0
      %819 = vmatmul.mubr.f32.gmra.mxu0 %v747
      %v820 = vpop.f32.mrf.mxu0
      %v821 = vadd.f32 %v740, %v820
      %v822 = vpop.f32.mrf.mxu0
      %823 = vdwg.mxu0
      %v824 = vld [vmem:[%s7] sm:$0x1]
      %v826 = vlaneseq
      %v827 = vshrl.u32 %v826, 7
      %v828 = vsub.s32 0, %v827
      %v829 = vrot.slane %v824, %v828
      %v831 = vadd.f32 %v816, %v829
      %v832 = vadd.f32 %v821, %v829
      %v833 = vld [vmem:[#allocation5] sm:$0xff]
      %v834 = vld [vmem:[#allocation5 + $0x8] sm:$0xff]
      %v835 = vxor.u32 %v831, 2147483648
      %v836 = vxor.u32 %v832, 2147483648
      %v837 = vmul.f32 %v835, 1.442695
      %v838 = vpow.pop %v837
      %v839 = vmul.f32 %v836, 1.442695
      %v840 = vpow.pop %v839
      %v841 = vadd.f32 %v838, 1.0
      %v842 = vadd.f32 %v840, 1.0
      %v843 = vrcp.pop %v841
      %v844 = vmul.f32 1.0, %v843
      %v845 = vrcp.pop %v842
      %v846 = vmul.f32 1.0, %v845
      %v847 = vtanh.pop %v831
      %v848 = vtanh.pop %v832
      %851 = vrot.lane.b32.xlu0 %v833, 32
      %v852 = vpop.permute.xlu0 %851
      %853 = vrot.lane.b32.xlu0 %v834, 32
      %v854 = vpop.permute.xlu0 %853
      %v857 = vmul.f32 %v844, %v852
      %v858 = vmul.f32 %v846, %v854
      %861 = vrot.lane.b32.xlu0 %v847, 64
      %v862 = vpop.permute.xlu0 %861
      %863 = vrot.lane.b32.xlu0 %v848, 64
      %v864 = vpop.permute.xlu0 %863
      %v867 = vmul.f32 %v844, %v862
      %v868 = vmul.f32 %v846, %v864
      %871 = vrot.lane.b32.xlu0 %v867, 32
      %v872 = vpop.permute.xlu0 %871
      %873 = vrot.lane.b32.xlu0 %v868, 32
      %v874 = vpop.permute.xlu0 %873
      %v877 = vadd.f32 %v857, %v872
      %v878 = vadd.f32 %v858, %v874
      %v879 = vtanh.pop %v877
      %v880 = vtanh.pop %v878
      %883 = vrot.lane.b32.xlu0 %v879, 64
      %v884 = vpop.permute.xlu0 %883
      %885 = vrot.lane.b32.xlu0 %v880, 64
      %v886 = vpop.permute.xlu0 %885
      %v889 = vmul.f32 %v844, %v884
      %v890 = vmul.f32 %v846, %v886
      %893 = vrot.lane.b32.xlu0 %v889, 32
      %v894 = vpop.permute.xlu0 %893
      %895 = vrot.lane.b32.xlu0 %v890, 32
      %v896 = vpop.permute.xlu0 %895
      %899 = vst.msk [vmem:[#allocation4] sm:$0xff] %vm400, %v894
      %900 = vst.msk [vmem:[#allocation4 + $0x8] sm:$0xff] %vm400, %v896
      %903 = vrot.lane.b32.xlu0 %v877, 96
      %v904 = vpop.permute.xlu0 %903
      %905 = vrot.lane.b32.xlu0 %v878, 96
      %v906 = vpop.permute.xlu0 %905
      %909 = vst.msk [vmem:[#allocation5] sm:$0xff] %vm400, %v904
      %910 = vst.msk [vmem:[#allocation5 + $0x8] sm:$0xff] %vm400, %v906
      %911 = vst.msk [vmem:[%s376] sm:$0xff] %vm400, %v894
      %912 = vst.msk [vmem:[%s376 + $0x8] sm:$0xff] %vm400, %v896
      %p913 = scmp.lt.s32.totalorder %s21, 15
      %s914 = scalar_select %p913, %s21, 15
      %s915 = smul.addr %s914, 2
      %s916 = smul.addr %s915, 8
      %s917 = scalar_lea.vmem %s8, %s916
      %s918 = ssub.s32 15, %s21
      %p919 = scmp.lt.s32.totalorder %s918, 15
      %s920 = scalar_select %p919, %s918, 15
      %s921 = smul.addr %s920, 2
      %s922 = smul.addr %s921, 8
      %s923 = scalar_lea.vmem %s9, %s922
      // Predicated region
      $region57: #{forward.7} parent=51 // pred_check
        %p924 = pneg %p219
      $region58: #{forward.7} parent=51 // pred_check_branch
        %926 = sbr.rel (%p924) target = $region60
      $region59: #{forward.7} parent=51 // pred_region
        _
      $region60: #{forward.7} parent=51 // pred_fallthru
        _
      // Predicated region
      $region61: #{forward.7} parent=51 // pred_check
        %p927 = pneg %p247
      $region62: #{forward.7} parent=51 // pred_check_branch
        %929 = sbr.rel (%p927) target = $region64
      $region63: #{forward.7} parent=51 // pred_region
        %s930 = ssub.s32 15, %s21
      $region64: #{forward.7} parent=51 // pred_fallthru
        _
    $region52: #{forward.7} parent=5 // pred_fallthru
      _
    %p931 = scmp.le.s32.totalorder 2, %s16
    // Predicated region
    $region65: #{forward.7} parent=5 // pred_check
      %p932 = pneg %p931
    $region66: #{forward.7} parent=5 // pred_check_branch
      %934 = sbr.rel (%p932) target = $region68
    $region67: #{forward.7} parent=5 // pred_region
      %s935 = ssub.s32 %s16, 2
      // Predicated region
      $region69: #{forward.7} parent=67 // pred_check
        %p936 = pneg %p225
      $region70: #{forward.7} parent=67 // pred_check_branch
        %938 = sbr.rel (%p936) target = $region72
      $region71: #{forward.7} parent=67 // pred_region
        %p939 = scmp.lt.s32.totalorder %s22, 15
        %s940 = scalar_select %p939, %s22, 15
        %s941 = smul.addr %s940, 2
        %s942 = smul.addr %s941, 8
        %s943 = scalar_lea.vmem %s8, %s942
      $region72: #{forward.7} parent=67 // pred_fallthru
        _
      // Predicated region
      $region73: #{forward.7} parent=67 // pred_check
        %p944 = pneg %p253
      $region74: #{forward.7} parent=67 // pred_check_branch
        %946 = sbr.rel (%p944) target = $region76
      $region75: #{forward.7} parent=67 // pred_region
        %s947 = ssub.s32 15, %s22
        %p948 = scmp.lt.s32.totalorder %s947, 15
        %s949 = scalar_select %p948, %s947, 15
        %s950 = smul.addr %s949, 2
        %s951 = smul.addr %s950, 8
        %s952 = scalar_lea.vmem %s9, %s951
      $region76: #{forward.7} parent=67 // pred_fallthru
        _
    $region68: #{forward.7} parent=5 // pred_fallthru
      _
  $region6: #{forward.7} parent=0 // loop_footer
    %s20 = sadd.s32 1, %s16
  $region7: #{forward.7} parent=0 // loop_footer_branch
    %15 = sbr.rel target = $region3
  $region8: #{forward.7} parent=0 // loop_exit
    _

// kernel: forward.10
$region0: #{forward.10}
  #allocation0 [shape = 'u32[]', space=smem, size = 0x4, offset = 0x4, fixed_abs, tag = 'smem constant byte address 0x4 - core index']
  #allocation1 [shape = 'u32[144,128]{1,0:T(1,128)}', space=vmem, size = 0x12000, scoped, tag = 'internal scratch']
  %s0 = inlined_call_operand.vmem [shape: f32[256,64], index: 0, kind: input, shape index: {}]
  %s1 = inlined_call_operand.vmem [shape: f32[64,32], index: 1, kind: input, shape index: {}]
  %s2 = inlined_call_operand.vmem [shape: f32[1,32], index: 2, kind: input, shape index: {}]
  %s3 = inlined_call_operand.vmem [shape: f32[256,32], index: 3, kind: output, shape index: {}]
  %s4 = sld [smem:[#allocation0]]
  $region22: #{forward.10} parent=0
    _
  %s6 = ssub.s32 1, %s4
  %s7 = scalar_select 0, %s6, %s4
  // Predicated region
  $region2: #{forward.10} parent=0 // pred_check
    _
  $region3: #{forward.10} parent=0 // pred_check_branch
    %9 = sbr.rel (0) target = $region5
  $region4: #{forward.10} parent=0 // pred_region
    _
  $region5: #{forward.10} parent=0 // pred_fallthru
    _
  // Predicated region
  $region6: #{forward.10} parent=0 // pred_check
    _
  $region7: #{forward.10} parent=0 // pred_check_branch
    %11 = sbr.rel (0) target = $region9
  $region8: #{forward.10} parent=0 // pred_region
    _
  $region9: #{forward.10} parent=0 // pred_fallthru
    _
  // Predicated region
  $region10: #{forward.10} parent=0 // pred_check
    _
  $region11: #{forward.10} parent=0 // pred_check_branch
    %13 = sbr.rel (0) target = $region13
  $region12: #{forward.10} parent=0 // pred_region
    _
  $region13: #{forward.10} parent=0 // pred_fallthru
    _
  %v14 = vld [vmem:[%s0] sm:$0xff]
  %v15 = vld [vmem:[%s0 + $0x8] sm:$0xff]
  %v16 = vld [vmem:[%s0 + $0x10] sm:$0xff]
  %v17 = vld [vmem:[%s0 + $0x18] sm:$0xff]
  %v18 = vld [vmem:[%s0 + $0x20] sm:$0xff]
  %v19 = vld [vmem:[%s0 + $0x28] sm:$0xff]
  %v20 = vld [vmem:[%s0 + $0x30] sm:$0xff]
  %v21 = vld [vmem:[%s0 + $0x38] sm:$0xff]
  %v22 = vld [vmem:[%s0 + $0x40] sm:$0xff]
  %v23 = vld [vmem:[%s0 + $0x48] sm:$0xff]
  %v24 = vld [vmem:[%s0 + $0x50] sm:$0xff]
  %v25 = vld [vmem:[%s0 + $0x58] sm:$0xff]
  %v26 = vld [vmem:[%s0 + $0x60] sm:$0xff]
  %v27 = vld [vmem:[%s0 + $0x68] sm:$0xff]
  %v28 = vld [vmem:[%s0 + $0x70] sm:$0xff]
  %v29 = vld [vmem:[%s0 + $0x78] sm:$0xff]
  %v30 = vld [vmem:[%s0 + $0x80] sm:$0xff]
  %v31 = vld [vmem:[%s0 + $0x88] sm:$0xff]
  %v32 = vld [vmem:[%s0 + $0x90] sm:$0xff]
  %v33 = vld [vmem:[%s0 + $0x98] sm:$0xff]
  %v34 = vld [vmem:[%s0 + $0xa0] sm:$0xff]
  %v35 = vld [vmem:[%s0 + $0xa8] sm:$0xff]
  %v36 = vld [vmem:[%s0 + $0xb0] sm:$0xff]
  %v37 = vld [vmem:[%s0 + $0xb8] sm:$0xff]
  %v38 = vld [vmem:[%s0 + $0xc0] sm:$0xff]
  %v39 = vld [vmem:[%s0 + $0xc8] sm:$0xff]
  %v40 = vld [vmem:[%s0 + $0xd0] sm:$0xff]
  %v41 = vld [vmem:[%s0 + $0xd8] sm:$0xff]
  %v42 = vld [vmem:[%s0 + $0xe0] sm:$0xff]
  %v43 = vld [vmem:[%s0 + $0xe8] sm:$0xff]
  %v44 = vld [vmem:[%s0 + $0xf0] sm:$0xff]
  %v45 = vld [vmem:[%s0 + $0xf8] sm:$0xff]
  %v46 = vld [vmem:[%s1] sm:$0xff]
  %v47 = vld [vmem:[%s1 + $0x8] sm:$0xff]
  %v48 = vld [vmem:[%s1 + $0x10] sm:$0xff]
  %v49 = vld [vmem:[%s1 + $0x18] sm:$0xff]
  %v50 = vld [vmem:[%s1 + $0x20] sm:$0xff]
  %v51 = vld [vmem:[%s1 + $0x28] sm:$0xff]
  %v52 = vld [vmem:[%s1 + $0x30] sm:$0xff]
  %v53 = vld [vmem:[%s1 + $0x38] sm:$0xff]
  %v54 = vld [vmem:[%s2] sm:$0x1]
  %v56 = vlaneseq
  %v57 = vshrl.u32 %v56, 7
  %v58 = vsub.s32 0, %v57
  %v59 = vrot.slane %v54, %v58
  %vm61 = vcmask 523264
  %v63 = vsel %vm61, %v14, 0
  %v66 = vsel %vm61, %v15, 0
  %v69 = vsel %vm61, %v16, 0
  %v72 = vsel %vm61, %v17, 0
  %v75 = vsel %vm61, %v18, 0
  %v78 = vsel %vm61, %v19, 0
  %v81 = vsel %vm61, %v20, 0
  %v84 = vsel %vm61, %v21, 0
  %v87 = vsel %vm61, %v22, 0
  %v90 = vsel %vm61, %v23, 0
  %v93 = vsel %vm61, %v24, 0
  %v96 = vsel %vm61, %v25, 0
  %v99 = vsel %vm61, %v26, 0
  %v102 = vsel %vm61, %v27, 0
  %v105 = vsel %vm61, %v28, 0
  %v108 = vsel %vm61, %v29, 0
  %v111 = vsel %vm61, %v30, 0
  %v114 = vsel %vm61, %v31, 0
  %v117 = vsel %vm61, %v32, 0
  %v120 = vsel %vm61, %v33, 0
  %v123 = vsel %vm61, %v34, 0
  %v126 = vsel %vm61, %v35, 0
  %v129 = vsel %vm61, %v36, 0
  %v132 = vsel %vm61, %v37, 0
  %v135 = vsel %vm61, %v38, 0
  %v138 = vsel %vm61, %v39, 0
  %v141 = vsel %vm61, %v40, 0
  %v144 = vsel %vm61, %v41, 0
  %v147 = vsel %vm61, %v42, 0
  %v150 = vsel %vm61, %v43, 0
  %v153 = vsel %vm61, %v44, 0
  %v156 = vsel %vm61, %v45, 0
  %158 = vmatprep.subr.mxu0 0.0
  %159 = vmatpush1.msra.mxu0 0.0
  %160 = vmatprep.subr.mxu0 0.0
  %161 = vmatpush1.msra.mxu0 0.0
  %162 = vmatprep.subr.mxu0 0.0
  %163 = vmatpush1.msra.mxu0 0.0
  %164 = vmatprep.subr.mxu0 0.0
  %165 = vmatpush1.msra.mxu0 0.0
  %166 = vmatprep.subr.mxu0 0.0
  %167 = vmatpush1.msra.mxu0 0.0
  %168 = vmatprep.subr.mxu0 0.0
  %169 = vmatpush1.msra.mxu0 0.0
  %170 = vmatprep.subr.mxu0 0.0
  %171 = vmatpush1.msra.mxu0 0.0
  %172 = vmatprep.subr.mxu0 0.0
  %173 = vmatpush1.msra.mxu0 0.0
  %174 = vmatprep.subr.mxu0 0.0
  %175 = vmatpush1.msra.mxu0 %v53
  %176 = vmatprep.subr.mxu0 0.0
  %177 = vmatpush1.msra.mxu0 %v52
  %178 = vmatprep.subr.mxu0 0.0
  %179 = vmatpush1.msra.mxu0 %v51
  %180 = vmatprep.subr.mxu0 0.0
  %181 = vmatpush1.msra.mxu0 %v50
  %182 = vmatprep.subr.mxu0 0.0
  %183 = vmatpush1.msra.mxu0 %v49
  %184 = vmatprep.subr.mxu0 0.0
  %185 = vmatpush1.msra.mxu0 %v48
  %186 = vmatprep.subr.mxu0 0.0
  %187 = vmatpush1.msra.mxu0 %v47
  %188 = vmatprep.subr.mxu0 0.0
  %189 = vmatpush1.msra.mxu0 %v46
  %190 = vmatprep.subr.mxu0 0.0
  %191 = vmatpush2.msra.mxu0 0.0
  %192 = vmatprep.subr.mxu0 0.0
  %193 = vmatpush2.msra.mxu0 0.0
  %194 = vmatprep.subr.mxu0 0.0
  %195 = vmatpush2.msra.mxu0 0.0
  %196 = vmatprep.subr.mxu0 0.0
  %197 = vmatpush2.msra.mxu0 0.0
  %198 = vmatprep.subr.mxu0 0.0
  %199 = vmatpush2.msra.mxu0 0.0
  %200 = vmatprep.subr.mxu0 0.0
  %201 = vmatpush2.msra.mxu0 0.0
  %202 = vmatprep.subr.mxu0 0.0
  %203 = vmatpush2.msra.mxu0 0.0
  %204 = vmatprep.subr.mxu0 0.0
  %205 = vmatpush2.msra.mxu0 0.0
  %206 = vmatprep.subr.mxu0 0.0
  %207 = vmatpush2.msra.mxu0 0.0
  %208 = vmatprep.subr.mxu0 0.0
  %209 = vmatpush2.msra.mxu0 0.0
  %210 = vmatprep.subr.mxu0 0.0
  %211 = vmatpush2.msra.mxu0 0.0
  %212 = vmatprep.subr.mxu0 0.0
  %213 = vmatpush2.msra.mxu0 0.0
  %214 = vmatprep.subr.mxu0 0.0
  %215 = vmatpush2.msra.mxu0 0.0
  %216 = vmatprep.subr.mxu0 0.0
  %217 = vmatpush2.msra.mxu0 0.0
  %218 = vmatprep.subr.mxu0 0.0
  %219 = vmatpush2.msra.mxu0 0.0
  %220 = vmatprep.subr.mxu0 0.0
  %221 = vmatpush2.msra.mxu0 0.0
  %222 = vmatprep.mubr.f32.mxu0 0.0
  %223 = vmatmul.mubr.f32.gmra.mxu0 %v63
  %v224 = vpop.f32.mrf.mxu0
  %v225 = vadd.f32 %v59, %v224
  %v226 = vpop.f32.mrf.mxu0
  %227 = vmatprep.mubr.f32.mxu0 0.0
  %228 = vmatmul.mubr.f32.gmra.mxu0 %v66
  %v229 = vpop.f32.mrf.mxu0
  %v230 = vadd.f32 %v59, %v229
  %v231 = vpop.f32.mrf.mxu0
  %232 = vmatprep.mubr.f32.mxu0 0.0
  %233 = vmatmul.mubr.f32.gmra.mxu0 %v69
  %v234 = vpop.f32.mrf.mxu0
  %v235 = vadd.f32 %v59, %v234
  %v236 = vpop.f32.mrf.mxu0
  %237 = vmatprep.mubr.f32.mxu0 0.0
  %238 = vmatmul.mubr.f32.gmra.mxu0 %v72
  %v239 = vpop.f32.mrf.mxu0
  %v240 = vadd.f32 %v59, %v239
  %v241 = vpop.f32.mrf.mxu0
  %242 = vmatprep.mubr.f32.mxu0 0.0
  %243 = vmatmul.mubr.f32.gmra.mxu0 %v75
  %v244 = vpop.f32.mrf.mxu0
  %v245 = vadd.f32 %v59, %v244
  %v246 = vpop.f32.mrf.mxu0
  %247 = vmatprep.mubr.f32.mxu0 0.0
  %248 = vmatmul.mubr.f32.gmra.mxu0 %v78
  %v249 = vpop.f32.mrf.mxu0
  %v250 = vadd.f32 %v59, %v249
  %v251 = vpop.f32.mrf.mxu0
  %252 = vmatprep.mubr.f32.mxu0 0.0
  %253 = vmatmul.mubr.f32.gmra.mxu0 %v81
  %v254 = vpop.f32.mrf.mxu0
  %v255 = vadd.f32 %v59, %v254
  %v256 = vpop.f32.mrf.mxu0
  %257 = vmatprep.mubr.f32.mxu0 0.0
  %258 = vmatmul.mubr.f32.gmra.mxu0 %v84
  %v259 = vpop.f32.mrf.mxu0
  %v260 = vadd.f32 %v59, %v259
  %v261 = vpop.f32.mrf.mxu0
  %262 = vmatprep.mubr.f32.mxu0 0.0
  %263 = vmatmul.mubr.f32.gmra.mxu0 %v87
  %v264 = vpop.f32.mrf.mxu0
  %v265 = vadd.f32 %v59, %v264
  %v266 = vpop.f32.mrf.mxu0
  %267 = vmatprep.mubr.f32.mxu0 0.0
  %268 = vmatmul.mubr.f32.gmra.mxu0 %v90
  %v269 = vpop.f32.mrf.mxu0
  %v270 = vadd.f32 %v59, %v269
  %v271 = vpop.f32.mrf.mxu0
  %272 = vmatprep.mubr.f32.mxu0 0.0
  %273 = vmatmul.mubr.f32.gmra.mxu0 %v93
  %v274 = vpop.f32.mrf.mxu0
  %v275 = vadd.f32 %v59, %v274
  %v276 = vpop.f32.mrf.mxu0
  %277 = vmatprep.mubr.f32.mxu0 0.0
  %278 = vmatmul.mubr.f32.gmra.mxu0 %v96
  %v279 = vpop.f32.mrf.mxu0
  %v280 = vadd.f32 %v59, %v279
  %v281 = vpop.f32.mrf.mxu0
  %282 = vmatprep.mubr.f32.mxu0 0.0
  %283 = vmatmul.mubr.f32.gmra.mxu0 %v99
  %v284 = vpop.f32.mrf.mxu0
  %v285 = vadd.f32 %v59, %v284
  %v286 = vpop.f32.mrf.mxu0
  %287 = vmatprep.mubr.f32.mxu0 0.0
  %288 = vmatmul.mubr.f32.gmra.mxu0 %v102
  %v289 = vpop.f32.mrf.mxu0
  %v290 = vadd.f32 %v59, %v289
  %v291 = vpop.f32.mrf.mxu0
  %292 = vmatprep.mubr.f32.mxu0 0.0
  %293 = vmatmul.mubr.f32.gmra.mxu0 %v105
  %v294 = vpop.f32.mrf.mxu0
  %v295 = vadd.f32 %v59, %v294
  %v296 = vpop.f32.mrf.mxu0
  %297 = vmatprep.mubr.f32.mxu0 0.0
  %298 = vmatmul.mubr.f32.gmra.mxu0 %v108
  %v299 = vpop.f32.mrf.mxu0
  %v300 = vadd.f32 %v59, %v299
  %v301 = vpop.f32.mrf.mxu0
  %302 = vmatprep.mubr.f32.mxu0 0.0
  %303 = vmatmul.mubr.f32.gmra.mxu0 %v111
  %v304 = vpop.f32.mrf.mxu0
  %v305 = vadd.f32 %v59, %v304
  %v306 = vpop.f32.mrf.mxu0
  %307 = vmatprep.mubr.f32.mxu0 0.0
  %308 = vmatmul.mubr.f32.gmra.mxu0 %v114
  %v309 = vpop.f32.mrf.mxu0
  %v310 = vadd.f32 %v59, %v309
  %v311 = vpop.f32.mrf.mxu0
  %312 = vmatprep.mubr.f32.mxu0 0.0
  %313 = vmatmul.mubr.f32.gmra.mxu0 %v117
  %v314 = vpop.f32.mrf.mxu0
  %v315 = vadd.f32 %v59, %v314
  %v316 = vpop.f32.mrf.mxu0
  %317 = vmatprep.mubr.f32.mxu0 0.0
  %318 = vmatmul.mubr.f32.gmra.mxu0 %v120
  %v319 = vpop.f32.mrf.mxu0
  %v320 = vadd.f32 %v59, %v319
  %v321 = vpop.f32.mrf.mxu0
  %322 = vmatprep.mubr.f32.mxu0 0.0
  %323 = vmatmul.mubr.f32.gmra.mxu0 %v123
  %v324 = vpop.f32.mrf.mxu0
  %v325 = vadd.f32 %v59, %v324
  %v326 = vpop.f32.mrf.mxu0
  %327 = vmatprep.mubr.f32.mxu0 0.0
  %328 = vmatmul.mubr.f32.gmra.mxu0 %v126
  %v329 = vpop.f32.mrf.mxu0
  %v330 = vadd.f32 %v59, %v329
  %v331 = vpop.f32.mrf.mxu0
  %332 = vmatprep.mubr.f32.mxu0 0.0
  %333 = vmatmul.mubr.f32.gmra.mxu0 %v129
  %v334 = vpop.f32.mrf.mxu0
  %v335 = vadd.f32 %v59, %v334
  %v336 = vpop.f32.mrf.mxu0
  %337 = vmatprep.mubr.f32.mxu0 0.0
  %338 = vmatmul.mubr.f32.gmra.mxu0 %v132
  %v339 = vpop.f32.mrf.mxu0
  %v340 = vadd.f32 %v59, %v339
  %v341 = vpop.f32.mrf.mxu0
  %342 = vmatprep.mubr.f32.mxu0 0.0
  %343 = vmatmul.mubr.f32.gmra.mxu0 %v135
  %v344 = vpop.f32.mrf.mxu0
  %v345 = vadd.f32 %v59, %v344
  %v346 = vpop.f32.mrf.mxu0
  %347 = vmatprep.mubr.f32.mxu0 0.0
  %348 = vmatmul.mubr.f32.gmra.mxu0 %v138
  %v349 = vpop.f32.mrf.mxu0
  %v350 = vadd.f32 %v59, %v349
  %v351 = vpop.f32.mrf.mxu0
  %352 = vmatprep.mubr.f32.mxu0 0.0
  %353 = vmatmul.mubr.f32.gmra.mxu0 %v141
  %v354 = vpop.f32.mrf.mxu0
  %v355 = vadd.f32 %v59, %v354
  %v356 = vpop.f32.mrf.mxu0
  %357 = vmatprep.mubr.f32.mxu0 0.0
  %358 = vmatmul.mubr.f32.gmra.mxu0 %v144
  %v359 = vpop.f32.mrf.mxu0
  %v360 = vadd.f32 %v59, %v359
  %v361 = vpop.f32.mrf.mxu0
  %362 = vmatprep.mubr.f32.mxu0 0.0
  %363 = vmatmul.mubr.f32.gmra.mxu0 %v147
  %v364 = vpop.f32.mrf.mxu0
  %v365 = vadd.f32 %v59, %v364
  %v366 = vpop.f32.mrf.mxu0
  %367 = vmatprep.mubr.f32.mxu0 0.0
  %368 = vmatmul.mubr.f32.gmra.mxu0 %v150
  %v369 = vpop.f32.mrf.mxu0
  %v370 = vadd.f32 %v59, %v369
  %v371 = vpop.f32.mrf.mxu0
  %372 = vmatprep.mubr.f32.mxu0 0.0
  %373 = vmatmul.mubr.f32.gmra.mxu0 %v153
  %v374 = vpop.f32.mrf.mxu0
  %v375 = vadd.f32 %v59, %v374
  %v376 = vpop.f32.mrf.mxu0
  %377 = vmatprep.mubr.f32.mxu0 0.0
  %378 = vmatmul.mubr.f32.gmra.mxu0 %v156
  %v379 = vpop.f32.mrf.mxu0
  %v380 = vadd.f32 %v59, %v379
  %v381 = vpop.f32.mrf.mxu0
  %382 = vdwg.mxu0
  %vm383 = vcmask 261120
  %384 = vst.msk [vmem:[%s3] sm:$0xff] %vm383, %v225
  %385 = vst.msk [vmem:[%s3 + $0x8] sm:$0xff] %vm383, %v230
  %386 = vst.msk [vmem:[%s3 + $0x10] sm:$0xff] %vm383, %v235
  %387 = vst.msk [vmem:[%s3 + $0x18] sm:$0xff] %vm383, %v240
  %388 = vst.msk [vmem:[%s3 + $0x20] sm:$0xff] %vm383, %v245
  %389 = vst.msk [vmem:[%s3 + $0x28] sm:$0xff] %vm383, %v250
  %390 = vst.msk [vmem:[%s3 + $0x30] sm:$0xff] %vm383, %v255
  %391 = vst.msk [vmem:[%s3 + $0x38] sm:$0xff] %vm383, %v260
  %392 = vst.msk [vmem:[%s3 + $0x40] sm:$0xff] %vm383, %v265
  %393 = vst.msk [vmem:[%s3 + $0x48] sm:$0xff] %vm383, %v270
  %394 = vst.msk [vmem:[%s3 + $0x50] sm:$0xff] %vm383, %v275
  %395 = vst.msk [vmem:[%s3 + $0x58] sm:$0xff] %vm383, %v280
  %396 = vst.msk [vmem:[%s3 + $0x60] sm:$0xff] %vm383, %v285
  %397 = vst.msk [vmem:[%s3 + $0x68] sm:$0xff] %vm383, %v290
  %398 = vst.msk [vmem:[%s3 + $0x70] sm:$0xff] %vm383, %v295
  %399 = vst.msk [vmem:[%s3 + $0x78] sm:$0xff] %vm383, %v300
  %400 = vst.msk [vmem:[%s3 + $0x80] sm:$0xff] %vm383, %v305
  %401 = vst.msk [vmem:[%s3 + $0x88] sm:$0xff] %vm383, %v310
  %402 = vst.msk [vmem:[%s3 + $0x90] sm:$0xff] %vm383, %v315
  %403 = vst.msk [vmem:[%s3 + $0x98] sm:$0xff] %vm383, %v320
  %404 = vst.msk [vmem:[%s3 + $0xa0] sm:$0xff] %vm383, %v325
  %405 = vst.msk [vmem:[%s3 + $0xa8] sm:$0xff] %vm383, %v330
  %406 = vst.msk [vmem:[%s3 + $0xb0] sm:$0xff] %vm383, %v335
  %407 = vst.msk [vmem:[%s3 + $0xb8] sm:$0xff] %vm383, %v340
  %408 = vst.msk [vmem:[%s3 + $0xc0] sm:$0xff] %vm383, %v345
  %409 = vst.msk [vmem:[%s3 + $0xc8] sm:$0xff] %vm383, %v350
  %410 = vst.msk [vmem:[%s3 + $0xd0] sm:$0xff] %vm383, %v355
  %411 = vst.msk [vmem:[%s3 + $0xd8] sm:$0xff] %vm383, %v360
  %412 = vst.msk [vmem:[%s3 + $0xe0] sm:$0xff] %vm383, %v365
  %413 = vst.msk [vmem:[%s3 + $0xe8] sm:$0xff] %vm383, %v370
  %414 = vst.msk [vmem:[%s3 + $0xf0] sm:$0xff] %vm383, %v375
  %415 = vst.msk [vmem:[%s3 + $0xf8] sm:$0xff] %vm383, %v380
  // Predicated region
  $region14: #{forward.10} parent=0 // pred_check
    _
  $region15: #{forward.10} parent=0 // pred_check_branch
    %417 = sbr.rel (0) target = $region17
  $region16: #{forward.10} parent=0 // pred_region
    _
  $region17: #{forward.10} parent=0 // pred_fallthru
    _
  // Predicated region
  $region18: #{forward.10} parent=0 // pred_check
    _
  $region19: #{forward.10} parent=0 // pred_check_branch
    %419 = sbr.rel (0) target = $region21
  $region20: #{forward.10} parent=0 // pred_region
    _
  $region21: #{forward.10} parent=0 // pred_fallthru
    _

// kernel: forward.11
$region0: #{forward.11}
  #allocation0 [shape = 'u32[]', space=smem, size = 0x4, offset = 0x4, fixed_abs, tag = 'smem constant byte address 0x4 - core index']
  #allocation1 [shape = 'u32[144,128]{1,0:T(1,128)}', space=vmem, size = 0x12000, scoped, tag = 'internal scratch']
  #allocation2 [shape = 'f32[2,32]{1,0:T(2,128)}', space=vmem, size = 0x400, scoped, tag = 'scratch operand']
  #allocation3 [shape = 'f32[2,32]{1,0:T(2,128)}', space=vmem, size = 0x400, scoped, tag = 'scratch operand']
  #allocation4 [shape = 'f32[2,32]{1,0:T(2,128)}', space=vmem, size = 0x400, scoped, tag = 'scratch operand']
  %s0 = inlined_call_operand.vmem [shape: f32[7,2,32], index: 0, kind: input, shape index: {}]
  %s1 = inlined_call_operand.vmem [shape: f32[2,32], index: 1, kind: input, shape index: {}]
  %s2 = inlined_call_operand.vmem [shape: f32[2,32], index: 2, kind: input, shape index: {}]
  %s3 = inlined_call_operand.vmem [shape: f32[2,32], index: 3, kind: input, shape index: {}]
  %s4 = inlined_call_operand.vmem [shape: f32[2,32,128], index: 4, kind: input, shape index: {}]
  %s5 = inlined_call_operand.vmem [shape: f32[2,128,64], index: 5, kind: input, shape index: {}]
  %s6 = inlined_call_operand.vmem [shape: f32[32,128], index: 6, kind: input, shape index: {}]
  %s7 = inlined_call_operand.vmem [shape: f32[32,128], index: 7, kind: input, shape index: {}]
  %s8 = inlined_call_operand.vmem [shape: f32[32,128], index: 8, kind: input, shape index: {}]
  %s9 = inlined_call_operand.vmem [shape: f32[1,128], index: 9, kind: input, shape index: {}]
  %s10 = inlined_call_operand.vmem [shape: f32[32,32], index: 10, kind: input, shape index: {}]
  %s11 = inlined_call_operand.vmem [shape: f32[64,32], index: 11, kind: input, shape index: {}]
  %s12 = inlined_call_operand.vmem [shape: f32[1,32], index: 12, kind: input, shape index: {}]
  %s13 = inlined_call_operand.vmem [shape: f32[32,128], index: 13, kind: input, shape index: {}]
  %s14 = inlined_call_operand.vmem [shape: f32[1,128], index: 14, kind: input, shape index: {}]
  %s15 = inlined_call_operand.vmem [shape: f32[7,2,128], index: 15, kind: output, shape index: {}]
  %s16 = sld [smem:[#allocation0]]
  $region97: #{forward.11} parent=0
    _
  %s18 = ssub.s32 1, %s16
  %s19 = scalar_select 0, %s18, %s16
  loop: start=0, step=1, limit=9
  $region2: #{forward.11} parent=0 // loop_pre_header
    _
  $region3: #{forward.11} parent=0 // loop_header
    %s21 = sphi 0, %s25
    %p22 = scmp.ge.s32.totalorder %s21, 9
    %s31 = sphi 0, %s33
    %s34 = sphi 0, %s31
    %s35 = sphi 0, %s34
    %s51 = sphi 0, %s35
    %s55 = sphi 0, %s55
    %s57 = sphi 0, %s55
    %s58 = sphi 0, %s57
    %s72 = sphi 0, %s58
    %s76 = sphi 0, %s76
    %s78 = sphi 0, %s76
    %s79 = sphi 0, %s78
    %s93 = sphi 0, %s79
    %s97 = sphi 0, %s97
    %s99 = sphi 0, %s97
    %s100 = sphi 0, %s99
    %s114 = sphi 0, %s100
    %s118 = sphi 0, %s118
    %s120 = sphi 0, %s118
    %s121 = sphi 0, %s120
    %s135 = sphi 0, %s121
    %s139 = sphi 0, %s139
    %s141 = sphi 0, %s139
    %s142 = sphi 0, %s141
    %s156 = sphi 0, %s142
    %s160 = sphi 0, %s160
    %s162 = sphi 0, %s160
    %s163 = sphi 0, %s162
    %s177 = sphi 0, %s163
    %s181 = sphi 0, %s181
    %s183 = sphi 0, %s181
    %s184 = sphi 0, %s183
    %s198 = sphi 0, %s184
    %s202 = sphi 0, %s202
    %s204 = sphi 0, %s202
    %s205 = sphi 0, %s204
    %s219 = sphi 0, %s205
    %s223 = sphi 0, %s223
    %s225 = sphi 0, %s223
    %s226 = sphi 0, %s225
    %s240 = sphi 0, %s226
    %s244 = sphi 0, %s244
    %s246 = sphi 0, %s244
    %s247 = sphi 0, %s246
    %s261 = sphi 0, %s247
    %s265 = sphi 0, %s265
    %s267 = sphi 0, %s265
    %s268 = sphi 0, %s267
    %s282 = sphi 0, %s268
    %s286 = sphi 0, %s286
    %s288 = sphi 0, %s286
    %s289 = sphi 0, %s288
    %s303 = sphi 0, %s289
    %s307 = sphi 0, %s307
    %s309 = sphi 0, %s307
    %s310 = sphi 0, %s309
    %s324 = sphi 0, %s310
    %s328 = sphi 0, %s328
    %s330 = sphi 0, %s328
    %s331 = sphi 0, %s330
    %s345 = sphi 0, %s331
    %s351 = sphi 0, %s353
    %s354 = sphi 0, %s351
    %s355 = sphi 0, %s354
    %s371 = sphi 0, %s355
  $region4: #{forward.11} parent=0 // loop_header_branch
    %24 = sbr.rel (%p22) target = $region8
  $region5: #{forward.11} parent=0 // loop_body
    %s26 = ssub.s32 %s21, 1
    %s27 = ssub.s32 %s21, 2
    %s28 = sadd.s32 %s21, 1
    %s29 = ssub.s32 %s21, %s28
    %p30 = scmp.eq.s32.totalorder %s29, 0
    %s32 = sadd.s32 %s31, 1
    %s33 = scalar_select %p30, %s31, %s32
    %p36 = pneg %p30
    %p37 = scmp.eq.s32.totalorder %s21, 6
    %p38 = por %p36, %p37
    %p39 = scmp.ne.s32.totalorder %s31, %s34
    %p40 = scmp.eq.s32.totalorder %s21, 0
    %p41 = por %p39, %p40
    %p42 = scmp.ne.s32.totalorder %s31, %s34
    %p43 = scmp.eq.s32.totalorder %s26, 6
    %p44 = por %p42, %p43
    %p45 = scmp.ne.s32.totalorder %s34, %s35
    %p46 = scmp.eq.s32.totalorder %s26, 0
    %p47 = por %p45, %p46
    %p48 = scmp.ne.s32.totalorder %s34, %s35
    %p49 = scmp.eq.s32.totalorder %s27, 6
    %p50 = por %p48, %p49
    %p52 = scmp.ne.s32.totalorder %s35, %s51
    %p53 = scmp.eq.s32.totalorder %s27, 0
    %p54 = por %p52, %p53
    %s56 = sadd.s32 %s55, 1
    %p59 = scmp.eq.s32.totalorder %s21, 6
    %p60 = scmp.ne.s32.totalorder %s55, %s57
    %p61 = scmp.eq.s32.totalorder %s21, 0
    %p62 = por %p60, %p61
    %p63 = scmp.ne.s32.totalorder %s55, %s57
    %p64 = scmp.eq.s32.totalorder %s26, 6
    %p65 = por %p63, %p64
    %p66 = scmp.ne.s32.totalorder %s57, %s58
    %p67 = scmp.eq.s32.totalorder %s26, 0
    %p68 = por %p66, %p67
    %p69 = scmp.ne.s32.totalorder %s57, %s58
    %p70 = scmp.eq.s32.totalorder %s27, 6
    %p71 = por %p69, %p70
    %p73 = scmp.ne.s32.totalorder %s58, %s72
    %p74 = scmp.eq.s32.totalorder %s27, 0
    %p75 = por %p73, %p74
    %s77 = sadd.s32 %s76, 1
    %p80 = scmp.eq.s32.totalorder %s21, 6
    %p81 = scmp.ne.s32.totalorder %s76, %s78
    %p82 = scmp.eq.s32.totalorder %s21, 0
    %p83 = por %p81, %p82
    %p84 = scmp.ne.s32.totalorder %s76, %s78
    %p85 = scmp.eq.s32.totalorder %s26, 6
    %p86 = por %p84, %p85
    %p87 = scmp.ne.s32.totalorder %s78, %s79
    %p88 = scmp.eq.s32.totalorder %s26, 0
    %p89 = por %p87, %p88
    %p90 = scmp.ne.s32.totalorder %s78, %s79
    %p91 = scmp.eq.s32.totalorder %s27, 6
    %p92 = por %p90, %p91
    %p94 = scmp.ne.s32.totalorder %s79, %s93
    %p95 = scmp.eq.s32.totalorder %s27, 0
    %p96 = por %p94, %p95
    %s98 = sadd.s32 %s97, 1
    %p101 = scmp.eq.s32.totalorder %s21, 6
    %p102 = scmp.ne.s32.totalorder %s97, %s99
    %p103 = scmp.eq.s32.totalorder %s21, 0
    %p104 = por %p102, %p103
    %p105 = scmp.ne.s32.totalorder %s97, %s99
    %p106 = scmp.eq.s32.totalorder %s26, 6
    %p107 = por %p105, %p106
    %p108 = scmp.ne.s32.totalorder %s99, %s100
    %p109 = scmp.eq.s32.totalorder %s26, 0
    %p110 = por %p108, %p109
    %p111 = scmp.ne.s32.totalorder %s99, %s100
    %p112 = scmp.eq.s32.totalorder %s27, 6
    %p113 = por %p111, %p112
    %p115 = scmp.ne.s32.totalorder %s100, %s114
    %p116 = scmp.eq.s32.totalorder %s27, 0
    %p117 = por %p115, %p116
    %s119 = sadd.s32 %s118, 1
    %p122 = scmp.eq.s32.totalorder %s21, 6
    %p123 = scmp.ne.s32.totalorder %s118, %s120
    %p124 = scmp.eq.s32.totalorder %s21, 0
    %p125 = por %p123, %p124
    %p126 = scmp.ne.s32.totalorder %s118, %s120
    %p127 = scmp.eq.s32.totalorder %s26, 6
    %p128 = por %p126, %p127
    %p129 = scmp.ne.s32.totalorder %s120, %s121
    %p130 = scmp.eq.s32.totalorder %s26, 0
    %p131 = por %p129, %p130
    %p132 = scmp.ne.s32.totalorder %s120, %s121
    %p133 = scmp.eq.s32.totalorder %s27, 6
    %p134 = por %p132, %p133
    %p136 = scmp.ne.s32.totalorder %s121, %s135
    %p137 = scmp.eq.s32.totalorder %s27, 0
    %p138 = por %p136, %p137
    %s140 = sadd.s32 %s139, 1
    %p143 = scmp.eq.s32.totalorder %s21, 6
    %p144 = scmp.ne.s32.totalorder %s139, %s141
    %p145 = scmp.eq.s32.totalorder %s21, 0
    %p146 = por %p144, %p145
    %p147 = scmp.ne.s32.totalorder %s139, %s141
    %p148 = scmp.eq.s32.totalorder %s26, 6
    %p149 = por %p147, %p148
    %p150 = scmp.ne.s32.totalorder %s141, %s142
    %p151 = scmp.eq.s32.totalorder %s26, 0
    %p152 = por %p150, %p151
    %p153 = scmp.ne.s32.totalorder %s141, %s142
    %p154 = scmp.eq.s32.totalorder %s27, 6
    %p155 = por %p153, %p154
    %p157 = scmp.ne.s32.totalorder %s142, %s156
    %p158 = scmp.eq.s32.totalorder %s27, 0
    %p159 = por %p157, %p158
    %s161 = sadd.s32 %s160, 1
    %p164 = scmp.eq.s32.totalorder %s21, 6
    %p165 = scmp.ne.s32.totalorder %s160, %s162
    %p166 = scmp.eq.s32.totalorder %s21, 0
    %p167 = por %p165, %p166
    %p168 = scmp.ne.s32.totalorder %s160, %s162
    %p169 = scmp.eq.s32.totalorder %s26, 6
    %p170 = por %p168, %p169
    %p171 = scmp.ne.s32.totalorder %s162, %s163
    %p172 = scmp.eq.s32.totalorder %s26, 0
    %p173 = por %p171, %p172
    %p174 = scmp.ne.s32.totalorder %s162, %s163
    %p175 = scmp.eq.s32.totalorder %s27, 6
    %p176 = por %p174, %p175
    %p178 = scmp.ne.s32.totalorder %s163, %s177
    %p179 = scmp.eq.s32.totalorder %s27, 0
    %p180 = por %p178, %p179
    %s182 = sadd.s32 %s181, 1
    %p185 = scmp.eq.s32.totalorder %s21, 6
    %p186 = scmp.ne.s32.totalorder %s181, %s183
    %p187 = scmp.eq.s32.totalorder %s21, 0
    %p188 = por %p186, %p187
    %p189 = scmp.ne.s32.totalorder %s181, %s183
    %p190 = scmp.eq.s32.totalorder %s26, 6
    %p191 = por %p189, %p190
    %p192 = scmp.ne.s32.totalorder %s183, %s184
    %p193 = scmp.eq.s32.totalorder %s26, 0
    %p194 = por %p192, %p193
    %p195 = scmp.ne.s32.totalorder %s183, %s184
    %p196 = scmp.eq.s32.totalorder %s27, 6
    %p197 = por %p195, %p196
    %p199 = scmp.ne.s32.totalorder %s184, %s198
    %p200 = scmp.eq.s32.totalorder %s27, 0
    %p201 = por %p199, %p200
    %s203 = sadd.s32 %s202, 1
    %p206 = scmp.eq.s32.totalorder %s21, 6
    %p207 = scmp.ne.s32.totalorder %s202, %s204
    %p208 = scmp.eq.s32.totalorder %s21, 0
    %p209 = por %p207, %p208
    %p210 = scmp.ne.s32.totalorder %s202, %s204
    %p211 = scmp.eq.s32.totalorder %s26, 6
    %p212 = por %p210, %p211
    %p213 = scmp.ne.s32.totalorder %s204, %s205
    %p214 = scmp.eq.s32.totalorder %s26, 0
    %p215 = por %p213, %p214
    %p216 = scmp.ne.s32.totalorder %s204, %s205
    %p217 = scmp.eq.s32.totalorder %s27, 6
    %p218 = por %p216, %p217
    %p220 = scmp.ne.s32.totalorder %s205, %s219
    %p221 = scmp.eq.s32.totalorder %s27, 0
    %p222 = por %p220, %p221
    %s224 = sadd.s32 %s223, 1
    %p227 = scmp.eq.s32.totalorder %s21, 6
    %p228 = scmp.ne.s32.totalorder %s223, %s225
    %p229 = scmp.eq.s32.totalorder %s21, 0
    %p230 = por %p228, %p229
    %p231 = scmp.ne.s32.totalorder %s223, %s225
    %p232 = scmp.eq.s32.totalorder %s26, 6
    %p233 = por %p231, %p232
    %p234 = scmp.ne.s32.totalorder %s225, %s226
    %p235 = scmp.eq.s32.totalorder %s26, 0
    %p236 = por %p234, %p235
    %p237 = scmp.ne.s32.totalorder %s225, %s226
    %p238 = scmp.eq.s32.totalorder %s27, 6
    %p239 = por %p237, %p238
    %p241 = scmp.ne.s32.totalorder %s226, %s240
    %p242 = scmp.eq.s32.totalorder %s27, 0
    %p243 = por %p241, %p242
    %s245 = sadd.s32 %s244, 1
    %p248 = scmp.eq.s32.totalorder %s21, 6
    %p249 = scmp.ne.s32.totalorder %s244, %s246
    %p250 = scmp.eq.s32.totalorder %s21, 0
    %p251 = por %p249, %p250
    %p252 = scmp.ne.s32.totalorder %s244, %s246
    %p253 = scmp.eq.s32.totalorder %s26, 6
    %p254 = por %p252, %p253
    %p255 = scmp.ne.s32.totalorder %s246, %s247
    %p256 = scmp.eq.s32.totalorder %s26, 0
    %p257 = por %p255, %p256
    %p258 = scmp.ne.s32.totalorder %s246, %s247
    %p259 = scmp.eq.s32.totalorder %s27, 6
    %p260 = por %p258, %p259
    %p262 = scmp.ne.s32.totalorder %s247, %s261
    %p263 = scmp.eq.s32.totalorder %s27, 0
    %p264 = por %p262, %p263
    %s266 = sadd.s32 %s265, 1
    %p269 = scmp.eq.s32.totalorder %s21, 6
    %p270 = scmp.ne.s32.totalorder %s265, %s267
    %p271 = scmp.eq.s32.totalorder %s21, 0
    %p272 = por %p270, %p271
    %p273 = scmp.ne.s32.totalorder %s265, %s267
    %p274 = scmp.eq.s32.totalorder %s26, 6
    %p275 = por %p273, %p274
    %p276 = scmp.ne.s32.totalorder %s267, %s268
    %p277 = scmp.eq.s32.totalorder %s26, 0
    %p278 = por %p276, %p277
    %p279 = scmp.ne.s32.totalorder %s267, %s268
    %p280 = scmp.eq.s32.totalorder %s27, 6
    %p281 = por %p279, %p280
    %p283 = scmp.ne.s32.totalorder %s268, %s282
    %p284 = scmp.eq.s32.totalorder %s27, 0
    %p285 = por %p283, %p284
    %s287 = sadd.s32 %s286, 1
    %p290 = scmp.eq.s32.totalorder %s21, 6
    %p291 = scmp.ne.s32.totalorder %s286, %s288
    %p292 = scmp.eq.s32.totalorder %s21, 0
    %p293 = por %p291, %p292
    %p294 = scmp.ne.s32.totalorder %s286, %s288
    %p295 = scmp.eq.s32.totalorder %s26, 6
    %p296 = por %p294, %p295
    %p297 = scmp.ne.s32.totalorder %s288, %s289
    %p298 = scmp.eq.s32.totalorder %s26, 0
    %p299 = por %p297, %p298
    %p300 = scmp.ne.s32.totalorder %s288, %s289
    %p301 = scmp.eq.s32.totalorder %s27, 6
    %p302 = por %p300, %p301
    %p304 = scmp.ne.s32.totalorder %s289, %s303
    %p305 = scmp.eq.s32.totalorder %s27, 0
    %p306 = por %p304, %p305
    %s308 = sadd.s32 %s307, 1
    %p311 = scmp.eq.s32.totalorder %s21, 6
    %p312 = scmp.ne.s32.totalorder %s307, %s309
    %p313 = scmp.eq.s32.totalorder %s21, 0
    %p314 = por %p312, %p313
    %p315 = scmp.ne.s32.totalorder %s307, %s309
    %p316 = scmp.eq.s32.totalorder %s26, 6
    %p317 = por %p315, %p316
    %p318 = scmp.ne.s32.totalorder %s309, %s310
    %p319 = scmp.eq.s32.totalorder %s26, 0
    %p320 = por %p318, %p319
    %p321 = scmp.ne.s32.totalorder %s309, %s310
    %p322 = scmp.eq.s32.totalorder %s27, 6
    %p323 = por %p321, %p322
    %p325 = scmp.ne.s32.totalorder %s310, %s324
    %p326 = scmp.eq.s32.totalorder %s27, 0
    %p327 = por %p325, %p326
    %s329 = sadd.s32 %s328, 1
    %p332 = scmp.eq.s32.totalorder %s21, 6
    %p333 = scmp.ne.s32.totalorder %s328, %s330
    %p334 = scmp.eq.s32.totalorder %s21, 0
    %p335 = por %p333, %p334
    %p336 = scmp.ne.s32.totalorder %s328, %s330
    %p337 = scmp.eq.s32.totalorder %s26, 6
    %p338 = por %p336, %p337
    %p339 = scmp.ne.s32.totalorder %s330, %s331
    %p340 = scmp.eq.s32.totalorder %s26, 0
    %p341 = por %p339, %p340
    %p342 = scmp.ne.s32.totalorder %s330, %s331
    %p343 = scmp.eq.s32.totalorder %s27, 6
    %p344 = por %p342, %p343
    %p346 = scmp.ne.s32.totalorder %s331, %s345
    %p347 = scmp.eq.s32.totalorder %s27, 0
    %p348 = por %p346, %p347
    %s349 = ssub.s32 %s21, %s28
    %p350 = scmp.eq.s32.totalorder %s349, 0
    %s352 = sadd.s32 %s351, 1
    %s353 = scalar_select %p350, %s351, %s352
    %p356 = pneg %p350
    %p357 = scmp.eq.s32.totalorder %s21, 6
    %p358 = por %p356, %p357
    %p359 = scmp.ne.s32.totalorder %s351, %s354
    %p360 = scmp.eq.s32.totalorder %s21, 0
    %p361 = por %p359, %p360
    %p362 = scmp.ne.s32.totalorder %s351, %s354
    %p363 = scmp.eq.s32.totalorder %s26, 6
    %p364 = por %p362, %p363
    %p365 = scmp.ne.s32.totalorder %s354, %s355
    %p366 = scmp.eq.s32.totalorder %s26, 0
    %p367 = por %p365, %p366
    %p368 = scmp.ne.s32.totalorder %s354, %s355
    %p369 = scmp.eq.s32.totalorder %s27, 6
    %p370 = por %p368, %p369
    %p372 = scmp.ne.s32.totalorder %s355, %s371
    %p373 = scmp.eq.s32.totalorder %s27, 0
    %p374 = por %p372, %p373
    %p375 = scmp.le.s32.totalorder 1, %s21
    %p376 = scmp.lt.s32.totalorder %s21, 8
    %p377 = pnand %p375, %p376
    %p378 = pneg %p377
    // Predicated region
    $region9: #{forward.11} parent=5 // pred_check
      _
    $region10: #{forward.11} parent=5 // pred_check_branch
      %380 = sbr.rel (%p377) target = $region12
    $region11: #{forward.11} parent=5 // pred_region
      %s381 = ssub.s32 %s21, 1
      // Predicated region
      $region13: #{forward.11} parent=11 // pred_check
        %p382 = pneg %p68
      $region14: #{forward.11} parent=11 // pred_check_branch
        %384 = sbr.rel (%p382) target = $region16
      $region15: #{forward.11} parent=11 // pred_region
        _
      $region16: #{forward.11} parent=11 // pred_fallthru
        _
      // Predicated region
      $region17: #{forward.11} parent=11 // pred_check
        %p385 = pneg %p89
      $region18: #{forward.11} parent=11 // pred_check_branch
        %387 = sbr.rel (%p385) target = $region20
      $region19: #{forward.11} parent=11 // pred_region
        _
      $region20: #{forward.11} parent=11 // pred_fallthru
        _
      // Predicated region
      $region21: #{forward.11} parent=11 // pred_check
        %p388 = pneg %p110
      $region22: #{forward.11} parent=11 // pred_check_branch
        %390 = sbr.rel (%p388) target = $region24
      $region23: #{forward.11} parent=11 // pred_region
        _
      $region24: #{forward.11} parent=11 // pred_fallthru
        _
      // Predicated region
      $region25: #{forward.11} parent=11 // pred_check
        %p391 = pneg %p131
      $region26: #{forward.11} parent=11 // pred_check_branch
        %393 = sbr.rel (%p391) target = $region28
      $region27: #{forward.11} parent=11 // pred_region
        _
      $region28: #{forward.11} parent=11 // pred_fallthru
        _
      // Predicated region
      $region29: #{forward.11} parent=11 // pred_check
        %p394 = pneg %p152
      $region30: #{forward.11} parent=11 // pred_check_branch
        %396 = sbr.rel (%p394) target = $region32
      $region31: #{forward.11} parent=11 // pred_region
        _
      $region32: #{forward.11} parent=11 // pred_fallthru
        _
      // Predicated region
      $region33: #{forward.11} parent=11 // pred_check
        %p397 = pneg %p173
      $region34: #{forward.11} parent=11 // pred_check_branch
        %399 = sbr.rel (%p397) target = $region36
      $region35: #{forward.11} parent=11 // pred_region
        _
      $region36: #{forward.11} parent=11 // pred_fallthru
        _
      // Predicated region
      $region37: #{forward.11} parent=11 // pred_check
        %p400 = pneg %p194
      $region38: #{forward.11} parent=11 // pred_check_branch
        %402 = sbr.rel (%p400) target = $region40
      $region39: #{forward.11} parent=11 // pred_region
        _
      $region40: #{forward.11} parent=11 // pred_fallthru
        _
      // Predicated region
      $region41: #{forward.11} parent=11 // pred_check
        %p403 = pneg %p215
      $region42: #{forward.11} parent=11 // pred_check_branch
        %405 = sbr.rel (%p403) target = $region44
      $region43: #{forward.11} parent=11 // pred_region
        _
      $region44: #{forward.11} parent=11 // pred_fallthru
        _
      // Predicated region
      $region45: #{forward.11} parent=11 // pred_check
        %p406 = pneg %p236
      $region46: #{forward.11} parent=11 // pred_check_branch
        %408 = sbr.rel (%p406) target = $region48
      $region47: #{forward.11} parent=11 // pred_region
        _
      $region48: #{forward.11} parent=11 // pred_fallthru
        _
      // Predicated region
      $region49: #{forward.11} parent=11 // pred_check
        %p409 = pneg %p257
      $region50: #{forward.11} parent=11 // pred_check_branch
        %411 = sbr.rel (%p409) target = $region52
      $region51: #{forward.11} parent=11 // pred_region
        _
      $region52: #{forward.11} parent=11 // pred_fallthru
        _
      // Predicated region
      $region53: #{forward.11} parent=11 // pred_check
        %p412 = pneg %p278
      $region54: #{forward.11} parent=11 // pred_check_branch
        %414 = sbr.rel (%p412) target = $region56
      $region55: #{forward.11} parent=11 // pred_region
        _
      $region56: #{forward.11} parent=11 // pred_fallthru
        _
      // Predicated region
      $region57: #{forward.11} parent=11 // pred_check
        %p415 = pneg %p299
      $region58: #{forward.11} parent=11 // pred_check_branch
        %417 = sbr.rel (%p415) target = $region60
      $region59: #{forward.11} parent=11 // pred_region
        _
      $region60: #{forward.11} parent=11 // pred_fallthru
        _
      // Predicated region
      $region61: #{forward.11} parent=11 // pred_check
        %p418 = pneg %p320
      $region62: #{forward.11} parent=11 // pred_check_branch
        %420 = sbr.rel (%p418) target = $region64
      $region63: #{forward.11} parent=11 // pred_region
        _
      $region64: #{forward.11} parent=11 // pred_fallthru
        _
      // Predicated region
      $region65: #{forward.11} parent=11 // pred_check
        %p421 = pneg %p341
      $region66: #{forward.11} parent=11 // pred_check_branch
        %423 = sbr.rel (%p421) target = $region68
      $region67: #{forward.11} parent=11 // pred_region
        _
      $region68: #{forward.11} parent=11 // pred_fallthru
        _
    $region12: #{forward.11} parent=5 // pred_fallthru
      _
    %p424 = scmp.lt.s32.totalorder %s21, 7
    // Predicated region
    $region69: #{forward.11} parent=5 // pred_check
      %p425 = pneg %p424
    $region70: #{forward.11} parent=5 // pred_check_branch
      %427 = sbr.rel (%p425) target = $region72
    $region71: #{forward.11} parent=5 // pred_region
      // Predicated region
      $region73: #{forward.11} parent=71 // pred_check
        %p428 = pneg %p41
      $region74: #{forward.11} parent=71 // pred_check_branch
        %430 = sbr.rel (%p428) target = $region76
      $region75: #{forward.11} parent=71 // pred_region
        %p431 = scmp.lt.s32.totalorder %s21, 6
        %s432 = scalar_select %p431, %s21, 6
        %s433 = smul.addr %s432, 2
        %s434 = scalar_lea.vmem %s0, %s433
      $region76: #{forward.11} parent=71 // pred_fallthru
        _
    $region72: #{forward.11} parent=5 // pred_fallthru
      _
    %p435 = scmp.le.s32.totalorder 1, %s21
    %p436 = scmp.lt.s32.totalorder %s21, 8
    %p437 = pnand %p435, %p436
    %p438 = pneg %p437
    // Predicated region
    $region77: #{forward.11} parent=5 // pred_check
      _
    $region78: #{forward.11} parent=5 // pred_check_branch
      %440 = sbr.rel (%p437) target = $region80
    $region79: #{forward.11} parent=5 // pred_region
      %s441 = ssub.s32 %s21, 1
      %p442 = scmp.lt.s32.totalorder %s26, 6
      %s443 = scalar_select %p442, %s26, 6
      %s444 = smul.addr %s443, 2
      %s445 = scalar_lea.vmem %s0, %s444
      %p446 = pneg %p47
      %p447 = pneg %p44
      %p448 = pneg %p68
      %p449 = pneg %p65
      %p450 = pneg %p89
      %p451 = pneg %p86
      %p452 = pneg %p110
      %p453 = pneg %p107
      %p454 = pneg %p131
      %p455 = pneg %p128
      %p456 = pneg %p152
      %p457 = pneg %p149
      %p458 = pneg %p173
      %p459 = pneg %p170
      %p460 = pneg %p194
      %p461 = pneg %p191
      %p462 = pneg %p215
      %p463 = pneg %p212
      %p464 = pneg %p236
      %p465 = pneg %p233
      %p466 = pneg %p257
      %p467 = pneg %p254
      %p468 = pneg %p278
      %p469 = pneg %p275
      %p470 = pneg %p299
      %p471 = pneg %p296
      %p472 = pneg %p320
      %p473 = pneg %p317
      %p474 = pneg %p341
      %p475 = pneg %p338
      %p476 = pneg %p367
      %p477 = pneg %p364
      %p478 = scmp.lt.s32.totalorder %s26, 6
      %s479 = scalar_select %p478, %s26, 6
      %s480 = smul.addr %s479, 2
      %s481 = scalar_lea.vmem %s15, %s480
      %p482 = scmp.lt.s32.totalorder %s26, 6
      %s483 = scalar_select %p482, %s26, 6
      %s484 = smul.addr %s483, 2
      %s485 = scalar_lea.vmem %s0, %s484
      %p486 = scmp.lt.s32.totalorder %s26, 6
      %s487 = scalar_select %p486, %s26, 6
      %s488 = smul.addr %s487, 2
      %s489 = scalar_lea.vmem %s15, %s488
      %p490 = scmp.eq.s32.totalorder %s26, 0
      // Predicated region
      $region81: #{forward.11} parent=79 // pred_check
        %p491 = pneg %p490
      $region82: #{forward.11} parent=79 // pred_check_branch
        %493 = sbr.rel (%p491) target = $region84
      $region83: #{forward.11} parent=79 // pred_region
        %v494 = vld [vmem:[%s1] sm:$0x3]
        %vm495 = vcmask 254976
        %496 = vst.msk [vmem:[#allocation2] sm:$0x3] %vm495, %v494
        %v497 = vld [vmem:[%s2] sm:$0x3]
        %498 = vst.msk [vmem:[#allocation3] sm:$0x3] %vm495, %v497
        %v499 = vld [vmem:[%s3] sm:$0x3]
        %500 = vst.msk [vmem:[#allocation4] sm:$0x3] %vm495, %v499
      $region84: #{forward.11} parent=79 // pred_fallthru
        _
      %v501 = vld [vmem:[%s485] sm:$0x3]
      %v502 = vld [vmem:[%s6] sm:$0xff]
      %v503 = vld [vmem:[%s6 + $0x8] sm:$0xff]
      %v504 = vld [vmem:[%s6 + $0x10] sm:$0xff]
      %v505 = vld [vmem:[%s6 + $0x18] sm:$0xff]
      %v506 = vld [vmem:[#allocation4] sm:$0x3]
      %v507 = vld [vmem:[%s7] sm:$0xff]
      %v508 = vld [vmem:[%s7 + $0x8] sm:$0xff]
      %v509 = vld [vmem:[%s7 + $0x10] sm:$0xff]
      %v510 = vld [vmem:[%s7 + $0x18] sm:$0xff]
      %vm511 = vcmask 261120
      %v513 = vsel %vm511, %v506, 0
      %515 = vmatprep.subr.mxu0 0.0
      %516 = vmatpush1.msra.mxu0 0.0
      %517 = vmatprep.subr.mxu0 0.0
      %518 = vmatpush1.msra.mxu0 0.0
      %519 = vmatprep.subr.mxu0 0.0
      %520 = vmatpush1.msra.mxu0 0.0
      %521 = vmatprep.subr.mxu0 0.0
      %522 = vmatpush1.msra.mxu0 0.0
      %523 = vmatprep.subr.mxu0 0.0
      %524 = vmatpush1.msra.mxu0 0.0
      %525 = vmatprep.subr.mxu0 0.0
      %526 = vmatpush1.msra.mxu0 0.0
      %527 = vmatprep.subr.mxu0 0.0
      %528 = vmatpush1.msra.mxu0 0.0
      %529 = vmatprep.subr.mxu0 0.0
      %530 = vmatpush1.msra.mxu0 0.0
      %531 = vmatprep.subr.mxu0 0.0
      %532 = vmatpush1.msra.mxu0 0.0
      %533 = vmatprep.subr.mxu0 0.0
      %534 = vmatpush1.msra.mxu0 0.0
      %535 = vmatprep.subr.mxu0 0.0
      %536 = vmatpush1.msra.mxu0 0.0
      %537 = vmatprep.subr.mxu0 0.0
      %538 = vmatpush1.msra.mxu0 0.0
      %539 = vmatprep.subr.mxu0 0.0
      %540 = vmatpush1.msra.mxu0 %v510
      %541 = vmatprep.subr.mxu0 0.0
      %542 = vmatpush1.msra.mxu0 %v509
      %543 = vmatprep.subr.mxu0 0.0
      %544 = vmatpush1.msra.mxu0 %v508
      %545 = vmatprep.subr.mxu0 0.0
      %546 = vmatpush1.msra.mxu0 %v507
      %547 = vmatprep.subr.mxu0 0.0
      %548 = vmatpush2.msra.mxu0 0.0
      %549 = vmatprep.subr.mxu0 0.0
      %550 = vmatpush2.msra.mxu0 0.0
      %551 = vmatprep.subr.mxu0 0.0
      %552 = vmatpush2.msra.mxu0 0.0
      %553 = vmatprep.subr.mxu0 0.0
      %554 = vmatpush2.msra.mxu0 0.0
      %555 = vmatprep.subr.mxu0 0.0
      %556 = vmatpush2.msra.mxu0 0.0
      %557 = vmatprep.subr.mxu0 0.0
      %558 = vmatpush2.msra.mxu0 0.0
      %559 = vmatprep.subr.mxu0 0.0
      %560 = vmatpush2.msra.mxu0 0.0
      %561 = vmatprep.subr.mxu0 0.0
      %562 = vmatpush2.msra.mxu0 0.0
      %563 = vmatprep.subr.mxu0 0.0
      %564 = vmatpush2.msra.mxu0 0.0
      %565 = vmatprep.subr.mxu0 0.0
      %566 = vmatpush2.msra.mxu0 0.0
      %567 = vmatprep.subr.mxu0 0.0
      %568 = vmatpush2.msra.mxu0 0.0
      %569 = vmatprep.subr.mxu0 0.0
      %570 = vmatpush2.msra.mxu0 0.0
      %571 = vmatprep.subr.mxu0 0.0
      %572 = vmatpush2.msra.mxu0 0.0
      %573 = vmatprep.subr.mxu0 0.0
      %574 = vmatpush2.msra.mxu0 0.0
      %575 = vmatprep.subr.mxu0 0.0
      %576 = vmatpush2.msra.mxu0 0.0
      %577 = vmatprep.subr.mxu0 0.0
      %578 = vmatpush2.msra.mxu0 0.0
      %579 = vmatprep.mubr.f32.mxu0 0.0
      %580 = vmatmul.mubr.f32.gmra.mxu0 %v513
      %v581 = vpop.f32.mrf.mxu0
      %v582 = vadd.f32 0.0, %v581
      %v583 = vpop.f32.mrf.mxu0
      %584 = vdwg.mxu0
      %v586 = vsel %vm511, %v501, 0
      %588 = vmatprep.subr.mxu0 0.0
      %589 = vmatpush1.msra.mxu0 0.0
      %590 = vmatprep.subr.mxu0 0.0
      %591 = vmatpush1.msra.mxu0 0.0
      %592 = vmatprep.subr.mxu0 0.0
      %593 = vmatpush1.msra.mxu0 0.0
      %594 = vmatprep.subr.mxu0 0.0
      %595 = vmatpush1.msra.mxu0 0.0
      %596 = vmatprep.subr.mxu0 0.0
      %597 = vmatpush1.msra.mxu0 0.0
      %598 = vmatprep.subr.mxu0 0.0
      %599 = vmatpush1.msra.mxu0 0.0
      %600 = vmatprep.subr.mxu0 0.0
      %601 = vmatpush1.msra.mxu0 0.0
      %602 = vmatprep.subr.mxu0 0.0
      %603 = vmatpush1.msra.mxu0 0.0
      %604 = vmatprep.subr.mxu0 0.0
      %605 = vmatpush1.msra.mxu0 0.0
      %606 = vmatprep.subr.mxu0 0.0
      %607 = vmatpush1.msra.mxu0 0.0
      %608 = vmatprep.subr.mxu0 0.0
      %609 = vmatpush1.msra.mxu0 0.0
      %610 = vmatprep.subr.mxu0 0.0
      %611 = vmatpush1.msra.mxu0 0.0
      %612 = vmatprep.subr.mxu0 0.0
      %613 = vmatpush1.msra.mxu0 %v505
      %614 = vmatprep.subr.mxu0 0.0
      %615 = vmatpush1.msra.mxu0 %v504
      %616 = vmatprep.subr.mxu0 0.0
      %617 = vmatpush1.msra.mxu0 %v503
      %618 = vmatprep.subr.mxu0 0.0
      %619 = vmatpush1.msra.mxu0 %v502
      %620 = vmatprep.subr.mxu0 0.0
      %621 = vmatpush2.msra.mxu0 0.0
      %622 = vmatprep.subr.mxu0 0.0
      %623 = vmatpush2.msra.mxu0 0.0
      %624 = vmatprep.subr.mxu0 0.0
      %625 = vmatpush2.msra.mxu0 0.0
      %626 = vmatprep.subr.mxu0 0.0
      %627 = vmatpush2.msra.mxu0 0.0
      %628 = vmatprep.subr.mxu0 0.0
      %629 = vmatpush2.msra.mxu0 0.0
      %630 = vmatprep.subr.mxu0 0.0
      %631 = vmatpush2.msra.mxu0 0.0
      %632 = vmatprep.subr.mxu0 0.0
      %633 = vmatpush2.msra.mxu0 0.0
      %634 = vmatprep.subr.mxu0 0.0
      %635 = vmatpush2.msra.mxu0 0.0
      %636 = vmatprep.subr.mxu0 0.0
      %637 = vmatpush2.msra.mxu0 0.0
      %638 = vmatprep.subr.mxu0 0.0
      %639 = vmatpush2.msra.mxu0 0.0
      %640 = vmatprep.subr.mxu0 0.0
      %641 = vmatpush2.msra.mxu0 0.0
      %642 = vmatprep.subr.mxu0 0.0
      %643 = vmatpush2.msra.mxu0 0.0
      %644 = vmatprep.subr.mxu0 0.0
      %645 = vmatpush2.msra.mxu0 0.0
      %646 = vmatprep.subr.mxu0 0.0
      %647 = vmatpush2.msra.mxu0 0.0
      %648 = vmatprep.subr.mxu0 0.0
      %649 = vmatpush2.msra.mxu0 0.0
      %650 = vmatprep.subr.mxu0 0.0
      %651 = vmatpush2.msra.mxu0 0.0
      %652 = vmatprep.mubr.f32.mxu0 0.0
      %653 = vmatmul.mubr.f32.gmra.mxu0 %v586
      %v654 = vpop.f32.mrf.mxu0
      %v655 = vadd.f32 %v582, %v654
      %v656 = vpop.f32.mrf.mxu0
      %657 = vdwg.mxu0
      %v658 = vld [vmem:[#allocation2] sm:$0x3]
      %v659 = vld [vmem:[%s8] sm:$0xff]
      %v660 = vld [vmem:[%s8 + $0x8] sm:$0xff]
      %v661 = vld [vmem:[%s8 + $0x10] sm:$0xff]
      %v662 = vld [vmem:[%s8 + $0x18] sm:$0xff]
      %v664 = vsel %vm511, %v658, 0
      %666 = vmatprep.subr.mxu0 0.0
      %667 = vmatpush1.msra.mxu0 0.0
      %668 = vmatprep.subr.mxu0 0.0
      %669 = vmatpush1.msra.mxu0 0.0
      %670 = vmatprep.subr.mxu0 0.0
      %671 = vmatpush1.msra.mxu0 0.0
      %672 = vmatprep.subr.mxu0 0.0
      %673 = vmatpush1.msra.mxu0 0.0
      %674 = vmatprep.subr.mxu0 0.0
      %675 = vmatpush1.msra.mxu0 0.0
      %676 = vmatprep.subr.mxu0 0.0
      %677 = vmatpush1.msra.mxu0 0.0
      %678 = vmatprep.subr.mxu0 0.0
      %679 = vmatpush1.msra.mxu0 0.0
      %680 = vmatprep.subr.mxu0 0.0
      %681 = vmatpush1.msra.mxu0 0.0
      %682 = vmatprep.subr.mxu0 0.0
      %683 = vmatpush1.msra.mxu0 0.0
      %684 = vmatprep.subr.mxu0 0.0
      %685 = vmatpush1.msra.mxu0 0.0
      %686 = vmatprep.subr.mxu0 0.0
      %687 = vmatpush1.msra.mxu0 0.0
      %688 = vmatprep.subr.mxu0 0.0
      %689 = vmatpush1.msra.mxu0 0.0
      %690 = vmatprep.subr.mxu0 0.0
      %691 = vmatpush1.msra.mxu0 %v662
      %692 = vmatprep.subr.mxu0 0.0
      %693 = vmatpush1.msra.mxu0 %v661
      %694 = vmatprep.subr.mxu0 0.0
      %695 = vmatpush1.msra.mxu0 %v660
      %696 = vmatprep.subr.mxu0 0.0
      %697 = vmatpush1.msra.mxu0 %v659
      %698 = vmatprep.subr.mxu0 0.0
      %699 = vmatpush2.msra.mxu0 0.0
      %700 = vmatprep.subr.mxu0 0.0
      %701 = vmatpush2.msra.mxu0 0.0
      %702 = vmatprep.subr.mxu0 0.0
      %703 = vmatpush2.msra.mxu0 0.0
      %704 = vmatprep.subr.mxu0 0.0
      %705 = vmatpush2.msra.mxu0 0.0
      %706 = vmatprep.subr.mxu0 0.0
      %707 = vmatpush2.msra.mxu0 0.0
      %708 = vmatprep.subr.mxu0 0.0
      %709 = vmatpush2.msra.mxu0 0.0
      %710 = vmatprep.subr.mxu0 0.0
      %711 = vmatpush2.msra.mxu0 0.0
      %712 = vmatprep.subr.mxu0 0.0
      %713 = vmatpush2.msra.mxu0 0.0
      %714 = vmatprep.subr.mxu0 0.0
      %715 = vmatpush2.msra.mxu0 0.0
      %716 = vmatprep.subr.mxu0 0.0
      %717 = vmatpush2.msra.mxu0 0.0
      %718 = vmatprep.subr.mxu0 0.0
      %719 = vmatpush2.msra.mxu0 0.0
      %720 = vmatprep.subr.mxu0 0.0
      %721 = vmatpush2.msra.mxu0 0.0
      %722 = vmatprep.subr.mxu0 0.0
      %723 = vmatpush2.msra.mxu0 0.0
      %724 = vmatprep.subr.mxu0 0.0
      %725 = vmatpush2.msra.mxu0 0.0
      %726 = vmatprep.subr.mxu0 0.0
      %727 = vmatpush2.msra.mxu0 0.0
      %728 = vmatprep.subr.mxu0 0.0
      %729 = vmatpush2.msra.mxu0 0.0
      %730 = vmatprep.mubr.f32.mxu0 0.0
      %731 = vmatmul.mubr.f32.gmra.mxu0 %v664
      %v732 = vpop.f32.mrf.mxu0
      %v733 = vadd.f32 0.0, %v732
      %v734 = vpop.f32.mrf.mxu0
      %735 = vdwg.mxu0
      %v736 = vadd.f32 %v655, %v733
      %v737 = vld [vmem:[%s9] sm:$0x1]
      %v739 = vlaneseq
      %v740 = vshrl.u32 %v739, 7
      %v741 = vsub.s32 0, %v740
      %v742 = vrot.slane %v737, %v741
      %v744 = vadd.f32 %v736, %v742
      %v745 = vld [vmem:[#allocation3] sm:$0x3]
      %v746 = vxor.u32 %v744, 2147483648
      %v747 = vmul.f32 %v746, 1.442695
      %v748 = vpow.pop %v747
      %v749 = vadd.f32 %v748, 1.0
      %v750 = vrcp.pop %v749
      %v751 = vmul.f32 1.0, %v750
      %v752 = vtanh.pop %v744
      %754 = vrot.lane.b32.xlu0 %v745, 32
      %v755 = vpop.permute.xlu0 %754
      %v757 = vmul.f32 %v751, %v755
      %759 = vrot.lane.b32.xlu0 %v752, 64
      %v760 = vpop.permute.xlu0 %759
      %v762 = vmul.f32 %v751, %v760
      %764 = vrot.lane.b32.xlu0 %v762, 32
      %v765 = vpop.permute.xlu0 %764
      %v767 = vadd.f32 %v757, %v765
      %v768 = vtanh.pop %v767
      %770 = vrot.lane.b32.xlu0 %v768, 64
      %v771 = vpop.permute.xlu0 %770
      %v773 = vmul.f32 %v751, %v771
      %775 = vrot.lane.b32.xlu0 %v773, 32
      %v776 = vpop.permute.xlu0 %775
      %vm778 = vcmask 254976
      %779 = vst.msk [vmem:[#allocation2] sm:$0x3] %vm778, %v776
      %781 = vrot.lane.b32.xlu0 %v767, 96
      %v782 = vpop.permute.xlu0 %781
      %784 = vst.msk [vmem:[#allocation3] sm:$0x3] %vm778, %v782
      %v785 = vld [vmem:[%s4] sm:$0xff]
      %v786 = vld [vmem:[%s4 + $0x8] sm:$0xff]
      %v787 = vld [vmem:[%s4 + $0x10] sm:$0xff]
      %v788 = vld [vmem:[%s4 + $0x18] sm:$0xff]
      %v789 = vsel %vm511, %v776, 0
      %791 = vmatprep.subr.mxu0 0.0
      %792 = vmatpush1.msra.mxu0 0.0
      %793 = vmatprep.subr.mxu0 0.0
      %794 = vmatpush1.msra.mxu0 0.0
      %795 = vmatprep.subr.mxu0 0.0
      %796 = vmatpush1.msra.mxu0 0.0
      %797 = vmatprep.subr.mxu0 0.0
      %798 = vmatpush1.msra.mxu0 0.0
      %799 = vmatprep.subr.mxu0 0.0
      %800 = vmatpush1.msra.mxu0 0.0
      %801 = vmatprep.subr.mxu0 0.0
      %802 = vmatpush1.msra.mxu0 0.0
      %803 = vmatprep.subr.mxu0 0.0
      %804 = vmatpush1.msra.mxu0 0.0
      %805 = vmatprep.subr.mxu0 0.0
      %806 = vmatpush1.msra.mxu0 0.0
      %807 = vmatprep.subr.mxu0 0.0
      %808 = vmatpush1.msra.mxu0 0.0
      %809 = vmatprep.subr.mxu0 0.0
      %810 = vmatpush1.msra.mxu0 0.0
      %811 = vmatprep.subr.mxu0 0.0
      %812 = vmatpush1.msra.mxu0 0.0
      %813 = vmatprep.subr.mxu0 0.0
      %814 = vmatpush1.msra.mxu0 0.0
      %815 = vmatprep.subr.mxu0 0.0
      %816 = vmatpush1.msra.mxu0 %v788
      %817 = vmatprep.subr.mxu0 0.0
      %818 = vmatpush1.msra.mxu0 %v787
      %819 = vmatprep.subr.mxu0 0.0
      %820 = vmatpush1.msra.mxu0 %v786
      %821 = vmatprep.subr.mxu0 0.0
      %822 = vmatpush1.msra.mxu0 %v785
      %823 = vmatprep.subr.mxu0 0.0
      %824 = vmatpush2.msra.mxu0 0.0
      %825 = vmatprep.subr.mxu0 0.0
      %826 = vmatpush2.msra.mxu0 0.0
      %827 = vmatprep.subr.mxu0 0.0
      %828 = vmatpush2.msra.mxu0 0.0
      %829 = vmatprep.subr.mxu0 0.0
      %830 = vmatpush2.msra.mxu0 0.0
      %831 = vmatprep.subr.mxu0 0.0
      %832 = vmatpush2.msra.mxu0 0.0
      %833 = vmatprep.subr.mxu0 0.0
      %834 = vmatpush2.msra.mxu0 0.0
      %835 = vmatprep.subr.mxu0 0.0
      %836 = vmatpush2.msra.mxu0 0.0
      %837 = vmatprep.subr.mxu0 0.0
      %838 = vmatpush2.msra.mxu0 0.0
      %839 = vmatprep.subr.mxu0 0.0
      %840 = vmatpush2.msra.mxu0 0.0
      %841 = vmatprep.subr.mxu0 0.0
      %842 = vmatpush2.msra.mxu0 0.0
      %843 = vmatprep.subr.mxu0 0.0
      %844 = vmatpush2.msra.mxu0 0.0
      %845 = vmatprep.subr.mxu0 0.0
      %846 = vmatpush2.msra.mxu0 0.0
      %847 = vmatprep.subr.mxu0 0.0
      %848 = vmatpush2.msra.mxu0 0.0
      %849 = vmatprep.subr.mxu0 0.0
      %850 = vmatpush2.msra.mxu0 0.0
      %851 = vmatprep.subr.mxu0 0.0
      %852 = vmatpush2.msra.mxu0 0.0
      %853 = vmatprep.subr.mxu0 0.0
      %854 = vmatpush2.msra.mxu0 0.0
      %855 = vmatprep.mubr.f32.mxu0 0.0
      %856 = vmatmul.mubr.f32.gmra.mxu0 %v789
      %v857 = vpop.f32.mrf.mxu0
      %v858 = vadd.f32 0.0, %v857
      %v859 = vpop.f32.mrf.mxu0
      %860 = vdwg.mxu0
      %vm861 = vcmask 1040384
      %v862 = vsel %vm861, %v858, -inf
      %863 = vmax.xlane.f32.xlu0 %v862
      %v864 = vpop.xlane.xlu0 %863
      %v865 = vsub.f32 %v858, %v864
      %v866 = vmul.f32 %v865, 1.442695
      %v867 = vpow.pop %v866
      %v868 = vsel %vm861, %v867, 0.0
      %869 = vadd.xlane.f32.xlu0 %v868
      %v870 = vpop.xlane.xlu0 %869
      %v871 = vrcp.pop %v870
      %v872 = vmul.f32 %v867, %v871
      %v873 = vld [vmem:[%s5] sm:$0xff]
      %v874 = vld [vmem:[%s5 + $0x8] sm:$0xff]
      %v875 = vld [vmem:[%s5 + $0x10] sm:$0xff]
      %v876 = vld [vmem:[%s5 + $0x18] sm:$0xff]
      %v877 = vld [vmem:[%s5 + $0x20] sm:$0xff]
      %v878 = vld [vmem:[%s5 + $0x28] sm:$0xff]
      %v879 = vld [vmem:[%s5 + $0x30] sm:$0xff]
      %v880 = vld [vmem:[%s5 + $0x38] sm:$0xff]
      %v881 = vld [vmem:[%s5 + $0x40] sm:$0xff]
      %v882 = vld [vmem:[%s5 + $0x48] sm:$0xff]
      %v883 = vld [vmem:[%s5 + $0x50] sm:$0xff]
      %v884 = vld [vmem:[%s5 + $0x58] sm:$0xff]
      %v885 = vld [vmem:[%s5 + $0x60] sm:$0xff]
      %v886 = vld [vmem:[%s5 + $0x68] sm:$0xff]
      %v887 = vld [vmem:[%s5 + $0x70] sm:$0xff]
      %v888 = vld [vmem:[%s5 + $0x78] sm:$0xff]
      %889 = vmatprep.subr.mxu0 0.0
      %890 = vmatpush1.msra.mxu0 %v888
      %891 = vmatprep.subr.mxu0 0.0
      %892 = vmatpush1.msra.mxu0 %v887
      %893 = vmatprep.subr.mxu0 0.0
      %894 = vmatpush1.msra.mxu0 %v886
      %895 = vmatprep.subr.mxu0 0.0
      %896 = vmatpush1.msra.mxu0 %v885
      %897 = vmatprep.subr.mxu0 0.0
      %898 = vmatpush1.msra.mxu0 %v884
      %899 = vmatprep.subr.mxu0 0.0
      %900 = vmatpush1.msra.mxu0 %v883
      %901 = vmatprep.subr.mxu0 0.0
      %902 = vmatpush1.msra.mxu0 %v882
      %903 = vmatprep.subr.mxu0 0.0
      %904 = vmatpush1.msra.mxu0 %v881
      %905 = vmatprep.subr.mxu0 0.0
      %906 = vmatpush1.msra.mxu0 %v880
      %907 = vmatprep.subr.mxu0 0.0
      %908 = vmatpush1.msra.mxu0 %v879
      %909 = vmatprep.subr.mxu0 0.0
      %910 = vmatpush1.msra.mxu0 %v878
      %911 = vmatprep.subr.mxu0 0.0
      %912 = vmatpush1.msra.mxu0 %v877
      %913 = vmatprep.subr.mxu0 0.0
      %914 = vmatpush1.msra.mxu0 %v876
      %915 = vmatprep.subr.mxu0 0.0
      %916 = vmatpush1.msra.mxu0 %v875
      %917 = vmatprep.subr.mxu0 0.0
      %918 = vmatpush1.msra.mxu0 %v874
      %919 = vmatprep.subr.mxu0 0.0
      %920 = vmatpush1.msra.mxu0 %v873
      %921 = vmatprep.subr.mxu0 0.0
      %922 = vmatpush2.msra.mxu0 0.0
      %923 = vmatprep.subr.mxu0 0.0
      %924 = vmatpush2.msra.mxu0 0.0
      %925 = vmatprep.subr.mxu0 0.0
      %926 = vmatpush2.msra.mxu0 0.0
      %927 = vmatprep.subr.mxu0 0.0
      %928 = vmatpush2.msra.mxu0 0.0
      %929 = vmatprep.subr.mxu0 0.0
      %930 = vmatpush2.msra.mxu0 0.0
      %931 = vmatprep.subr.mxu0 0.0
      %932 = vmatpush2.msra.mxu0 0.0
      %933 = vmatprep.subr.mxu0 0.0
      %934 = vmatpush2.msra.mxu0 0.0
      %935 = vmatprep.subr.mxu0 0.0
      %936 = vmatpush2.msra.mxu0 0.0
      %937 = vmatprep.subr.mxu0 0.0
      %938 = vmatpush2.msra.mxu0 0.0
      %939 = vmatprep.subr.mxu0 0.0
      %940 = vmatpush2.msra.mxu0 0.0
      %941 = vmatprep.subr.mxu0 0.0
      %942 = vmatpush2.msra.mxu0 0.0
      %943 = vmatprep.subr.mxu0 0.0
      %944 = vmatpush2.msra.mxu0 0.0
      %945 = vmatprep.subr.mxu0 0.0
      %946 = vmatpush2.msra.mxu0 0.0
      %947 = vmatprep.subr.mxu0 0.0
      %948 = vmatpush2.msra.mxu0 0.0
      %949 = vmatprep.subr.mxu0 0.0
      %950 = vmatpush2.msra.mxu0 0.0
      %951 = vmatprep.subr.mxu0 0.0
      %952 = vmatpush2.msra.mxu0 0.0
      %953 = vmatprep.mubr.f32.mxu0 0.0
      %954 = vmatmul.mubr.f32.gmra.mxu0 %v872
      %v955 = vpop.f32.mrf.mxu0
      %v956 = vadd.f32 0.0, %v955
      %v957 = vpop.f32.mrf.mxu0
      %958 = vdwg.mxu0
      %s959 = scalar_lea.vmem %s4, 32
      %v960 = vld [vmem:[%s959] sm:$0xff]
      %v961 = vld [vmem:[%s959 + $0x8] sm:$0xff]
      %v962 = vld [vmem:[%s959 + $0x10] sm:$0xff]
      %v963 = vld [vmem:[%s959 + $0x18] sm:$0xff]
      %v964 = vrot.slane %v773, 1
      %965 = vrot.lane.b32.xlu0 %v964, 32
      %v966 = vpop.permute.xlu0 %965
      %v967 = vsel %vm511, %v966, 0
      %969 = vmatprep.subr.mxu0 0.0
      %970 = vmatpush1.msra.mxu0 0.0
      %971 = vmatprep.subr.mxu0 0.0
      %972 = vmatpush1.msra.mxu0 0.0
      %973 = vmatprep.subr.mxu0 0.0
      %974 = vmatpush1.msra.mxu0 0.0
      %975 = vmatprep.subr.mxu0 0.0
      %976 = vmatpush1.msra.mxu0 0.0
      %977 = vmatprep.subr.mxu0 0.0
      %978 = vmatpush1.msra.mxu0 0.0
      %979 = vmatprep.subr.mxu0 0.0
      %980 = vmatpush1.msra.mxu0 0.0
      %981 = vmatprep.subr.mxu0 0.0
      %982 = vmatpush1.msra.mxu0 0.0
      %983 = vmatprep.subr.mxu0 0.0
      %984 = vmatpush1.msra.mxu0 0.0
      %985 = vmatprep.subr.mxu0 0.0
      %986 = vmatpush1.msra.mxu0 0.0
      %987 = vmatprep.subr.mxu0 0.0
      %988 = vmatpush1.msra.mxu0 0.0
      %989 = vmatprep.subr.mxu0 0.0
      %990 = vmatpush1.msra.mxu0 0.0
      %991 = vmatprep.subr.mxu0 0.0
      %992 = vmatpush1.msra.mxu0 0.0
      %993 = vmatprep.subr.mxu0 0.0
      %994 = vmatpush1.msra.mxu0 %v963
      %995 = vmatprep.subr.mxu0 0.0
      %996 = vmatpush1.msra.mxu0 %v962
      %997 = vmatprep.subr.mxu0 0.0
      %998 = vmatpush1.msra.mxu0 %v961
      %999 = vmatprep.subr.mxu0 0.0
      %1000 = vmatpush1.msra.mxu0 %v960
      %1001 = vmatprep.subr.mxu0 0.0
      %1002 = vmatpush2.msra.mxu0 0.0
      %1003 = vmatprep.subr.mxu0 0.0
      %1004 = vmatpush2.msra.mxu0 0.0
      %1005 = vmatprep.subr.mxu0 0.0
      %1006 = vmatpush2.msra.mxu0 0.0
      %1007 = vmatprep.subr.mxu0 0.0
      %1008 = vmatpush2.msra.mxu0 0.0
      %1009 = vmatprep.subr.mxu0 0.0
      %1010 = vmatpush2.msra.mxu0 0.0
      %1011 = vmatprep.subr.mxu0 0.0
      %1012 = vmatpush2.msra.mxu0 0.0
      %1013 = vmatprep.subr.mxu0 0.0
      %1014 = vmatpush2.msra.mxu0 0.0
      %1015 = vmatprep.subr.mxu0 0.0
      %1016 = vmatpush2.msra.mxu0 0.0
      %1017 = vmatprep.subr.mxu0 0.0
      %1018 = vmatpush2.msra.mxu0 0.0
      %1019 = vmatprep.subr.mxu0 0.0
      %1020 = vmatpush2.msra.mxu0 0.0
      %1021 = vmatprep.subr.mxu0 0.0
      %1022 = vmatpush2.msra.mxu0 0.0
      %1023 = vmatprep.subr.mxu0 0.0
      %1024 = vmatpush2.msra.mxu0 0.0
      %1025 = vmatprep.subr.mxu0 0.0
      %1026 = vmatpush2.msra.mxu0 0.0
      %1027 = vmatprep.subr.mxu0 0.0
      %1028 = vmatpush2.msra.mxu0 0.0
      %1029 = vmatprep.subr.mxu0 0.0
      %1030 = vmatpush2.msra.mxu0 0.0
      %1031 = vmatprep.subr.mxu0 0.0
      %1032 = vmatpush2.msra.mxu0 0.0
      %1033 = vmatprep.mubr.f32.mxu0 0.0
      %1034 = vmatmul.mubr.f32.gmra.mxu0 %v967
      %v1035 = vpop.f32.mrf.mxu0
      %v1036 = vadd.f32 0.0, %v1035
      %v1037 = vpop.f32.mrf.mxu0
      %1038 = vdwg.mxu0
      %v1039 = vsel %vm861, %v1036, -inf
      %1040 = vmax.xlane.f32.xlu0 %v1039
      %v1041 = vpop.xlane.xlu0 %1040
      %v1042 = vsub.f32 %v1036, %v1041
      %v1043 = vmul.f32 %v1042, 1.442695
      %v1044 = vpow.pop %v1043
      %v1045 = vsel %vm861, %v1044, 0.0
      %1046 = vadd.xlane.f32.xlu0 %v1045
      %v1047 = vpop.xlane.xlu0 %1046
      %v1048 = vrcp.pop %v1047
      %v1049 = vmul.f32 %v1044, %v1048
      %s1050 = scalar_lea.vmem %s5, 128
      %v1051 = vld [vmem:[%s1050] sm:$0xff]
      %v1052 = vld [vmem:[%s1050 + $0x8] sm:$0xff]
      %v1053 = vld [vmem:[%s1050 + $0x10] sm:$0xff]
      %v1054 = vld [vmem:[%s1050 + $0x18] sm:$0xff]
      %v1055 = vld [vmem:[%s1050 + $0x20] sm:$0xff]
      %v1056 = vld [vmem:[%s1050 + $0x28] sm:$0xff]
      %v1057 = vld [vmem:[%s1050 + $0x30] sm:$0xff]
      %v1058 = vld [vmem:[%s1050 + $0x38] sm:$0xff]
      %v1059 = vld [vmem:[%s1050 + $0x40] sm:$0xff]
      %v1060 = vld [vmem:[%s1050 + $0x48] sm:$0xff]
      %v1061 = vld [vmem:[%s1050 + $0x50] sm:$0xff]
      %v1062 = vld [vmem:[%s1050 + $0x58] sm:$0xff]
      %v1063 = vld [vmem:[%s1050 + $0x60] sm:$0xff]
      %v1064 = vld [vmem:[%s1050 + $0x68] sm:$0xff]
      %v1065 = vld [vmem:[%s1050 + $0x70] sm:$0xff]
      %v1066 = vld [vmem:[%s1050 + $0x78] sm:$0xff]
      %1067 = vmatprep.subr.mxu0 0.0
      %1068 = vmatpush1.msra.mxu0 %v1066
      %1069 = vmatprep.subr.mxu0 0.0
      %1070 = vmatpush1.msra.mxu0 %v1065
      %1071 = vmatprep.subr.mxu0 0.0
      %1072 = vmatpush1.msra.mxu0 %v1064
      %1073 = vmatprep.subr.mxu0 0.0
      %1074 = vmatpush1.msra.mxu0 %v1063
      %1075 = vmatprep.subr.mxu0 0.0
      %1076 = vmatpush1.msra.mxu0 %v1062
      %1077 = vmatprep.subr.mxu0 0.0
      %1078 = vmatpush1.msra.mxu0 %v1061
      %1079 = vmatprep.subr.mxu0 0.0
      %1080 = vmatpush1.msra.mxu0 %v1060
      %1081 = vmatprep.subr.mxu0 0.0
      %1082 = vmatpush1.msra.mxu0 %v1059
      %1083 = vmatprep.subr.mxu0 0.0
      %1084 = vmatpush1.msra.mxu0 %v1058
      %1085 = vmatprep.subr.mxu0 0.0
      %1086 = vmatpush1.msra.mxu0 %v1057
      %1087 = vmatprep.subr.mxu0 0.0
      %1088 = vmatpush1.msra.mxu0 %v1056
      %1089 = vmatprep.subr.mxu0 0.0
      %1090 = vmatpush1.msra.mxu0 %v1055
      %1091 = vmatprep.subr.mxu0 0.0
      %1092 = vmatpush1.msra.mxu0 %v1054
      %1093 = vmatprep.subr.mxu0 0.0
      %1094 = vmatpush1.msra.mxu0 %v1053
      %1095 = vmatprep.subr.mxu0 0.0
      %1096 = vmatpush1.msra.mxu0 %v1052
      %1097 = vmatprep.subr.mxu0 0.0
      %1098 = vmatpush1.msra.mxu0 %v1051
      %1099 = vmatprep.subr.mxu0 0.0
      %1100 = vmatpush2.msra.mxu0 0.0
      %1101 = vmatprep.subr.mxu0 0.0
      %1102 = vmatpush2.msra.mxu0 0.0
      %1103 = vmatprep.subr.mxu0 0.0
      %1104 = vmatpush2.msra.mxu0 0.0
      %1105 = vmatprep.subr.mxu0 0.0
      %1106 = vmatpush2.msra.mxu0 0.0
      %1107 = vmatprep.subr.mxu0 0.0
      %1108 = vmatpush2.msra.mxu0 0.0
      %1109 = vmatprep.subr.mxu0 0.0
      %1110 = vmatpush2.msra.mxu0 0.0
      %1111 = vmatprep.subr.mxu0 0.0
      %1112 = vmatpush2.msra.mxu0 0.0
      %1113 = vmatprep.subr.mxu0 0.0
      %1114 = vmatpush2.msra.mxu0 0.0
      %1115 = vmatprep.subr.mxu0 0.0
      %1116 = vmatpush2.msra.mxu0 0.0
      %1117 = vmatprep.subr.mxu0 0.0
      %1118 = vmatpush2.msra.mxu0 0.0
      %1119 = vmatprep.subr.mxu0 0.0
      %1120 = vmatpush2.msra.mxu0 0.0
      %1121 = vmatprep.subr.mxu0 0.0
      %1122 = vmatpush2.msra.mxu0 0.0
      %1123 = vmatprep.subr.mxu0 0.0
      %1124 = vmatpush2.msra.mxu0 0.0
      %1125 = vmatprep.subr.mxu0 0.0
      %1126 = vmatpush2.msra.mxu0 0.0
      %1127 = vmatprep.subr.mxu0 0.0
      %1128 = vmatpush2.msra.mxu0 0.0
      %1129 = vmatprep.subr.mxu0 0.0
      %1130 = vmatpush2.msra.mxu0 0.0
      %1131 = vmatprep.mubr.f32.mxu0 0.0
      %1132 = vmatmul.mubr.f32.gmra.mxu0 %v1049
      %v1133 = vpop.f32.mrf.mxu0
      %v1134 = vadd.f32 0.0, %v1133
      %v1135 = vpop.f32.mrf.mxu0
      %1136 = vdwg.mxu0
      %v1138 = vrot.slane %v1134, 7
      %v1140 = vsel %vm861, %v956, %v1138
      %v1141 = vld [vmem:[%s10] sm:$0xff]
      %v1142 = vld [vmem:[%s10 + $0x8] sm:$0xff]
      %v1143 = vld [vmem:[%s10 + $0x10] sm:$0xff]
      %v1144 = vld [vmem:[%s10 + $0x18] sm:$0xff]
      %v1145 = vld [vmem:[%s11] sm:$0xff]
      %v1146 = vld [vmem:[%s11 + $0x8] sm:$0xff]
      %v1147 = vld [vmem:[%s11 + $0x10] sm:$0xff]
      %v1148 = vld [vmem:[%s11 + $0x18] sm:$0xff]
      %v1149 = vld [vmem:[%s11 + $0x20] sm:$0xff]
      %v1150 = vld [vmem:[%s11 + $0x28] sm:$0xff]
      %v1151 = vld [vmem:[%s11 + $0x30] sm:$0xff]
      %v1152 = vld [vmem:[%s11 + $0x38] sm:$0xff]
      %vm1153 = vcmask 523264
      %v1155 = vsel %vm1153, %v1140, 0
      %1157 = vmatprep.subr.mxu0 0.0
      %1158 = vmatpush1.msra.mxu0 0.0
      %1159 = vmatprep.subr.mxu0 0.0
      %1160 = vmatpush1.msra.mxu0 0.0
      %1161 = vmatprep.subr.mxu0 0.0
      %1162 = vmatpush1.msra.mxu0 0.0
      %1163 = vmatprep.subr.mxu0 0.0
      %1164 = vmatpush1.msra.mxu0 0.0
      %1165 = vmatprep.subr.mxu0 0.0
      %1166 = vmatpush1.msra.mxu0 0.0
      %1167 = vmatprep.subr.mxu0 0.0
      %1168 = vmatpush1.msra.mxu0 0.0
      %1169 = vmatprep.subr.mxu0 0.0
      %1170 = vmatpush1.msra.mxu0 0.0
      %1171 = vmatprep.subr.mxu0 0.0
      %1172 = vmatpush1.msra.mxu0 0.0
      %1173 = vmatprep.subr.mxu0 0.0
      %1174 = vmatpush1.msra.mxu0 %v1152
      %1175 = vmatprep.subr.mxu0 0.0
      %1176 = vmatpush1.msra.mxu0 %v1151
      %1177 = vmatprep.subr.mxu0 0.0
      %1178 = vmatpush1.msra.mxu0 %v1150
      %1179 = vmatprep.subr.mxu0 0.0
      %1180 = vmatpush1.msra.mxu0 %v1149
      %1181 = vmatprep.subr.mxu0 0.0
      %1182 = vmatpush1.msra.mxu0 %v1148
      %1183 = vmatprep.subr.mxu0 0.0
      %1184 = vmatpush1.msra.mxu0 %v1147
      %1185 = vmatprep.subr.mxu0 0.0
      %1186 = vmatpush1.msra.mxu0 %v1146
      %1187 = vmatprep.subr.mxu0 0.0
      %1188 = vmatpush1.msra.mxu0 %v1145
      %1189 = vmatprep.subr.mxu0 0.0
      %1190 = vmatpush2.msra.mxu0 0.0
      %1191 = vmatprep.subr.mxu0 0.0
      %1192 = vmatpush2.msra.mxu0 0.0
      %1193 = vmatprep.subr.mxu0 0.0
      %1194 = vmatpush2.msra.mxu0 0.0
      %1195 = vmatprep.subr.mxu0 0.0
      %1196 = vmatpush2.msra.mxu0 0.0
      %1197 = vmatprep.subr.mxu0 0.0
      %1198 = vmatpush2.msra.mxu0 0.0
      %1199 = vmatprep.subr.mxu0 0.0
      %1200 = vmatpush2.msra.mxu0 0.0
      %1201 = vmatprep.subr.mxu0 0.0
      %1202 = vmatpush2.msra.mxu0 0.0
      %1203 = vmatprep.subr.mxu0 0.0
      %1204 = vmatpush2.msra.mxu0 0.0
      %1205 = vmatprep.subr.mxu0 0.0
      %1206 = vmatpush2.msra.mxu0 0.0
      %1207 = vmatprep.subr.mxu0 0.0
      %1208 = vmatpush2.msra.mxu0 0.0
      %1209 = vmatprep.subr.mxu0 0.0
      %1210 = vmatpush2.msra.mxu0 0.0
      %1211 = vmatprep.subr.mxu0 0.0
      %1212 = vmatpush2.msra.mxu0 0.0
      %1213 = vmatprep.subr.mxu0 0.0
      %1214 = vmatpush2.msra.mxu0 0.0
      %1215 = vmatprep.subr.mxu0 0.0
      %1216 = vmatpush2.msra.mxu0 0.0
      %1217 = vmatprep.subr.mxu0 0.0
      %1218 = vmatpush2.msra.mxu0 0.0
      %1219 = vmatprep.subr.mxu0 0.0
      %1220 = vmatpush2.msra.mxu0 0.0
      %1221 = vmatprep.mubr.f32.mxu0 0.0
      %1222 = vmatmul.mubr.f32.gmra.mxu0 %v1155
      %v1223 = vpop.f32.mrf.mxu0
      %v1224 = vadd.f32 0.0, %v1223
      %v1225 = vpop.f32.mrf.mxu0
      %1226 = vdwg.mxu0
      %1227 = vmatprep.subr.mxu0 0.0
      %1228 = vmatpush1.msra.mxu0 0.0
      %1229 = vmatprep.subr.mxu0 0.0
      %1230 = vmatpush1.msra.mxu0 0.0
      %1231 = vmatprep.subr.mxu0 0.0
      %1232 = vmatpush1.msra.mxu0 0.0
      %1233 = vmatprep.subr.mxu0 0.0
      %1234 = vmatpush1.msra.mxu0 0.0
      %1235 = vmatprep.subr.mxu0 0.0
      %1236 = vmatpush1.msra.mxu0 0.0
      %1237 = vmatprep.subr.mxu0 0.0
      %1238 = vmatpush1.msra.mxu0 0.0
      %1239 = vmatprep.subr.mxu0 0.0
      %1240 = vmatpush1.msra.mxu0 0.0
      %1241 = vmatprep.subr.mxu0 0.0
      %1242 = vmatpush1.msra.mxu0 0.0
      %1243 = vmatprep.subr.mxu0 0.0
      %1244 = vmatpush1.msra.mxu0 0.0
      %1245 = vmatprep.subr.mxu0 0.0
      %1246 = vmatpush1.msra.mxu0 0.0
      %1247 = vmatprep.subr.mxu0 0.0
      %1248 = vmatpush1.msra.mxu0 0.0
      %1249 = vmatprep.subr.mxu0 0.0
      %1250 = vmatpush1.msra.mxu0 0.0
      %1251 = vmatprep.subr.mxu0 0.0
      %1252 = vmatpush1.msra.mxu0 %v1144
      %1253 = vmatprep.subr.mxu0 0.0
      %1254 = vmatpush1.msra.mxu0 %v1143
      %1255 = vmatprep.subr.mxu0 0.0
      %1256 = vmatpush1.msra.mxu0 %v1142
      %1257 = vmatprep.subr.mxu0 0.0
      %1258 = vmatpush1.msra.mxu0 %v1141
      %1259 = vmatprep.subr.mxu0 0.0
      %1260 = vmatpush2.msra.mxu0 0.0
      %1261 = vmatprep.subr.mxu0 0.0
      %1262 = vmatpush2.msra.mxu0 0.0
      %1263 = vmatprep.subr.mxu0 0.0
      %1264 = vmatpush2.msra.mxu0 0.0
      %1265 = vmatprep.subr.mxu0 0.0
      %1266 = vmatpush2.msra.mxu0 0.0
      %1267 = vmatprep.subr.mxu0 0.0
      %1268 = vmatpush2.msra.mxu0 0.0
      %1269 = vmatprep.subr.mxu0 0.0
      %1270 = vmatpush2.msra.mxu0 0.0
      %1271 = vmatprep.subr.mxu0 0.0
      %1272 = vmatpush2.msra.mxu0 0.0
      %1273 = vmatprep.subr.mxu0 0.0
      %1274 = vmatpush2.msra.mxu0 0.0
      %1275 = vmatprep.subr.mxu0 0.0
      %1276 = vmatpush2.msra.mxu0 0.0
      %1277 = vmatprep.subr.mxu0 0.0
      %1278 = vmatpush2.msra.mxu0 0.0
      %1279 = vmatprep.subr.mxu0 0.0
      %1280 = vmatpush2.msra.mxu0 0.0
      %1281 = vmatprep.subr.mxu0 0.0
      %1282 = vmatpush2.msra.mxu0 0.0
      %1283 = vmatprep.subr.mxu0 0.0
      %1284 = vmatpush2.msra.mxu0 0.0
      %1285 = vmatprep.subr.mxu0 0.0
      %1286 = vmatpush2.msra.mxu0 0.0
      %1287 = vmatprep.subr.mxu0 0.0
      %1288 = vmatpush2.msra.mxu0 0.0
      %1289 = vmatprep.subr.mxu0 0.0
      %1290 = vmatpush2.msra.mxu0 0.0
      %1291 = vmatprep.mubr.f32.mxu0 0.0
      %1292 = vmatmul.mubr.f32.gmra.mxu0 %v789
      %v1293 = vpop.f32.mrf.mxu0
      %v1294 = vadd.f32 %v1224, %v1293
      %v1295 = vpop.f32.mrf.mxu0
      %1296 = vdwg.mxu0
      %v1297 = vld [vmem:[%s12] sm:$0x1]
      %v1299 = vlaneseq
      %v1300 = vshrl.u32 %v1299, 7
      %v1301 = vsub.s32 0, %v1300
      %v1302 = vrot.slane %v1297, %v1301
      %v1304 = vadd.f32 %v1294, %v1302
      %v1305 = vtanh.pop %v1304
      %1306 = vst.msk [vmem:[#allocation4] sm:$0x3] %vm778, %v1305
      %v1307 = vld [vmem:[%s13] sm:$0xff]
      %v1308 = vld [vmem:[%s13 + $0x8] sm:$0xff]
      %v1309 = vld [vmem:[%s13 + $0x10] sm:$0xff]
      %v1310 = vld [vmem:[%s13 + $0x18] sm:$0xff]
      %v1311 = vld [vmem:[%s14] sm:$0x1]
      %v1313 = vlaneseq
      %v1314 = vshrl.u32 %v1313, 7
      %v1315 = vsub.s32 0, %v1314
      %v1316 = vrot.slane %v1311, %v1315
      %v1319 = vsel %vm511, %v1305, 0
      %1321 = vmatprep.subr.mxu0 0.0
      %1322 = vmatpush1.msra.mxu0 0.0
      %1323 = vmatprep.subr.mxu0 0.0
      %1324 = vmatpush1.msra.mxu0 0.0
      %1325 = vmatprep.subr.mxu0 0.0
      %1326 = vmatpush1.msra.mxu0 0.0
      %1327 = vmatprep.subr.mxu0 0.0
      %1328 = vmatpush1.msra.mxu0 0.0
      %1329 = vmatprep.subr.mxu0 0.0
      %1330 = vmatpush1.msra.mxu0 0.0
      %1331 = vmatprep.subr.mxu0 0.0
      %1332 = vmatpush1.msra.mxu0 0.0
      %1333 = vmatprep.subr.mxu0 0.0
      %1334 = vmatpush1.msra.mxu0 0.0
      %1335 = vmatprep.subr.mxu0 0.0
      %1336 = vmatpush1.msra.mxu0 0.0
      %1337 = vmatprep.subr.mxu0 0.0
      %1338 = vmatpush1.msra.mxu0 0.0
      %1339 = vmatprep.subr.mxu0 0.0
      %1340 = vmatpush1.msra.mxu0 0.0
      %1341 = vmatprep.subr.mxu0 0.0
      %1342 = vmatpush1.msra.mxu0 0.0
      %1343 = vmatprep.subr.mxu0 0.0
      %1344 = vmatpush1.msra.mxu0 0.0
      %1345 = vmatprep.subr.mxu0 0.0
      %1346 = vmatpush1.msra.mxu0 %v1310
      %1347 = vmatprep.subr.mxu0 0.0
      %1348 = vmatpush1.msra.mxu0 %v1309
      %1349 = vmatprep.subr.mxu0 0.0
      %1350 = vmatpush1.msra.mxu0 %v1308
      %1351 = vmatprep.subr.mxu0 0.0
      %1352 = vmatpush1.msra.mxu0 %v1307
      %1353 = vmatprep.subr.mxu0 0.0
      %1354 = vmatpush2.msra.mxu0 0.0
      %1355 = vmatprep.subr.mxu0 0.0
      %1356 = vmatpush2.msra.mxu0 0.0
      %1357 = vmatprep.subr.mxu0 0.0
      %1358 = vmatpush2.msra.mxu0 0.0
      %1359 = vmatprep.subr.mxu0 0.0
      %1360 = vmatpush2.msra.mxu0 0.0
      %1361 = vmatprep.subr.mxu0 0.0
      %1362 = vmatpush2.msra.mxu0 0.0
      %1363 = vmatprep.subr.mxu0 0.0
      %1364 = vmatpush2.msra.mxu0 0.0
      %1365 = vmatprep.subr.mxu0 0.0
      %1366 = vmatpush2.msra.mxu0 0.0
      %1367 = vmatprep.subr.mxu0 0.0
      %1368 = vmatpush2.msra.mxu0 0.0
      %1369 = vmatprep.subr.mxu0 0.0
      %1370 = vmatpush2.msra.mxu0 0.0
      %1371 = vmatprep.subr.mxu0 0.0
      %1372 = vmatpush2.msra.mxu0 0.0
      %1373 = vmatprep.subr.mxu0 0.0
      %1374 = vmatpush2.msra.mxu0 0.0
      %1375 = vmatprep.subr.mxu0 0.0
      %1376 = vmatpush2.msra.mxu0 0.0
      %1377 = vmatprep.subr.mxu0 0.0
      %1378 = vmatpush2.msra.mxu0 0.0
      %1379 = vmatprep.subr.mxu0 0.0
      %1380 = vmatpush2.msra.mxu0 0.0
      %1381 = vmatprep.subr.mxu0 0.0
      %1382 = vmatpush2.msra.mxu0 0.0
      %1383 = vmatprep.subr.mxu0 0.0
      %1384 = vmatpush2.msra.mxu0 0.0
      %1385 = vmatprep.mubr.f32.mxu0 0.0
      %1386 = vmatmul.mubr.f32.gmra.mxu0 %v1319
      %v1387 = vpop.f32.mrf.mxu0
      %v1388 = vadd.f32 %v1316, %v1387
      %v1389 = vpop.f32.mrf.mxu0
      %1390 = vdwg.mxu0
      %vm1391 = vcmask 1041408
      %v1392 = vsel %vm1391, %v1388, -inf
      %1393 = vmax.xlane.f32.xlu0 %v1392
      %v1394 = vpop.xlane.xlu0 %1393
      %v1395 = vsub.f32 %v1388, %v1394
      %v1396 = vmul.f32 %v1395, 1.442695
      %v1397 = vpow.pop %v1396
      %v1398 = vsel %vm1391, %v1397, 0.0
      %1399 = vadd.xlane.f32.xlu0 %v1398
      %v1400 = vpop.xlane.xlu0 %1399
      %v1401 = vlog2.pop %v1400
      %v1402 = vmul.f32 %v1401, 0.6931472
      %v1403 = vsub.f32 %v1395, %v1402
      %1404 = vst [vmem:[%s489] sm:$0x3] %v1403
      %p1405 = scmp.lt.s32.totalorder %s26, 6
      %s1406 = scalar_select %p1405, %s26, 6
      %s1407 = smul.addr %s1406, 2
      %s1408 = scalar_lea.vmem %s15, %s1407
      // Predicated region
      $region85: #{forward.11} parent=79 // pred_check
        %p1409 = pneg %p364
      $region86: #{forward.11} parent=79 // pred_check_branch
        %1411 = sbr.rel (%p1409) target = $region88
      $region87: #{forward.11} parent=79 // pred_region
        _
      $region88: #{forward.11} parent=79 // pred_fallthru
        _
    $region80: #{forward.11} parent=5 // pred_fallthru
      _
    %p1412 = scmp.le.s32.totalorder 2, %s21
    // Predicated region
    $region89: #{forward.11} parent=5 // pred_check
      %p1413 = pneg %p1412
    $region90: #{forward.11} parent=5 // pred_check_branch
      %1415 = sbr.rel (%p1413) target = $region92
    $region91: #{forward.11} parent=5 // pred_region
      %s1416 = ssub.s32 %s21, 2
      // Predicated region
      $region93: #{forward.11} parent=91 // pred_check
        %p1417 = pneg %p370
      $region94: #{forward.11} parent=91 // pred_check_branch
        %1419 = sbr.rel (%p1417) target = $region96
      $region95: #{forward.11} parent=91 // pred_region
        %p1420 = scmp.lt.s32.totalorder %s27, 6
        %s1421 = scalar_select %p1420, %s27, 6
        %s1422 = smul.addr %s1421, 2
        %s1423 = scalar_lea.vmem %s15, %s1422
      $region96: #{forward.11} parent=91 // pred_fallthru
        _
    $region92: #{forward.11} parent=5 // pred_fallthru
      _
  $region6: #{forward.11} parent=0 // loop_footer
    %s25 = sadd.s32 1, %s21
  $region7: #{forward.11} parent=0 // loop_footer_branch
    %20 = sbr.rel target = $region3
  $region8: #{forward.11} parent=0 // loop_exit
    _

</llo_original>
